<compile_context>
chip_gen: v7x
topology: tpu7x:2x2x1
jax: 0.10.0
libtpu: 0.0.40
codegen_flags: <defaults>
</compile_context>

<pallas_src>
import functools
import math

import numpy as np
import jax
import jax.numpy as jnp
from jax import lax
from jax.experimental import pallas as pl
from jax.experimental.pallas import tpu as pltpu  # noqa: F401  (TPU backend)

# ---------------- model hyper-params (small, self-consistent) ----------------
B = 2          # batch
S = 8          # sequence length
D = 32         # d_model
H = 4          # num_heads
DP = D // H    # depth per head
DFF = 64       # feed-forward hidden
VOCAB = 64     # input_vocab_size
NUM_LAYERS = 2
MAX_POS = 32   # maximum_position_encoding (>= S)
EPS = 1e-6
NEG_INF = -1e30

VEC_ROWS = 8   # packed per-layer vector params: 8 rows
VEC_W = 128    # packed width (>= max(3*D, DFF, 128))


# ----------------------------- in-kernel helpers -----------------------------
def _layernorm(y, gamma, beta):
    mu = jnp.mean(y, axis=-1, keepdims=True)
    var = jnp.mean((y - mu) ** 2, axis=-1, keepdims=True)
    # rsqrt instead of a divide (EUP path, off the VALU critical path)
    return (y - mu) * lax.rsqrt(var + EPS) * gamma + beta


# ------------------------------ fused Pallas kernel --------------------------
def encoder_fused_kernel(ids_ref, emb_ref, pos_ref, bias_ref,
                         wqkv_ref, wo_ref, w1_ref, w2_ref, vec_ref,
                         out_ref):
    """Embedding + positional encoding + all encoder layers in one invocation."""
    vocab, d_model = emb_ref.shape
    seq_len = pos_ref.shape[0]
    bs = ids_ref.shape[0]
    batch = bs // seq_len
    num_layers, num_heads, dp, _ = wo_ref.shape
    dff = w1_ref.shape[-1]
    scale = 1.0 / math.sqrt(dp)

    # ---- embedding lookup as a one-hot MXU matmul (robust at tiny vocab) ----
    # TODO(synk): switch to a scalar-prefetch / DMA row gather for large VOCAB.
    ids = ids_ref[...]                                               # (BS, 1) int32
    onehot = (ids == lax.broadcasted_iota(jnp.int32, (bs, vocab), 1))
    onehot = onehot.astype(jnp.float32)
    emb = jnp.dot(onehot, emb_ref[...], preferred_element_type=jnp.float32)

    # scale + positional encoding: pos is only (S, D); broadcast over batch here
    x = (emb.reshape(batch, seq_len, d_model) * float(math.sqrt(d_model))
         + pos_ref[...][None]).reshape(bs, d_model)
    # dropout after positional encoding: identity (eval mode)

    bias = bias_ref[...]                                             # (BS, BS) additive

    # ---- all encoder layers inside the single kernel invocation ----
    for l in range(num_layers):                    # static unroll (tiny layer count)
        wqkv = wqkv_ref[l]                                           # (D, 3D)
        wo_h = wo_ref[l]                                             # (H, DP, D)
        w1 = w1_ref[l]                                               # (D, DFF)
        w2 = w2_ref[l]                                               # (DFF, D)
        vecs = vec_ref[l]                                            # (8, 128) packed
        bqkv = vecs[0:1, :3 * d_model]
        bo = vecs[1:2, :d_model]
        b1 = vecs[2:3, :dff]
        b2 = vecs[3:4, :d_model]
        g1 = vecs[4:5, :d_model]
        be1 = vecs[5:6, :d_model]
        g2 = vecs[6:7, :d_model]
        be2 = vecs[7:8, :d_model]

        # fused Q/K/V projection (one MXU matmul), then ONE relayout to
        # head-major: 2-D transpose + tile-aligned sublane split.
        qkv = jnp.dot(x, wqkv, preferred_element_type=jnp.float32) + bqkv   # (BS, 3D)
        qkvh = qkv.T.reshape(3 * num_heads, dp, bs)                         # (3H, DP, BS)
        qh = qkvh[:num_heads]                                               # (H, DP, BS)
        kh = qkvh[num_heads:2 * num_heads]
        vh = qkvh[2 * num_heads:]

        # head-batched attention over the whole (B*S) slab; cross-sequence
        # mixing is blocked by the precomputed block-diagonal additive bias
        # (the module's `mask` argument is None).
        s = lax.dot_general(qh, kh, (((1,), (1,)), ((0,), (0,))),
                            preferred_element_type=jnp.float32) * scale     # (H, BS, BS)
        s = s + bias[None]
        s = s - jnp.max(s, axis=-1, keepdims=True)
        p = jnp.exp(s)
        p = p * pl.reciprocal(jnp.sum(p, axis=-1, keepdims=True), approx=True)
        pv = lax.dot_general(p, vh, (((2,), (2,)), ((0,), (0,))),
                             preferred_element_type=jnp.float32)            # (H, BS, DP)
        # output projection folded per head, then reduce over heads
        # (no lane-axis head concatenation).
        attn_h = lax.dot_general(pv, wo_h, (((2,), (1,)), ((0,), (0,))),
                                 preferred_element_type=jnp.float32)        # (H, BS, D)
        attn = jnp.sum(attn_h, axis=0) + bo                                 # (BS, D)

        # dropout1: identity (eval mode)
        out1 = _layernorm(x + attn, g1, be1)

        # ---- point-wise feed-forward ----
        hmid = jnp.maximum(
            jnp.dot(out1, w1, preferred_element_type=jnp.float32) + b1, 0.0)
        ffn = jnp.dot(hmid, w2, preferred_element_type=jnp.float32) + b2
        # dropout2: identity (eval mode)
        x = _layernorm(out1 + ffn, g2, be2)

    out_ref[...] = x.astype(out_ref.dtype)


# ------------------------------ Python wrapper --------------------------------
@jax.jit
def encoder_forward(token_ids, kparams):
    """token_ids: (B, S) int32 -> (B, S, D) float32 (training=False, mask=None)."""
    bn, sn = token_ids.shape
    d_model = kparams["emb"].shape[1]
    bs = bn * sn
    ids_2d = token_ids.reshape(bs, 1).astype(jnp.int32)
    pos = kparams["pos"][0, :sn, :]                                  # (S, D)

    # Block-diagonal "same sequence" additive attention bias. Layer- and
    # head-invariant, built from static shapes -> constant-folded by XLA.
    seq_id = jnp.arange(bs, dtype=jnp.int32) // sn
    attn_bias = jnp.where(seq_id[:, None] == seq_id[None, :],
                          jnp.float32(0.0), jnp.float32(NEG_INF))    # (BS, BS)

    out2d = pl.pallas_call(
        encoder_fused_kernel,
        out_shape=jax.ShapeDtypeStruct((bs, d_model), jnp.float32),
    )(ids_2d, kparams["emb"], pos, attn_bias,
      kparams["wqkv"], kparams["wo"], kparams["w1"], kparams["w2"], kparams["vec"])
    return out2d.reshape(bn, sn, d_model)


# ---------------- parameters / positional encoding / packing -----------------
def positional_encoding(position, d_model):
    pos = np.arange(position)[:, None].astype(np.float32)
    i = np.arange(d_model)[None, :].astype(np.float32)
    angle_rates = 1.0 / np.power(10000.0, (2.0 * np.floor(i / 2.0)) / np.float32(d_model))
    angle_rads = pos * angle_rates
    angle_rads[:, 0::2] = np.sin(angle_rads[:, 0::2])
    angle_rads[:, 1::2] = np.cos(angle_rads[:, 1::2])
    return jnp.asarray(angle_rads[None, ...], dtype=jnp.float32)     # (1, P, D)


def init_params(key):
    keys = jax.random.split(key, 1 + 7 * NUM_LAYERS)
    emb = jax.random.normal(keys[0], (VOCAB, D), jnp.float32) * 0.1
    pos = positional_encoding(MAX_POS, D)
    layers = []
    idx = 1
    for _ in range(NUM_LAYERS):
        ks = keys[idx:idx + 7]
        idx += 7
        wqkv = jax.random.normal(ks[0], (D, 3 * D), jnp.float32) * 0.05   # [wq|wk|wv]
        bqkv = jax.random.normal(ks[1], (3 * D,), jnp.float32) * 0.01
        wo = jax.random.normal(ks[2], (D, D), jnp.float32) * 0.05
        bo = jax.random.normal(ks[3], (D,), jnp.float32) * 0.01
        w1 = jax.random.normal(ks[4], (D, DFF), jnp.float32) * 0.05
        b1 = jax.random.normal(ks[5], (DFF,), jnp.float32) * 0.01
        w2 = jax.random.normal(ks[6], (DFF, D), jnp.float32) * 0.05
        b2 = jnp.zeros((D,), jnp.float32)
        g1 = jnp.ones((D,), jnp.float32)
        be1 = jnp.zeros((D,), jnp.float32)
        g2 = jnp.ones((D,), jnp.float32)
        be2 = jnp.zeros((D,), jnp.float32)
        layers.append((wqkv, bqkv, wo, bo, w1, b1, w2, b2, g1, be1, g2, be2))
    return {"emb": emb, "pos": pos, "layers": layers}


def pack_params(params):
    """Stack layer weights on a leading axis; pack the tiny vectors per layer."""
    assert VEC_W >= max(3 * D, DFF)
    layers = params["layers"]
    wqkv = jnp.stack([lp[0] for lp in layers])                       # (L, D, 3D)
    wo = jnp.stack([lp[2].reshape(H, DP, D) for lp in layers])       # (L, H, DP, D)
    w1 = jnp.stack([lp[4] for lp in layers])                         # (L, D, DFF)
    w2 = jnp.stack([lp[6] for lp in layers])                         # (L, DFF, D)
    vecs = []
    for (_, bqkv, _, bo, _, b1, _, b2, g1, be1, g2, be2) in layers:
        v = np.zeros((VEC_ROWS, VEC_W), np.float32)
        v[0, :3 * D] = np.asarray(bqkv)
        v[1, :D] = np.asarray(bo)
        v[2, :DFF] = np.asarray(b1)
        v[3, :D] = np.asarray(b2)
        v[4, :D] = np.asarray(g1)
        v[5, :D] = np.asarray(be1)
        v[6, :D] = np.asarray(g2)
        v[7, :D] = np.asarray(be2)
        vecs.append(v)
    vec = jnp.asarray(np.stack(vecs))                                # (L, 8, 128)
    return {"emb": params["emb"], "pos": params["pos"],
            "wqkv": wqkv, "wo": wo, "w1": w1, "w2": w2, "vec": vec}


# --------------------------- pure-JAX reference -------------------------------
def _layernorm_ref(y, gamma, beta):
    mu = jnp.mean(y, axis=-1, keepdims=True)
    var = jnp.mean((y - mu) ** 2, axis=-1, keepdims=True)
    return (y - mu) / jnp.sqrt(var + EPS) * gamma + beta


def reference_encoder(token_ids, params):
    x = params["emb"][token_ids]                                     # (B, S, D)
    x = x * float(math.sqrt(D)) + params["pos"][:, :S, :]
    for (wqkv, bqkv, wo, bo, w1, b1, w2, b2, g1, be1, g2, be2) in params["layers"]:
        wq, wk, wv = wqkv[:, :D], wqkv[:, D:2 * D], wqkv[:, 2 * D:]
        bq, bk, bv = bqkv[:D], bqkv[D:2 * D], bqkv[2 * D:]
        q = x @ wq + bq
        k = x @ wk + bk
        v = x @ wv + bv

        def split(t):  # (B,S,D) -> (B,H,S,DP)
            return t.reshape(B, S, H, DP).transpose(0, 2, 1, 3)

        qh, kh, vh = split(q), split(k), split(v)
        sc = jnp.einsum("bhqd,bhkd->bhqk", qh, kh) / float(math.sqrt(DP))
        p = jax.nn.softmax(sc, axis=-1)
        a = jnp.einsum("bhqk,bhkd->bhqd", p, vh).transpose(0, 2, 1, 3).reshape(B, S, D)
        attn = a @ wo + bo
        out1 = _layernorm_ref(x + attn, g1, be1)
        ffn = jnp.maximum(out1 @ w1 + b1, 0.0) @ w2 + b2
        x = _layernorm_ref(out1 + ffn, g2, be2)
    return x


# ----------------------------------- main -------------------------------------
if __name__ == "__main__":
    key = jax.random.PRNGKey(0)
    k_ids, k_p = jax.random.split(key)
    token_ids = jax.random.randint(k_ids, (B, S), 0, VOCAB, dtype=jnp.int32)
    params = init_params(k_p)
    kparams = pack_params(params)

    out = encoder_forward(token_ids, kparams)
    out = jax.block_until_ready(out)

    ref = reference_encoder(token_ids, params)
    assert out.shape == (B, S, D)
    max_err = float(jnp.max(jnp.abs(out - ref)))
    assert jnp.allclose(out, ref, rtol=2e-3, atol=2e-3), (
        f"mismatch vs reference, max abs err {max_err}")
    print("KERNEL_OK")
</pallas_src>

<mosaic_0001>
module attributes {stable_mosaic.version = 11 : i64} {
  func.func @encoder_fused_kernel(%arg0: memref<16x1xi32, #tpu.memory_space<vmem>>, %arg1: memref<64x32xf32, #tpu.memory_space<vmem>>, %arg2: memref<8x32xf32, #tpu.memory_space<vmem>>, %arg3: memref<16x16xf32, #tpu.memory_space<vmem>>, %arg4: memref<2x32x96xf32, #tpu.memory_space<vmem>>, %arg5: memref<2x4x8x32xf32, #tpu.memory_space<vmem>>, %arg6: memref<2x32x64xf32, #tpu.memory_space<vmem>>, %arg7: memref<2x64x32xf32, #tpu.memory_space<vmem>>, %arg8: memref<2x8x128xf32, #tpu.memory_space<vmem>>, %arg9: memref<16x32xf32, #tpu.memory_space<vmem>>) attributes {dimension_semantics = [], scalar_prefetch = 0 : i64, scratch_operands = 0 : i64, tpu.core_type = #tpu.core_type<tc>} {
    %c0 = arith.constant 0 : index
    %c0_0 = arith.constant 0 : index
    %0 = vector.load %arg0[%c0, %c0_0] : memref<16x1xi32, #tpu.memory_space<vmem>>, vector<16x1xi32>
    %1 = tpu.iota {dimensions = array<i32: 1>} : vector<16x64xi32>
    %2 = vector.broadcast %0 : vector<16x1xi32> to vector<16x64xi32>
    %3 = arith.cmpi eq, %2, %1 : vector<16x64xi32>
    %4 = arith.extui %3 : vector<16x64xi1> to vector<16x64xi32>
    %5 = arith.sitofp %4 : vector<16x64xi32> to vector<16x64xf32>
    %c0_1 = arith.constant 0 : index
    %c0_2 = arith.constant 0 : index
    %6 = vector.load %arg1[%c0_1, %c0_2] : memref<64x32xf32, #tpu.memory_space<vmem>>, vector<64x32xf32>
    %cst = arith.constant dense<0.000000e+00> : vector<16x32xf32>
    %7 = tpu.matmul %5, %6, %cst {dimension_numbers = #tpu.dot_dimension_numbers<[1], [0], [0], [1], [0, 0, 1, 1], [], []>} : vector<16x64xf32>, vector<64x32xf32>, vector<16x32xf32> -> vector<16x32xf32>
    %8 = vector.shape_cast %7 : vector<16x32xf32> to vector<2x8x32xf32>
    %cst_3 = arith.constant 5.65685415 : f32
    %9 = vector.broadcast %cst_3 : f32 to vector<2x8x32xf32>
    %10 = arith.mulf %8, %9 : vector<2x8x32xf32>
    %c0_4 = arith.constant 0 : index
    %c0_5 = arith.constant 0 : index
    %11 = vector.load %arg2[%c0_4, %c0_5] : memref<8x32xf32, #tpu.memory_space<vmem>>, vector<8x32xf32>
    %12 = vector.shape_cast %11 : vector<8x32xf32> to vector<1x8x32xf32>
    %13 = vector.broadcast %12 : vector<1x8x32xf32> to vector<2x8x32xf32>
    %14 = arith.addf %10, %13 : vector<2x8x32xf32>
    %15 = vector.shape_cast %14 : vector<2x8x32xf32> to vector<16x32xf32>
    %c0_6 = arith.constant 0 : index
    %c0_7 = arith.constant 0 : index
    %16 = vector.load %arg3[%c0_6, %c0_7] : memref<16x16xf32, #tpu.memory_space<vmem>>, vector<16x16xf32>
    %c0_8 = arith.constant 0 : index
    %c0_9 = arith.constant 0 : index
    %c0_10 = arith.constant 0 : index
    %17 = vector.load %arg4[%c0_8, %c0_9, %c0_10] : memref<2x32x96xf32, #tpu.memory_space<vmem>>, vector<1x32x96xf32>
    %18 = vector.shape_cast %17 : vector<1x32x96xf32> to vector<32x96xf32>
    %c0_11 = arith.constant 0 : index
    %c0_12 = arith.constant 0 : index
    %c0_13 = arith.constant 0 : index
    %c0_14 = arith.constant 0 : index
    %19 = vector.load %arg5[%c0_11, %c0_12, %c0_13, %c0_14] : memref<2x4x8x32xf32, #tpu.memory_space<vmem>>, vector<1x4x8x32xf32>
    %20 = vector.shape_cast %19 : vector<1x4x8x32xf32> to vector<4x8x32xf32>
    %c0_15 = arith.constant 0 : index
    %c0_16 = arith.constant 0 : index
    %c0_17 = arith.constant 0 : index
    %21 = vector.load %arg6[%c0_15, %c0_16, %c0_17] : memref<2x32x64xf32, #tpu.memory_space<vmem>>, vector<1x32x64xf32>
    %22 = vector.shape_cast %21 : vector<1x32x64xf32> to vector<32x64xf32>
    %c0_18 = arith.constant 0 : index
    %c0_19 = arith.constant 0 : index
    %c0_20 = arith.constant 0 : index
    %23 = vector.load %arg7[%c0_18, %c0_19, %c0_20] : memref<2x64x32xf32, #tpu.memory_space<vmem>>, vector<1x64x32xf32>
    %24 = vector.shape_cast %23 : vector<1x64x32xf32> to vector<64x32xf32>
    %c0_21 = arith.constant 0 : index
    %c0_22 = arith.constant 0 : index
    %c0_23 = arith.constant 0 : index
    %25 = vector.load %arg8[%c0_21, %c0_22, %c0_23] : memref<2x8x128xf32, #tpu.memory_space<vmem>>, vector<1x8x128xf32>
    %26 = vector.shape_cast %25 : vector<1x8x128xf32> to vector<8x128xf32>
    %27 = vector.extract_strided_slice %26 {offsets = [0, 0], sizes = [1, 96], strides = [1, 1]} : vector<8x128xf32> to vector<1x96xf32>
    %28 = vector.extract_strided_slice %26 {offsets = [1, 0], sizes = [1, 32], strides = [1, 1]} : vector<8x128xf32> to vector<1x32xf32>
    %29 = vector.extract_strided_slice %26 {offsets = [2, 0], sizes = [1, 64], strides = [1, 1]} : vector<8x128xf32> to vector<1x64xf32>
    %30 = vector.extract_strided_slice %26 {offsets = [3, 0], sizes = [1, 32], strides = [1, 1]} : vector<8x128xf32> to vector<1x32xf32>
    %31 = vector.extract_strided_slice %26 {offsets = [4, 0], sizes = [1, 32], strides = [1, 1]} : vector<8x128xf32> to vector<1x32xf32>
    %32 = vector.extract_strided_slice %26 {offsets = [5, 0], sizes = [1, 32], strides = [1, 1]} : vector<8x128xf32> to vector<1x32xf32>
    %33 = vector.extract_strided_slice %26 {offsets = [6, 0], sizes = [1, 32], strides = [1, 1]} : vector<8x128xf32> to vector<1x32xf32>
    %34 = vector.extract_strided_slice %26 {offsets = [7, 0], sizes = [1, 32], strides = [1, 1]} : vector<8x128xf32> to vector<1x32xf32>
    %cst_24 = arith.constant dense<0.000000e+00> : vector<16x96xf32>
    %35 = tpu.matmul %15, %18, %cst_24 {dimension_numbers = #tpu.dot_dimension_numbers<[1], [0], [0], [1], [0, 0, 1, 1], [], []>} : vector<16x32xf32>, vector<32x96xf32>, vector<16x96xf32> -> vector<16x96xf32>
    %36 = vector.broadcast %27 : vector<1x96xf32> to vector<16x96xf32>
    %37 = arith.addf %35, %36 : vector<16x96xf32>
    %38 = tpu.transpose %37, [1, 0] : vector<16x96xf32> -> vector<96x16xf32>
    %39 = vector.shape_cast %38 : vector<96x16xf32> to vector<12x8x16xf32>
    %40 = vector.extract_strided_slice %39 {offsets = [0, 0, 0], sizes = [4, 8, 16], strides = [1, 1, 1]} : vector<12x8x16xf32> to vector<4x8x16xf32>
    %41 = vector.extract_strided_slice %39 {offsets = [4, 0, 0], sizes = [4, 8, 16], strides = [1, 1, 1]} : vector<12x8x16xf32> to vector<4x8x16xf32>
    %42 = vector.extract_strided_slice %39 {offsets = [8, 0, 0], sizes = [4, 8, 16], strides = [1, 1, 1]} : vector<12x8x16xf32> to vector<4x8x16xf32>
    %cst_25 = arith.constant dense<0.000000e+00> : vector<4x16x16xf32>
    %43 = tpu.matmul %40, %41, %cst_25 {dimension_numbers = #tpu.dot_dimension_numbers<[1], [1], [2], [2], [0, 0, 0, 2, 1, 2], [0], [0]>} : vector<4x8x16xf32>, vector<4x8x16xf32>, vector<4x16x16xf32> -> vector<4x16x16xf32>
    %cst_26 = arith.constant 0.353553385 : f32
    %44 = vector.broadcast %cst_26 : f32 to vector<4x16x16xf32>
    %45 = arith.mulf %43, %44 : vector<4x16x16xf32>
    %46 = vector.shape_cast %16 : vector<16x16xf32> to vector<1x16x16xf32>
    %47 = vector.broadcast %46 : vector<1x16x16xf32> to vector<4x16x16xf32>
    %48 = arith.addf %45, %47 : vector<4x16x16xf32>
    %cst_27 = arith.constant dense<0xFF800000> : vector<4x16xf32>
    %49 = vector.multi_reduction <maximumf>, %48, %cst_27 [2] : vector<4x16x16xf32> to vector<4x16xf32>
    %50 = vector.shape_cast %49 : vector<4x16xf32> to vector<4x16x1xf32>
    %51 = vector.broadcast %50 : vector<4x16x1xf32> to vector<4x16x16xf32>
    %52 = arith.subf %48, %51 : vector<4x16x16xf32>
    %53 = math.exp %52 : vector<4x16x16xf32>
    %cst_28 = arith.constant dense<0.000000e+00> : vector<4x16xf32>
    %54 = vector.multi_reduction <add>, %53, %cst_28 [2] : vector<4x16x16xf32> to vector<4x16xf32>
    %55 = vector.shape_cast %54 : vector<4x16xf32> to vector<4x16x1xf32>
    %56 = tpu.reciprocal %55 {approx = true} : vector<4x16x1xf32> -> vector<4x16x1xf32>
    %57 = vector.broadcast %56 : vector<4x16x1xf32> to vector<4x16x16xf32>
    %58 = arith.mulf %53, %57 : vector<4x16x16xf32>
    %cst_29 = arith.constant dense<0.000000e+00> : vector<4x16x8xf32>
    %59 = tpu.matmul %58, %42, %cst_29 {dimension_numbers = #tpu.dot_dimension_numbers<[2], [2], [1], [1], [0, 0, 0, 1, 1, 1], [0], [0]>} : vector<4x16x16xf32>, vector<4x8x16xf32>, vector<4x16x8xf32> -> vector<4x16x8xf32>
    %cst_30 = arith.constant dense<0.000000e+00> : vector<4x16x32xf32>
    %60 = tpu.matmul %59, %20, %cst_30 {dimension_numbers = #tpu.dot_dimension_numbers<[2], [1], [1], [2], [0, 0, 0, 1, 1, 2], [0], [0]>} : vector<4x16x8xf32>, vector<4x8x32xf32>, vector<4x16x32xf32> -> vector<4x16x32xf32>
    %cst_31 = arith.constant dense<0.000000e+00> : vector<16x32xf32>
    %61 = vector.multi_reduction <add>, %60, %cst_31 [0] : vector<4x16x32xf32> to vector<16x32xf32>
    %62 = vector.broadcast %28 : vector<1x32xf32> to vector<16x32xf32>
    %63 = arith.addf %61, %62 : vector<16x32xf32>
    %64 = arith.addf %15, %63 : vector<16x32xf32>
    %cst_32 = arith.constant dense<0.000000e+00> : vector<16xf32>
    %65 = vector.multi_reduction <add>, %64, %cst_32 [1] : vector<16x32xf32> to vector<16xf32>
    %66 = vector.shape_cast %65 : vector<16xf32> to vector<16x1xf32>
    %cst_33 = arith.constant 3.200000e+01 : f32
    %67 = vector.broadcast %cst_33 : f32 to vector<16x1xf32>
    %68 = arith.divf %66, %67 : vector<16x1xf32>
    %69 = vector.broadcast %68 : vector<16x1xf32> to vector<16x32xf32>
    %70 = arith.subf %64, %69 : vector<16x32xf32>
    %71 = arith.mulf %70, %70 : vector<16x32xf32>
    %cst_34 = arith.constant dense<0.000000e+00> : vector<16xf32>
    %72 = vector.multi_reduction <add>, %71, %cst_34 [1] : vector<16x32xf32> to vector<16xf32>
    %73 = vector.shape_cast %72 : vector<16xf32> to vector<16x1xf32>
    %cst_35 = arith.constant 3.200000e+01 : f32
    %74 = vector.broadcast %cst_35 : f32 to vector<16x1xf32>
    %75 = arith.divf %73, %74 : vector<16x1xf32>
    %76 = vector.broadcast %68 : vector<16x1xf32> to vector<16x32xf32>
    %77 = arith.subf %64, %76 : vector<16x32xf32>
    %cst_36 = arith.constant 9.99999997E-7 : f32
    %78 = vector.broadcast %cst_36 : f32 to vector<16x1xf32>
    %79 = arith.addf %75, %78 : vector<16x1xf32>
    %80 = math.rsqrt %79 : vector<16x1xf32>
    %81 = vector.broadcast %80 : vector<16x1xf32> to vector<16x32xf32>
    %82 = arith.mulf %77, %81 : vector<16x32xf32>
    %83 = vector.broadcast %31 : vector<1x32xf32> to vector<16x32xf32>
    %84 = arith.mulf %82, %83 : vector<16x32xf32>
    %85 = vector.broadcast %32 : vector<1x32xf32> to vector<16x32xf32>
    %86 = arith.addf %84, %85 : vector<16x32xf32>
    %cst_37 = arith.constant dense<0.000000e+00> : vector<16x64xf32>
    %87 = tpu.matmul %86, %22, %cst_37 {dimension_numbers = #tpu.dot_dimension_numbers<[1], [0], [0], [1], [0, 0, 1, 1], [], []>} : vector<16x32xf32>, vector<32x64xf32>, vector<16x64xf32> -> vector<16x64xf32>
    %88 = vector.broadcast %29 : vector<1x64xf32> to vector<16x64xf32>
    %89 = arith.addf %87, %88 : vector<16x64xf32>
    %cst_38 = arith.constant 0.000000e+00 : f32
    %90 = vector.broadcast %cst_38 : f32 to vector<16x64xf32>
    %91 = arith.maximumf %89, %90 : vector<16x64xf32>
    %cst_39 = arith.constant dense<0.000000e+00> : vector<16x32xf32>
    %92 = tpu.matmul %91, %24, %cst_39 {dimension_numbers = #tpu.dot_dimension_numbers<[1], [0], [0], [1], [0, 0, 1, 1], [], []>} : vector<16x64xf32>, vector<64x32xf32>, vector<16x32xf32> -> vector<16x32xf32>
    %93 = vector.broadcast %30 : vector<1x32xf32> to vector<16x32xf32>
    %94 = arith.addf %92, %93 : vector<16x32xf32>
    %95 = arith.addf %86, %94 : vector<16x32xf32>
    %cst_40 = arith.constant dense<0.000000e+00> : vector<16xf32>
    %96 = vector.multi_reduction <add>, %95, %cst_40 [1] : vector<16x32xf32> to vector<16xf32>
    %97 = vector.shape_cast %96 : vector<16xf32> to vector<16x1xf32>
    %cst_41 = arith.constant 3.200000e+01 : f32
    %98 = vector.broadcast %cst_41 : f32 to vector<16x1xf32>
    %99 = arith.divf %97, %98 : vector<16x1xf32>
    %100 = vector.broadcast %99 : vector<16x1xf32> to vector<16x32xf32>
    %101 = arith.subf %95, %100 : vector<16x32xf32>
    %102 = arith.mulf %101, %101 : vector<16x32xf32>
    %cst_42 = arith.constant dense<0.000000e+00> : vector<16xf32>
    %103 = vector.multi_reduction <add>, %102, %cst_42 [1] : vector<16x32xf32> to vector<16xf32>
    %104 = vector.shape_cast %103 : vector<16xf32> to vector<16x1xf32>
    %cst_43 = arith.constant 3.200000e+01 : f32
    %105 = vector.broadcast %cst_43 : f32 to vector<16x1xf32>
    %106 = arith.divf %104, %105 : vector<16x1xf32>
    %107 = vector.broadcast %99 : vector<16x1xf32> to vector<16x32xf32>
    %108 = arith.subf %95, %107 : vector<16x32xf32>
    %cst_44 = arith.constant 9.99999997E-7 : f32
    %109 = vector.broadcast %cst_44 : f32 to vector<16x1xf32>
    %110 = arith.addf %106, %109 : vector<16x1xf32>
    %111 = math.rsqrt %110 : vector<16x1xf32>
    %112 = vector.broadcast %111 : vector<16x1xf32> to vector<16x32xf32>
    %113 = arith.mulf %108, %112 : vector<16x32xf32>
    %114 = vector.broadcast %33 : vector<1x32xf32> to vector<16x32xf32>
    %115 = arith.mulf %113, %114 : vector<16x32xf32>
    %116 = vector.broadcast %34 : vector<1x32xf32> to vector<16x32xf32>
    %117 = arith.addf %115, %116 : vector<16x32xf32>
    %c1 = arith.constant 1 : index
    %c0_45 = arith.constant 0 : index
    %c0_46 = arith.constant 0 : index
    %118 = vector.load %arg4[%c1, %c0_45, %c0_46] : memref<2x32x96xf32, #tpu.memory_space<vmem>>, vector<1x32x96xf32>
    %119 = vector.shape_cast %118 : vector<1x32x96xf32> to vector<32x96xf32>
    %c1_47 = arith.constant 1 : index
    %c0_48 = arith.constant 0 : index
    %c0_49 = arith.constant 0 : index
    %c0_50 = arith.constant 0 : index
    %120 = vector.load %arg5[%c1_47, %c0_48, %c0_49, %c0_50] : memref<2x4x8x32xf32, #tpu.memory_space<vmem>>, vector<1x4x8x32xf32>
    %121 = vector.shape_cast %120 : vector<1x4x8x32xf32> to vector<4x8x32xf32>
    %c1_51 = arith.constant 1 : index
    %c0_52 = arith.constant 0 : index
    %c0_53 = arith.constant 0 : index
    %122 = vector.load %arg6[%c1_51, %c0_52, %c0_53] : memref<2x32x64xf32, #tpu.memory_space<vmem>>, vector<1x32x64xf32>
    %123 = vector.shape_cast %122 : vector<1x32x64xf32> to vector<32x64xf32>
    %c1_54 = arith.constant 1 : index
    %c0_55 = arith.constant 0 : index
    %c0_56 = arith.constant 0 : index
    %124 = vector.load %arg7[%c1_54, %c0_55, %c0_56] : memref<2x64x32xf32, #tpu.memory_space<vmem>>, vector<1x64x32xf32>
    %125 = vector.shape_cast %124 : vector<1x64x32xf32> to vector<64x32xf32>
    %c1_57 = arith.constant 1 : index
    %c0_58 = arith.constant 0 : index
    %c0_59 = arith.constant 0 : index
    %126 = vector.load %arg8[%c1_57, %c0_58, %c0_59] : memref<2x8x128xf32, #tpu.memory_space<vmem>>, vector<1x8x128xf32>
    %127 = vector.shape_cast %126 : vector<1x8x128xf32> to vector<8x128xf32>
    %128 = vector.extract_strided_slice %127 {offsets = [0, 0], sizes = [1, 96], strides = [1, 1]} : vector<8x128xf32> to vector<1x96xf32>
    %129 = vector.extract_strided_slice %127 {offsets = [1, 0], sizes = [1, 32], strides = [1, 1]} : vector<8x128xf32> to vector<1x32xf32>
    %130 = vector.extract_strided_slice %127 {offsets = [2, 0], sizes = [1, 64], strides = [1, 1]} : vector<8x128xf32> to vector<1x64xf32>
    %131 = vector.extract_strided_slice %127 {offsets = [3, 0], sizes = [1, 32], strides = [1, 1]} : vector<8x128xf32> to vector<1x32xf32>
    %132 = vector.extract_strided_slice %127 {offsets = [4, 0], sizes = [1, 32], strides = [1, 1]} : vector<8x128xf32> to vector<1x32xf32>
    %133 = vector.extract_strided_slice %127 {offsets = [5, 0], sizes = [1, 32], strides = [1, 1]} : vector<8x128xf32> to vector<1x32xf32>
    %134 = vector.extract_strided_slice %127 {offsets = [6, 0], sizes = [1, 32], strides = [1, 1]} : vector<8x128xf32> to vector<1x32xf32>
    %135 = vector.extract_strided_slice %127 {offsets = [7, 0], sizes = [1, 32], strides = [1, 1]} : vector<8x128xf32> to vector<1x32xf32>
    %cst_60 = arith.constant dense<0.000000e+00> : vector<16x96xf32>
    %136 = tpu.matmul %117, %119, %cst_60 {dimension_numbers = #tpu.dot_dimension_numbers<[1], [0], [0], [1], [0, 0, 1, 1], [], []>} : vector<16x32xf32>, vector<32x96xf32>, vector<16x96xf32> -> vector<16x96xf32>
    %137 = vector.broadcast %128 : vector<1x96xf32> to vector<16x96xf32>
    %138 = arith.addf %136, %137 : vector<16x96xf32>
    %139 = tpu.transpose %138, [1, 0] : vector<16x96xf32> -> vector<96x16xf32>
    %140 = vector.shape_cast %139 : vector<96x16xf32> to vector<12x8x16xf32>
    %141 = vector.extract_strided_slice %140 {offsets = [0, 0, 0], sizes = [4, 8, 16], strides = [1, 1, 1]} : vector<12x8x16xf32> to vector<4x8x16xf32>
    %142 = vector.extract_strided_slice %140 {offsets = [4, 0, 0], sizes = [4, 8, 16], strides = [1, 1, 1]} : vector<12x8x16xf32> to vector<4x8x16xf32>
    %143 = vector.extract_strided_slice %140 {offsets = [8, 0, 0], sizes = [4, 8, 16], strides = [1, 1, 1]} : vector<12x8x16xf32> to vector<4x8x16xf32>
    %cst_61 = arith.constant dense<0.000000e+00> : vector<4x16x16xf32>
    %144 = tpu.matmul %141, %142, %cst_61 {dimension_numbers = #tpu.dot_dimension_numbers<[1], [1], [2], [2], [0, 0, 0, 2, 1, 2], [0], [0]>} : vector<4x8x16xf32>, vector<4x8x16xf32>, vector<4x16x16xf32> -> vector<4x16x16xf32>
    %cst_62 = arith.constant 0.353553385 : f32
    %145 = vector.broadcast %cst_62 : f32 to vector<4x16x16xf32>
    %146 = arith.mulf %144, %145 : vector<4x16x16xf32>
    %147 = vector.shape_cast %16 : vector<16x16xf32> to vector<1x16x16xf32>
    %148 = vector.broadcast %147 : vector<1x16x16xf32> to vector<4x16x16xf32>
    %149 = arith.addf %146, %148 : vector<4x16x16xf32>
    %cst_63 = arith.constant dense<0xFF800000> : vector<4x16xf32>
    %150 = vector.multi_reduction <maximumf>, %149, %cst_63 [2] : vector<4x16x16xf32> to vector<4x16xf32>
    %151 = vector.shape_cast %150 : vector<4x16xf32> to vector<4x16x1xf32>
    %152 = vector.broadcast %151 : vector<4x16x1xf32> to vector<4x16x16xf32>
    %153 = arith.subf %149, %152 : vector<4x16x16xf32>
    %154 = math.exp %153 : vector<4x16x16xf32>
    %cst_64 = arith.constant dense<0.000000e+00> : vector<4x16xf32>
    %155 = vector.multi_reduction <add>, %154, %cst_64 [2] : vector<4x16x16xf32> to vector<4x16xf32>
    %156 = vector.shape_cast %155 : vector<4x16xf32> to vector<4x16x1xf32>
    %157 = tpu.reciprocal %156 {approx = true} : vector<4x16x1xf32> -> vector<4x16x1xf32>
    %158 = vector.broadcast %157 : vector<4x16x1xf32> to vector<4x16x16xf32>
    %159 = arith.mulf %154, %158 : vector<4x16x16xf32>
    %cst_65 = arith.constant dense<0.000000e+00> : vector<4x16x8xf32>
    %160 = tpu.matmul %159, %143, %cst_65 {dimension_numbers = #tpu.dot_dimension_numbers<[2], [2], [1], [1], [0, 0, 0, 1, 1, 1], [0], [0]>} : vector<4x16x16xf32>, vector<4x8x16xf32>, vector<4x16x8xf32> -> vector<4x16x8xf32>
    %cst_66 = arith.constant dense<0.000000e+00> : vector<4x16x32xf32>
    %161 = tpu.matmul %160, %121, %cst_66 {dimension_numbers = #tpu.dot_dimension_numbers<[2], [1], [1], [2], [0, 0, 0, 1, 1, 2], [0], [0]>} : vector<4x16x8xf32>, vector<4x8x32xf32>, vector<4x16x32xf32> -> vector<4x16x32xf32>
    %cst_67 = arith.constant dense<0.000000e+00> : vector<16x32xf32>
    %162 = vector.multi_reduction <add>, %161, %cst_67 [0] : vector<4x16x32xf32> to vector<16x32xf32>
    %163 = vector.broadcast %129 : vector<1x32xf32> to vector<16x32xf32>
    %164 = arith.addf %162, %163 : vector<16x32xf32>
    %165 = arith.addf %117, %164 : vector<16x32xf32>
    %cst_68 = arith.constant dense<0.000000e+00> : vector<16xf32>
    %166 = vector.multi_reduction <add>, %165, %cst_68 [1] : vector<16x32xf32> to vector<16xf32>
    %167 = vector.shape_cast %166 : vector<16xf32> to vector<16x1xf32>
    %cst_69 = arith.constant 3.200000e+01 : f32
    %168 = vector.broadcast %cst_69 : f32 to vector<16x1xf32>
    %169 = arith.divf %167, %168 : vector<16x1xf32>
    %170 = vector.broadcast %169 : vector<16x1xf32> to vector<16x32xf32>
    %171 = arith.subf %165, %170 : vector<16x32xf32>
    %172 = arith.mulf %171, %171 : vector<16x32xf32>
    %cst_70 = arith.constant dense<0.000000e+00> : vector<16xf32>
    %173 = vector.multi_reduction <add>, %172, %cst_70 [1] : vector<16x32xf32> to vector<16xf32>
    %174 = vector.shape_cast %173 : vector<16xf32> to vector<16x1xf32>
    %cst_71 = arith.constant 3.200000e+01 : f32
    %175 = vector.broadcast %cst_71 : f32 to vector<16x1xf32>
    %176 = arith.divf %174, %175 : vector<16x1xf32>
    %177 = vector.broadcast %169 : vector<16x1xf32> to vector<16x32xf32>
    %178 = arith.subf %165, %177 : vector<16x32xf32>
    %cst_72 = arith.constant 9.99999997E-7 : f32
    %179 = vector.broadcast %cst_72 : f32 to vector<16x1xf32>
    %180 = arith.addf %176, %179 : vector<16x1xf32>
    %181 = math.rsqrt %180 : vector<16x1xf32>
    %182 = vector.broadcast %181 : vector<16x1xf32> to vector<16x32xf32>
    %183 = arith.mulf %178, %182 : vector<16x32xf32>
    %184 = vector.broadcast %132 : vector<1x32xf32> to vector<16x32xf32>
    %185 = arith.mulf %183, %184 : vector<16x32xf32>
    %186 = vector.broadcast %133 : vector<1x32xf32> to vector<16x32xf32>
    %187 = arith.addf %185, %186 : vector<16x32xf32>
    %cst_73 = arith.constant dense<0.000000e+00> : vector<16x64xf32>
    %188 = tpu.matmul %187, %123, %cst_73 {dimension_numbers = #tpu.dot_dimension_numbers<[1], [0], [0], [1], [0, 0, 1, 1], [], []>} : vector<16x32xf32>, vector<32x64xf32>, vector<16x64xf32> -> vector<16x64xf32>
    %189 = vector.broadcast %130 : vector<1x64xf32> to vector<16x64xf32>
    %190 = arith.addf %188, %189 : vector<16x64xf32>
    %cst_74 = arith.constant 0.000000e+00 : f32
    %191 = vector.broadcast %cst_74 : f32 to vector<16x64xf32>
    %192 = arith.maximumf %190, %191 : vector<16x64xf32>
    %cst_75 = arith.constant dense<0.000000e+00> : vector<16x32xf32>
    %193 = tpu.matmul %192, %125, %cst_75 {dimension_numbers = #tpu.dot_dimension_numbers<[1], [0], [0], [1], [0, 0, 1, 1], [], []>} : vector<16x64xf32>, vector<64x32xf32>, vector<16x32xf32> -> vector<16x32xf32>
    %194 = vector.broadcast %131 : vector<1x32xf32> to vector<16x32xf32>
    %195 = arith.addf %193, %194 : vector<16x32xf32>
    %196 = arith.addf %187, %195 : vector<16x32xf32>
    %cst_76 = arith.constant dense<0.000000e+00> : vector<16xf32>
    %197 = vector.multi_reduction <add>, %196, %cst_76 [1] : vector<16x32xf32> to vector<16xf32>
    %198 = vector.shape_cast %197 : vector<16xf32> to vector<16x1xf32>
    %cst_77 = arith.constant 3.200000e+01 : f32
    %199 = vector.broadcast %cst_77 : f32 to vector<16x1xf32>
    %200 = arith.divf %198, %199 : vector<16x1xf32>
    %201 = vector.broadcast %200 : vector<16x1xf32> to vector<16x32xf32>
    %202 = arith.subf %196, %201 : vector<16x32xf32>
    %203 = arith.mulf %202, %202 : vector<16x32xf32>
    %cst_78 = arith.constant dense<0.000000e+00> : vector<16xf32>
    %204 = vector.multi_reduction <add>, %203, %cst_78 [1] : vector<16x32xf32> to vector<16xf32>
    %205 = vector.shape_cast %204 : vector<16xf32> to vector<16x1xf32>
    %cst_79 = arith.constant 3.200000e+01 : f32
    %206 = vector.broadcast %cst_79 : f32 to vector<16x1xf32>
    %207 = arith.divf %205, %206 : vector<16x1xf32>
    %208 = vector.broadcast %200 : vector<16x1xf32> to vector<16x32xf32>
    %209 = arith.subf %196, %208 : vector<16x32xf32>
    %cst_80 = arith.constant 9.99999997E-7 : f32
    %210 = vector.broadcast %cst_80 : f32 to vector<16x1xf32>
    %211 = arith.addf %207, %210 : vector<16x1xf32>
    %212 = math.rsqrt %211 : vector<16x1xf32>
    %213 = vector.broadcast %212 : vector<16x1xf32> to vector<16x32xf32>
    %214 = arith.mulf %209, %213 : vector<16x32xf32>
    %215 = vector.broadcast %134 : vector<1x32xf32> to vector<16x32xf32>
    %216 = arith.mulf %214, %215 : vector<16x32xf32>
    %217 = vector.broadcast %135 : vector<1x32xf32> to vector<16x32xf32>
    %218 = arith.addf %216, %217 : vector<16x32xf32>
    %c0_81 = arith.constant 0 : index
    %c0_82 = arith.constant 0 : index
    %219 = vector.load %arg9[%c0_81, %c0_82] : memref<16x32xf32, #tpu.memory_space<vmem>>, vector<16x32xf32>
    tpu.vector_store %arg9[%c0_81, %c0_82], %218 {strides = array<i32>} : memref<16x32xf32, #tpu.memory_space<vmem>>, vector<16x32xf32>,
    return
  }
}

</mosaic_0001>

<llo_original>
// kernel: encoder_forward.1
$region0: #{encoder_forward.1}
  #allocation0 [shape = 'u32[]', space=smem, size = 0x4, offset = 0x4, fixed_abs, tag = 'smem constant byte address 0x4 - core index']
  #allocation1 [shape = 'u32[144,128]{1,0:T(1,128)}', space=vmem, size = 0x12000, scoped, tag = 'internal scratch']
  %s0 = inlined_call_operand.vmem [shape: s32[16,1], index: 0, kind: input, shape index: {}]
  %s1 = inlined_call_operand.vmem [shape: f32[64,32], index: 1, kind: input, shape index: {}]
  %s2 = inlined_call_operand.vmem [shape: f32[8,32], index: 2, kind: input, shape index: {}]
  %s3 = inlined_call_operand.vmem [shape: f32[16,16], index: 3, kind: input, shape index: {}]
  %s4 = inlined_call_operand.vmem [shape: f32[2,32,96], index: 4, kind: input, shape index: {}]
  %s5 = inlined_call_operand.vmem [shape: f32[2,4,8,32], index: 5, kind: input, shape index: {}]
  %s6 = inlined_call_operand.vmem [shape: f32[2,32,64], index: 6, kind: input, shape index: {}]
  %s7 = inlined_call_operand.vmem [shape: f32[2,64,32], index: 7, kind: input, shape index: {}]
  %s8 = inlined_call_operand.vmem [shape: f32[2,8,128], index: 8, kind: input, shape index: {}]
  %s9 = inlined_call_operand.hbm [shape: f32[16,32], index: 9, kind: output, shape index: {}]
  %s10 = sld [smem:[#allocation0]]
  $region46: #{encoder_forward.1} parent=0
    _
  %s12 = ssub.s32 1, %s10
  %s13 = scalar_select 0, %s12, %s10
  $region1: #{encoder_forward.1} parent=0
    #allocation2 [shape = 'u8[8192]{0}', space=vmem, size = 0x2000, scoped, tag = 'output window, operand 0, single buffered']
    #allocation3 [shape = 's32[1]{0}', space=sflag, size = 0x4, scoped, tag = 'scoped memory for encoder_forward.1']
    %14 = vsyncpa [#allocation3], 0
    // Predicated region
    $region2: #{encoder_forward.1} parent=1 // pred_check
      _
    $region3: #{encoder_forward.1} parent=1 // pred_check_branch
      %16 = sbr.rel (0) target = $region5
    $region4: #{encoder_forward.1} parent=1 // pred_region
      _
    $region5: #{encoder_forward.1} parent=1 // pred_fallthru
      _
    // Predicated region
    $region6: #{encoder_forward.1} parent=1 // pred_check
      _
    $region7: #{encoder_forward.1} parent=1 // pred_check_branch
      %18 = sbr.rel (0) target = $region9
    $region8: #{encoder_forward.1} parent=1 // pred_region
      _
    $region9: #{encoder_forward.1} parent=1 // pred_fallthru
      _
    // Predicated region
    $region10: #{encoder_forward.1} parent=1 // pred_check
      _
    $region11: #{encoder_forward.1} parent=1 // pred_check_branch
      %20 = sbr.rel (0) target = $region13
    $region12: #{encoder_forward.1} parent=1 // pred_region
      _
    $region13: #{encoder_forward.1} parent=1 // pred_fallthru
      _
    // Predicated region
    $region14: #{encoder_forward.1} parent=1 // pred_check
      _
    $region15: #{encoder_forward.1} parent=1 // pred_check_branch
      %22 = sbr.rel (0) target = $region17
    $region16: #{encoder_forward.1} parent=1 // pred_region
      _
    $region17: #{encoder_forward.1} parent=1 // pred_fallthru
      _
    // Predicated region
    $region18: #{encoder_forward.1} parent=1 // pred_check
      _
    $region19: #{encoder_forward.1} parent=1 // pred_check_branch
      %24 = sbr.rel (0) target = $region21
    $region20: #{encoder_forward.1} parent=1 // pred_region
      _
    $region21: #{encoder_forward.1} parent=1 // pred_fallthru
      _
    // Predicated region
    $region22: #{encoder_forward.1} parent=1 // pred_check
      _
    $region23: #{encoder_forward.1} parent=1 // pred_check_branch
      %26 = sbr.rel (0) target = $region25
    $region24: #{encoder_forward.1} parent=1 // pred_region
      _
    $region25: #{encoder_forward.1} parent=1 // pred_fallthru
      _
    // Predicated region
    $region26: #{encoder_forward.1} parent=1 // pred_check
      _
    $region27: #{encoder_forward.1} parent=1 // pred_check_branch
      %28 = sbr.rel (0) target = $region29
    $region28: #{encoder_forward.1} parent=1 // pred_region
      _
    $region29: #{encoder_forward.1} parent=1 // pred_fallthru
      _
    // Predicated region
    $region30: #{encoder_forward.1} parent=1 // pred_check
      _
    $region31: #{encoder_forward.1} parent=1 // pred_check_branch
      %30 = sbr.rel (0) target = $region33
    $region32: #{encoder_forward.1} parent=1 // pred_region
      _
    $region33: #{encoder_forward.1} parent=1 // pred_fallthru
      _
    // Predicated region
    $region34: #{encoder_forward.1} parent=1 // pred_check
      _
    $region35: #{encoder_forward.1} parent=1 // pred_check_branch
      %32 = sbr.rel (0) target = $region37
    $region36: #{encoder_forward.1} parent=1 // pred_region
      _
    $region37: #{encoder_forward.1} parent=1 // pred_fallthru
      _
    %v33 = vld [vmem:[%s0] sm:$0xff]
    %v34 = vld [vmem:[%s0 + $0x8] sm:$0xff]
    %v35 = vlaneseq
    %v36 = vand.u32 %v35, 127
    %37 = vset.pattern.permute.xlu0 0
    %38 = vperm.xlu0 %37, %v33
    %v39 = vpop.permute.xlu0 %38
    %40 = vset.pattern.permute.xlu0 0
    %41 = vperm.xlu0 %40, %v34
    %v42 = vpop.permute.xlu0 %41
    %vm43 = vcmp.eq.s32.totalorder %v39, %v36
    %vm44 = vcmp.eq.s32.totalorder %v42, %v36
    %v45 = vsel %vm43, 1, 0
    %v46 = vsel %vm44, 1, 0
    %v47 = vcvt.s32.f32 %v45
    %v48 = vcvt.s32.f32 %v46
    %v49 = vld [vmem:[%s1] sm:$0xff]
    %v50 = vld [vmem:[%s1 + $0x8] sm:$0xff]
    %v51 = vld [vmem:[%s1 + $0x10] sm:$0xff]
    %v52 = vld [vmem:[%s1 + $0x18] sm:$0xff]
    %v53 = vld [vmem:[%s1 + $0x20] sm:$0xff]
    %v54 = vld [vmem:[%s1 + $0x28] sm:$0xff]
    %v55 = vld [vmem:[%s1 + $0x30] sm:$0xff]
    %v56 = vld [vmem:[%s1 + $0x38] sm:$0xff]
    %vm57 = vcmask 523264
    %v59 = vsel %vm57, %v47, 0
    %v62 = vsel %vm57, %v48, 0
    %64 = vmatprep.subr.mxu0 0.0
    %65 = vmatpush1.msra.mxu0 %v49
    %66 = vmatprep.subr.mxu0 0.0
    %67 = vmatpush1.msra.mxu0 %v50
    %68 = vmatprep.subr.mxu0 0.0
    %69 = vmatpush1.msra.mxu0 %v51
    %70 = vmatprep.subr.mxu0 0.0
    %71 = vmatpush1.msra.mxu0 %v52
    %72 = vmatprep.subr.mxu0 0.0
    %73 = vmatpush1.msra.mxu0 %v53
    %74 = vmatprep.subr.mxu0 0.0
    %75 = vmatpush1.msra.mxu0 %v54
    %76 = vmatprep.subr.mxu0 0.0
    %77 = vmatpush1.msra.mxu0 %v55
    %78 = vmatprep.subr.mxu0 0.0
    %79 = vmatpush1.msra.mxu0 %v56
    %80 = vmatprep.subr.mxu0 0.0
    %81 = vmatpush1.msra.mxu0 0.0
    %82 = vmatprep.subr.mxu0 0.0
    %83 = vmatpush1.msra.mxu0 0.0
    %84 = vmatprep.subr.mxu0 0.0
    %85 = vmatpush1.msra.mxu0 0.0
    %86 = vmatprep.subr.mxu0 0.0
    %87 = vmatpush1.msra.mxu0 0.0
    %88 = vmatprep.subr.mxu0 0.0
    %89 = vmatpush1.msra.mxu0 0.0
    %90 = vmatprep.subr.mxu0 0.0
    %91 = vmatpush1.msra.mxu0 0.0
    %92 = vmatprep.subr.mxu0 0.0
    %93 = vmatpush1.msra.mxu0 0.0
    %94 = vmatprep.subr.mxu0 0.0
    %95 = vmatpush1.msra.mxu0 0.0
    %96 = vmatprep.subr.mxu0 0.0
    %97 = vmatpush1.msra.mxu0 0.0
    %98 = vmatprep.subr.mxu0 0.0
    %99 = vmatpush1.msra.mxu0 0.0
    %100 = vmatprep.subr.mxu0 0.0
    %101 = vmatpush1.msra.mxu0 0.0
    %102 = vmatprep.subr.mxu0 0.0
    %103 = vmatpush1.msra.mxu0 0.0
    %104 = vmatprep.subr.mxu0 0.0
    %105 = vmatpush1.msra.mxu0 0.0
    %106 = vmatprep.subr.mxu0 0.0
    %107 = vmatpush1.msra.mxu0 0.0
    %108 = vmatprep.subr.mxu0 0.0
    %109 = vmatpush1.msra.mxu0 0.0
    %110 = vmatprep.subr.mxu0 0.0
    %111 = vmatpush1.msra.mxu0 0.0
    %112 = vmatprep.subr.mxu0 0.0
    %113 = vmatpush1.msra.mxu0 0.0
    %114 = vmatprep.subr.mxu0 0.0
    %115 = vmatpush1.msra.mxu0 0.0
    %116 = vmatprep.subr.mxu0 0.0
    %117 = vmatpush1.msra.mxu0 0.0
    %118 = vmatprep.subr.mxu0 0.0
    %119 = vmatpush1.msra.mxu0 0.0
    %120 = vmatprep.subr.mxu0 0.0
    %121 = vmatpush1.msra.mxu0 0.0
    %122 = vmatprep.subr.mxu0 0.0
    %123 = vmatpush1.msra.mxu0 0.0
    %124 = vmatprep.subr.mxu0 0.0
    %125 = vmatpush1.msra.mxu0 0.0
    %126 = vmatprep.subr.mxu0 0.0
    %127 = vmatpush1.msra.mxu0 0.0
    %128 = vmatprep.mubr.f32.mxu0 0.0
    %129 = vmatmul.mubr.f32.gmra.mrb[0].mxu0 %v59
    %v130 = vpop.f32.mrb[0].mxu0
    %v131 = vadd.f32 0.0, %v130
    %v132 = vpop.f32.mrb[0].mxu0
    %133 = vmatprep.mubr.f32.mxu0 0.0
    %134 = vmatmul.mubr.f32.gmra.mrb[0].mxu0 %v62
    %v135 = vpop.f32.mrb[0].mxu0
    %v136 = vadd.f32 0.0, %v135
    %v137 = vpop.f32.mrb[0].mxu0
    %138 = vdwg.mxu0
    %v139 = vmul.f32 %v131, 5.656854
    %v140 = vmul.f32 %v136, 5.656854
    %v141 = vld [vmem:[%s2] sm:$0xff]
    %v142 = vadd.f32 %v139, %v141
    %v143 = vadd.f32 %v140, %v141
    %v144 = vld [vmem:[%s3] sm:$0xff]
    %v145 = vld [vmem:[%s3 + $0x8] sm:$0xff]
    %v146 = vld [vmem:[%s4] sm:$0xff]
    %v147 = vld [vmem:[%s4 + $0x8] sm:$0xff]
    %v148 = vld [vmem:[%s4 + $0x10] sm:$0xff]
    %v149 = vld [vmem:[%s4 + $0x18] sm:$0xff]
    %v150 = vld [vmem:[%s5] sm:$0xff]
    %v151 = vld [vmem:[%s5 + $0x8] sm:$0xff]
    %v152 = vld [vmem:[%s5 + $0x10] sm:$0xff]
    %v153 = vld [vmem:[%s5 + $0x18] sm:$0xff]
    %v154 = vld [vmem:[%s6] sm:$0xff]
    %v155 = vld [vmem:[%s6 + $0x8] sm:$0xff]
    %v156 = vld [vmem:[%s6 + $0x10] sm:$0xff]
    %v157 = vld [vmem:[%s6 + $0x18] sm:$0xff]
    %v158 = vld [vmem:[%s7] sm:$0xff]
    %v159 = vld [vmem:[%s7 + $0x8] sm:$0xff]
    %v160 = vld [vmem:[%s7 + $0x10] sm:$0xff]
    %v161 = vld [vmem:[%s7 + $0x18] sm:$0xff]
    %v162 = vld [vmem:[%s7 + $0x20] sm:$0xff]
    %v163 = vld [vmem:[%s7 + $0x28] sm:$0xff]
    %v164 = vld [vmem:[%s7 + $0x30] sm:$0xff]
    %v165 = vld [vmem:[%s7 + $0x38] sm:$0xff]
    %v166 = vld [vmem:[%s8] sm:$0xff]
    %v167 = vlaneseq
    %v168 = vshrl.u32 %v167, 7
    %v169 = vsub.s32 0, %v168
    %v170 = vrot.slane %v166, %v169
    %vm171 = vcmask 261120
    %v173 = vsel %vm171, %v142, 0
    %v176 = vsel %vm171, %v143, 0
    %178 = vmatprep.subr.mxu0 0.0
    %179 = vmatpush1.msra.mxu0 %v146
    %180 = vmatprep.subr.mxu0 0.0
    %181 = vmatpush1.msra.mxu0 %v147
    %182 = vmatprep.subr.mxu0 0.0
    %183 = vmatpush1.msra.mxu0 %v148
    %184 = vmatprep.subr.mxu0 0.0
    %185 = vmatpush1.msra.mxu0 %v149
    %186 = vmatprep.subr.mxu0 0.0
    %187 = vmatpush1.msra.mxu0 0.0
    %188 = vmatprep.subr.mxu0 0.0
    %189 = vmatpush1.msra.mxu0 0.0
    %190 = vmatprep.subr.mxu0 0.0
    %191 = vmatpush1.msra.mxu0 0.0
    %192 = vmatprep.subr.mxu0 0.0
    %193 = vmatpush1.msra.mxu0 0.0
    %194 = vmatprep.subr.mxu0 0.0
    %195 = vmatpush1.msra.mxu0 0.0
    %196 = vmatprep.subr.mxu0 0.0
    %197 = vmatpush1.msra.mxu0 0.0
    %198 = vmatprep.subr.mxu0 0.0
    %199 = vmatpush1.msra.mxu0 0.0
    %200 = vmatprep.subr.mxu0 0.0
    %201 = vmatpush1.msra.mxu0 0.0
    %202 = vmatprep.subr.mxu0 0.0
    %203 = vmatpush1.msra.mxu0 0.0
    %204 = vmatprep.subr.mxu0 0.0
    %205 = vmatpush1.msra.mxu0 0.0
    %206 = vmatprep.subr.mxu0 0.0
    %207 = vmatpush1.msra.mxu0 0.0
    %208 = vmatprep.subr.mxu0 0.0
    %209 = vmatpush1.msra.mxu0 0.0
    %210 = vmatprep.subr.mxu0 0.0
    %211 = vmatpush1.msra.mxu0 0.0
    %212 = vmatprep.subr.mxu0 0.0
    %213 = vmatpush1.msra.mxu0 0.0
    %214 = vmatprep.subr.mxu0 0.0
    %215 = vmatpush1.msra.mxu0 0.0
    %216 = vmatprep.subr.mxu0 0.0
    %217 = vmatpush1.msra.mxu0 0.0
    %218 = vmatprep.subr.mxu0 0.0
    %219 = vmatpush1.msra.mxu0 0.0
    %220 = vmatprep.subr.mxu0 0.0
    %221 = vmatpush1.msra.mxu0 0.0
    %222 = vmatprep.subr.mxu0 0.0
    %223 = vmatpush1.msra.mxu0 0.0
    %224 = vmatprep.subr.mxu0 0.0
    %225 = vmatpush1.msra.mxu0 0.0
    %226 = vmatprep.subr.mxu0 0.0
    %227 = vmatpush1.msra.mxu0 0.0
    %228 = vmatprep.subr.mxu0 0.0
    %229 = vmatpush1.msra.mxu0 0.0
    %230 = vmatprep.subr.mxu0 0.0
    %231 = vmatpush1.msra.mxu0 0.0
    %232 = vmatprep.subr.mxu0 0.0
    %233 = vmatpush1.msra.mxu0 0.0
    %234 = vmatprep.subr.mxu0 0.0
    %235 = vmatpush1.msra.mxu0 0.0
    %236 = vmatprep.subr.mxu0 0.0
    %237 = vmatpush1.msra.mxu0 0.0
    %238 = vmatprep.subr.mxu0 0.0
    %239 = vmatpush1.msra.mxu0 0.0
    %240 = vmatprep.subr.mxu0 0.0
    %241 = vmatpush1.msra.mxu0 0.0
    %242 = vmatprep.mubr.f32.mxu0 0.0
    %243 = vmatmul.mubr.f32.gmra.mrb[0].mxu0 %v173
    %v244 = vpop.f32.mrb[0].mxu0
    %v245 = vadd.f32 %v170, %v244
    %v246 = vpop.f32.mrb[0].mxu0
    %247 = vmatprep.mubr.f32.mxu0 0.0
    %248 = vmatmul.mubr.f32.gmra.mrb[0].mxu0 %v176
    %v249 = vpop.f32.mrb[0].mxu0
    %v250 = vadd.f32 %v170, %v249
    %v251 = vpop.f32.mrb[0].mxu0
    %252 = vdwg.mxu0
    %253 = vxpose.xlu0.b32.start [1/16] %v245, 128
    %254 = vxpose.xlu0.b32.cont [2/16] %v250, 128
    %255 = vxpose.xlu0.b32.cont [3/16] 0.0, 128
    %256 = vxpose.xlu0.b32.cont [4/16] 0.0, 128
    %257 = vxpose.xlu0.b32.cont [5/16] 0.0, 128
    %258 = vxpose.xlu0.b32.cont [6/16] 0.0, 128
    %259 = vxpose.xlu0.b32.cont [7/16] 0.0, 128
    %260 = vxpose.xlu0.b32.cont [8/16] 0.0, 128
    %261 = vxpose.xlu0.b32.cont [9/16] 0.0, 128
    %262 = vxpose.xlu0.b32.cont [10/16] 0.0, 128
    %263 = vxpose.xlu0.b32.cont [11/16] 0.0, 128
    %264 = vxpose.xlu0.b32.cont [12/16] 0.0, 128
    %265 = vxpose.xlu0.b32.cont [13/16] 0.0, 128
    %266 = vxpose.xlu0.b32.cont [14/16] 0.0, 128
    %267 = vxpose.xlu0.b32.cont [15/16] 0.0, 128
    %268 = vxpose.xlu0.b32.end [16/16] 0.0, 128
    %v269 = vpop.trf.xlu0
    %v270 = vpop.trf.xlu0
    %v271 = vpop.trf.xlu0
    %v272 = vpop.trf.xlu0
    %v273 = vpop.trf.xlu0
    %v274 = vpop.trf.xlu0
    %v275 = vpop.trf.xlu0
    %v276 = vpop.trf.xlu0
    %v277 = vpop.trf.xlu0
    %v278 = vpop.trf.xlu0
    %v279 = vpop.trf.xlu0
    %v280 = vpop.trf.xlu0
    %v281 = vpop.trf.xlu0
    %v282 = vpop.trf.xlu0
    %v283 = vpop.trf.xlu0
    %v284 = vpop.trf.xlu0
    %285 = vxpose.xlu0.b32.start [1/16] %v269, 128
    %286 = vxpose.xlu0.b32.cont [2/16] 0.0, 128
    %287 = vxpose.xlu0.b32.cont [3/16] 0.0, 128
    %288 = vxpose.xlu0.b32.cont [4/16] 0.0, 128
    %289 = vxpose.xlu0.b32.cont [5/16] 0.0, 128
    %290 = vxpose.xlu0.b32.cont [6/16] 0.0, 128
    %291 = vxpose.xlu0.b32.cont [7/16] 0.0, 128
    %292 = vxpose.xlu0.b32.cont [8/16] 0.0, 128
    %293 = vxpose.xlu0.b32.cont [9/16] 0.0, 128
    %294 = vxpose.xlu0.b32.cont [10/16] 0.0, 128
    %295 = vxpose.xlu0.b32.cont [11/16] 0.0, 128
    %296 = vxpose.xlu0.b32.cont [12/16] 0.0, 128
    %297 = vxpose.xlu0.b32.cont [13/16] 0.0, 128
    %298 = vxpose.xlu0.b32.cont [14/16] 0.0, 128
    %299 = vxpose.xlu0.b32.cont [15/16] 0.0, 128
    %300 = vxpose.xlu0.b32.end [16/16] 0.0, 128
    %v301 = vpop.trf.xlu0
    %v302 = vpop.trf.xlu0
    %v303 = vpop.trf.xlu0
    %v304 = vpop.trf.xlu0
    %v305 = vpop.trf.xlu0
    %v306 = vpop.trf.xlu0
    %v307 = vpop.trf.xlu0
    %v308 = vpop.trf.xlu0
    %v309 = vpop.trf.xlu0
    %v310 = vpop.trf.xlu0
    %v311 = vpop.trf.xlu0
    %v312 = vpop.trf.xlu0
    %v313 = vpop.trf.xlu0
    %v314 = vpop.trf.xlu0
    %v315 = vpop.trf.xlu0
    %v316 = vpop.trf.xlu0
    %vm317 = vcmask 64512
    %v319 = vsel %vm317, %v301, 0
    %v322 = vsel %vm317, %v302, 0
    %324 = vmatprep.subr.mxu0 0.0
    %325 = vmatpush1.msra.mxu0 %v273
    %326 = vmatprep.subr.mxu0 0.0
    %327 = vmatpush1.msra.mxu0 0.0
    %328 = vmatprep.subr.mxu0 0.0
    %329 = vmatpush1.msra.mxu0 0.0
    %330 = vmatprep.subr.mxu0 0.0
    %331 = vmatpush1.msra.mxu0 0.0
    %332 = vmatprep.subr.mxu0 0.0
    %333 = vmatpush1.msra.mxu0 0.0
    %334 = vmatprep.subr.mxu0 0.0
    %335 = vmatpush1.msra.mxu0 0.0
    %336 = vmatprep.subr.mxu0 0.0
    %337 = vmatpush1.msra.mxu0 0.0
    %338 = vmatprep.subr.mxu0 0.0
    %339 = vmatpush1.msra.mxu0 0.0
    %340 = vmatprep.subr.mxu0 0.0
    %341 = vmatpush1.msra.mxu0 0.0
    %342 = vmatprep.subr.mxu0 0.0
    %343 = vmatpush1.msra.mxu0 0.0
    %344 = vmatprep.subr.mxu0 0.0
    %345 = vmatpush1.msra.mxu0 0.0
    %346 = vmatprep.subr.mxu0 0.0
    %347 = vmatpush1.msra.mxu0 0.0
    %348 = vmatprep.subr.mxu0 0.0
    %349 = vmatpush1.msra.mxu0 0.0
    %350 = vmatprep.subr.mxu0 0.0
    %351 = vmatpush1.msra.mxu0 0.0
    %352 = vmatprep.subr.mxu0 0.0
    %353 = vmatpush1.msra.mxu0 0.0
    %354 = vmatprep.subr.mxu0 0.0
    %355 = vmatpush1.msra.mxu0 0.0
    %356 = vmatprep.subr.mxu0 0.0
    %357 = vmatpush1.msra.mxu0 0.0
    %358 = vmatprep.subr.mxu0 0.0
    %359 = vmatpush1.msra.mxu0 0.0
    %360 = vmatprep.subr.mxu0 0.0
    %361 = vmatpush1.msra.mxu0 0.0
    %362 = vmatprep.subr.mxu0 0.0
    %363 = vmatpush1.msra.mxu0 0.0
    %364 = vmatprep.subr.mxu0 0.0
    %365 = vmatpush1.msra.mxu0 0.0
    %366 = vmatprep.subr.mxu0 0.0
    %367 = vmatpush1.msra.mxu0 0.0
    %368 = vmatprep.subr.mxu0 0.0
    %369 = vmatpush1.msra.mxu0 0.0
    %370 = vmatprep.subr.mxu0 0.0
    %371 = vmatpush1.msra.mxu0 0.0
    %372 = vmatprep.subr.mxu0 0.0
    %373 = vmatpush1.msra.mxu0 0.0
    %374 = vmatprep.subr.mxu0 0.0
    %375 = vmatpush1.msra.mxu0 0.0
    %376 = vmatprep.subr.mxu0 0.0
    %377 = vmatpush1.msra.mxu0 0.0
    %378 = vmatprep.subr.mxu0 0.0
    %379 = vmatpush1.msra.mxu0 0.0
    %380 = vmatprep.subr.mxu0 0.0
    %381 = vmatpush1.msra.mxu0 0.0
    %382 = vmatprep.subr.mxu0 0.0
    %383 = vmatpush1.msra.mxu0 0.0
    %384 = vmatprep.subr.mxu0 0.0
    %385 = vmatpush1.msra.mxu0 0.0
    %386 = vmatprep.subr.mxu0 0.0
    %387 = vmatpush1.msra.mxu0 0.0
    %388 = vmatprep.mubr.f32.mxu0 0.0
    %389 = vmatmul.mubr.f32.gmra.mrb[0].mxu0 %v319
    %v390 = vpop.f32.mrb[0].mxu0
    %v391 = vadd.f32 0.0, %v390
    %v392 = vpop.f32.mrb[0].mxu0
    %393 = vmatprep.mubr.f32.mxu0 0.0
    %394 = vmatmul.mubr.f32.gmra.mrb[0].mxu0 %v322
    %v395 = vpop.f32.mrb[0].mxu0
    %v396 = vadd.f32 0.0, %v395
    %v397 = vpop.f32.mrb[0].mxu0
    %398 = vdwg.mxu0
    %399 = vxpose.xlu0.b32.start [1/16] %v270, 128
    %400 = vxpose.xlu0.b32.cont [2/16] 0.0, 128
    %401 = vxpose.xlu0.b32.cont [3/16] 0.0, 128
    %402 = vxpose.xlu0.b32.cont [4/16] 0.0, 128
    %403 = vxpose.xlu0.b32.cont [5/16] 0.0, 128
    %404 = vxpose.xlu0.b32.cont [6/16] 0.0, 128
    %405 = vxpose.xlu0.b32.cont [7/16] 0.0, 128
    %406 = vxpose.xlu0.b32.cont [8/16] 0.0, 128
    %407 = vxpose.xlu0.b32.cont [9/16] 0.0, 128
    %408 = vxpose.xlu0.b32.cont [10/16] 0.0, 128
    %409 = vxpose.xlu0.b32.cont [11/16] 0.0, 128
    %410 = vxpose.xlu0.b32.cont [12/16] 0.0, 128
    %411 = vxpose.xlu0.b32.cont [13/16] 0.0, 128
    %412 = vxpose.xlu0.b32.cont [14/16] 0.0, 128
    %413 = vxpose.xlu0.b32.cont [15/16] 0.0, 128
    %414 = vxpose.xlu0.b32.end [16/16] 0.0, 128
    %v415 = vpop.trf.xlu0
    %v416 = vpop.trf.xlu0
    %v417 = vpop.trf.xlu0
    %v418 = vpop.trf.xlu0
    %v419 = vpop.trf.xlu0
    %v420 = vpop.trf.xlu0
    %v421 = vpop.trf.xlu0
    %v422 = vpop.trf.xlu0
    %v423 = vpop.trf.xlu0
    %v424 = vpop.trf.xlu0
    %v425 = vpop.trf.xlu0
    %v426 = vpop.trf.xlu0
    %v427 = vpop.trf.xlu0
    %v428 = vpop.trf.xlu0
    %v429 = vpop.trf.xlu0
    %v430 = vpop.trf.xlu0
    %v432 = vsel %vm317, %v415, 0
    %v435 = vsel %vm317, %v416, 0
    %437 = vmatprep.subr.mxu0 0.0
    %438 = vmatpush1.msra.mxu0 %v274
    %439 = vmatprep.subr.mxu0 0.0
    %440 = vmatpush1.msra.mxu0 0.0
    %441 = vmatprep.subr.mxu0 0.0
    %442 = vmatpush1.msra.mxu0 0.0
    %443 = vmatprep.subr.mxu0 0.0
    %444 = vmatpush1.msra.mxu0 0.0
    %445 = vmatprep.subr.mxu0 0.0
    %446 = vmatpush1.msra.mxu0 0.0
    %447 = vmatprep.subr.mxu0 0.0
    %448 = vmatpush1.msra.mxu0 0.0
    %449 = vmatprep.subr.mxu0 0.0
    %450 = vmatpush1.msra.mxu0 0.0
    %451 = vmatprep.subr.mxu0 0.0
    %452 = vmatpush1.msra.mxu0 0.0
    %453 = vmatprep.subr.mxu0 0.0
    %454 = vmatpush1.msra.mxu0 0.0
    %455 = vmatprep.subr.mxu0 0.0
    %456 = vmatpush1.msra.mxu0 0.0
    %457 = vmatprep.subr.mxu0 0.0
    %458 = vmatpush1.msra.mxu0 0.0
    %459 = vmatprep.subr.mxu0 0.0
    %460 = vmatpush1.msra.mxu0 0.0
    %461 = vmatprep.subr.mxu0 0.0
    %462 = vmatpush1.msra.mxu0 0.0
    %463 = vmatprep.subr.mxu0 0.0
    %464 = vmatpush1.msra.mxu0 0.0
    %465 = vmatprep.subr.mxu0 0.0
    %466 = vmatpush1.msra.mxu0 0.0
    %467 = vmatprep.subr.mxu0 0.0
    %468 = vmatpush1.msra.mxu0 0.0
    %469 = vmatprep.subr.mxu0 0.0
    %470 = vmatpush1.msra.mxu0 0.0
    %471 = vmatprep.subr.mxu0 0.0
    %472 = vmatpush1.msra.mxu0 0.0
    %473 = vmatprep.subr.mxu0 0.0
    %474 = vmatpush1.msra.mxu0 0.0
    %475 = vmatprep.subr.mxu0 0.0
    %476 = vmatpush1.msra.mxu0 0.0
    %477 = vmatprep.subr.mxu0 0.0
    %478 = vmatpush1.msra.mxu0 0.0
    %479 = vmatprep.subr.mxu0 0.0
    %480 = vmatpush1.msra.mxu0 0.0
    %481 = vmatprep.subr.mxu0 0.0
    %482 = vmatpush1.msra.mxu0 0.0
    %483 = vmatprep.subr.mxu0 0.0
    %484 = vmatpush1.msra.mxu0 0.0
    %485 = vmatprep.subr.mxu0 0.0
    %486 = vmatpush1.msra.mxu0 0.0
    %487 = vmatprep.subr.mxu0 0.0
    %488 = vmatpush1.msra.mxu0 0.0
    %489 = vmatprep.subr.mxu0 0.0
    %490 = vmatpush1.msra.mxu0 0.0
    %491 = vmatprep.subr.mxu0 0.0
    %492 = vmatpush1.msra.mxu0 0.0
    %493 = vmatprep.subr.mxu0 0.0
    %494 = vmatpush1.msra.mxu0 0.0
    %495 = vmatprep.subr.mxu0 0.0
    %496 = vmatpush1.msra.mxu0 0.0
    %497 = vmatprep.subr.mxu0 0.0
    %498 = vmatpush1.msra.mxu0 0.0
    %499 = vmatprep.subr.mxu0 0.0
    %500 = vmatpush1.msra.mxu0 0.0
    %501 = vmatprep.mubr.f32.mxu0 0.0
    %502 = vmatmul.mubr.f32.gmra.mrb[0].mxu0 %v432
    %v503 = vpop.f32.mrb[0].mxu0
    %v504 = vadd.f32 0.0, %v503
    %v505 = vpop.f32.mrb[0].mxu0
    %506 = vmatprep.mubr.f32.mxu0 0.0
    %507 = vmatmul.mubr.f32.gmra.mrb[0].mxu0 %v435
    %v508 = vpop.f32.mrb[0].mxu0
    %v509 = vadd.f32 0.0, %v508
    %v510 = vpop.f32.mrb[0].mxu0
    %511 = vdwg.mxu0
    %512 = vxpose.xlu0.b32.start [1/16] %v271, 128
    %513 = vxpose.xlu0.b32.cont [2/16] 0.0, 128
    %514 = vxpose.xlu0.b32.cont [3/16] 0.0, 128
    %515 = vxpose.xlu0.b32.cont [4/16] 0.0, 128
    %516 = vxpose.xlu0.b32.cont [5/16] 0.0, 128
    %517 = vxpose.xlu0.b32.cont [6/16] 0.0, 128
    %518 = vxpose.xlu0.b32.cont [7/16] 0.0, 128
    %519 = vxpose.xlu0.b32.cont [8/16] 0.0, 128
    %520 = vxpose.xlu0.b32.cont [9/16] 0.0, 128
    %521 = vxpose.xlu0.b32.cont [10/16] 0.0, 128
    %522 = vxpose.xlu0.b32.cont [11/16] 0.0, 128
    %523 = vxpose.xlu0.b32.cont [12/16] 0.0, 128
    %524 = vxpose.xlu0.b32.cont [13/16] 0.0, 128
    %525 = vxpose.xlu0.b32.cont [14/16] 0.0, 128
    %526 = vxpose.xlu0.b32.cont [15/16] 0.0, 128
    %527 = vxpose.xlu0.b32.end [16/16] 0.0, 128
    %v528 = vpop.trf.xlu0
    %v529 = vpop.trf.xlu0
    %v530 = vpop.trf.xlu0
    %v531 = vpop.trf.xlu0
    %v532 = vpop.trf.xlu0
    %v533 = vpop.trf.xlu0
    %v534 = vpop.trf.xlu0
    %v535 = vpop.trf.xlu0
    %v536 = vpop.trf.xlu0
    %v537 = vpop.trf.xlu0
    %v538 = vpop.trf.xlu0
    %v539 = vpop.trf.xlu0
    %v540 = vpop.trf.xlu0
    %v541 = vpop.trf.xlu0
    %v542 = vpop.trf.xlu0
    %v543 = vpop.trf.xlu0
    %v545 = vsel %vm317, %v528, 0
    %v548 = vsel %vm317, %v529, 0
    %550 = vmatprep.subr.mxu0 0.0
    %551 = vmatpush1.msra.mxu0 %v275
    %552 = vmatprep.subr.mxu0 0.0
    %553 = vmatpush1.msra.mxu0 0.0
    %554 = vmatprep.subr.mxu0 0.0
    %555 = vmatpush1.msra.mxu0 0.0
    %556 = vmatprep.subr.mxu0 0.0
    %557 = vmatpush1.msra.mxu0 0.0
    %558 = vmatprep.subr.mxu0 0.0
    %559 = vmatpush1.msra.mxu0 0.0
    %560 = vmatprep.subr.mxu0 0.0
    %561 = vmatpush1.msra.mxu0 0.0
    %562 = vmatprep.subr.mxu0 0.0
    %563 = vmatpush1.msra.mxu0 0.0
    %564 = vmatprep.subr.mxu0 0.0
    %565 = vmatpush1.msra.mxu0 0.0
    %566 = vmatprep.subr.mxu0 0.0
    %567 = vmatpush1.msra.mxu0 0.0
    %568 = vmatprep.subr.mxu0 0.0
    %569 = vmatpush1.msra.mxu0 0.0
    %570 = vmatprep.subr.mxu0 0.0
    %571 = vmatpush1.msra.mxu0 0.0
    %572 = vmatprep.subr.mxu0 0.0
    %573 = vmatpush1.msra.mxu0 0.0
    %574 = vmatprep.subr.mxu0 0.0
    %575 = vmatpush1.msra.mxu0 0.0
    %576 = vmatprep.subr.mxu0 0.0
    %577 = vmatpush1.msra.mxu0 0.0
    %578 = vmatprep.subr.mxu0 0.0
    %579 = vmatpush1.msra.mxu0 0.0
    %580 = vmatprep.subr.mxu0 0.0
    %581 = vmatpush1.msra.mxu0 0.0
    %582 = vmatprep.subr.mxu0 0.0
    %583 = vmatpush1.msra.mxu0 0.0
    %584 = vmatprep.subr.mxu0 0.0
    %585 = vmatpush1.msra.mxu0 0.0
    %586 = vmatprep.subr.mxu0 0.0
    %587 = vmatpush1.msra.mxu0 0.0
    %588 = vmatprep.subr.mxu0 0.0
    %589 = vmatpush1.msra.mxu0 0.0
    %590 = vmatprep.subr.mxu0 0.0
    %591 = vmatpush1.msra.mxu0 0.0
    %592 = vmatprep.subr.mxu0 0.0
    %593 = vmatpush1.msra.mxu0 0.0
    %594 = vmatprep.subr.mxu0 0.0
    %595 = vmatpush1.msra.mxu0 0.0
    %596 = vmatprep.subr.mxu0 0.0
    %597 = vmatpush1.msra.mxu0 0.0
    %598 = vmatprep.subr.mxu0 0.0
    %599 = vmatpush1.msra.mxu0 0.0
    %600 = vmatprep.subr.mxu0 0.0
    %601 = vmatpush1.msra.mxu0 0.0
    %602 = vmatprep.subr.mxu0 0.0
    %603 = vmatpush1.msra.mxu0 0.0
    %604 = vmatprep.subr.mxu0 0.0
    %605 = vmatpush1.msra.mxu0 0.0
    %606 = vmatprep.subr.mxu0 0.0
    %607 = vmatpush1.msra.mxu0 0.0
    %608 = vmatprep.subr.mxu0 0.0
    %609 = vmatpush1.msra.mxu0 0.0
    %610 = vmatprep.subr.mxu0 0.0
    %611 = vmatpush1.msra.mxu0 0.0
    %612 = vmatprep.subr.mxu0 0.0
    %613 = vmatpush1.msra.mxu0 0.0
    %614 = vmatprep.mubr.f32.mxu0 0.0
    %615 = vmatmul.mubr.f32.gmra.mrb[0].mxu0 %v545
    %v616 = vpop.f32.mrb[0].mxu0
    %v617 = vadd.f32 0.0, %v616
    %v618 = vpop.f32.mrb[0].mxu0
    %619 = vmatprep.mubr.f32.mxu0 0.0
    %620 = vmatmul.mubr.f32.gmra.mrb[0].mxu0 %v548
    %v621 = vpop.f32.mrb[0].mxu0
    %v622 = vadd.f32 0.0, %v621
    %v623 = vpop.f32.mrb[0].mxu0
    %624 = vdwg.mxu0
    %625 = vxpose.xlu0.b32.start [1/16] %v272, 128
    %626 = vxpose.xlu0.b32.cont [2/16] 0.0, 128
    %627 = vxpose.xlu0.b32.cont [3/16] 0.0, 128
    %628 = vxpose.xlu0.b32.cont [4/16] 0.0, 128
    %629 = vxpose.xlu0.b32.cont [5/16] 0.0, 128
    %630 = vxpose.xlu0.b32.cont [6/16] 0.0, 128
    %631 = vxpose.xlu0.b32.cont [7/16] 0.0, 128
    %632 = vxpose.xlu0.b32.cont [8/16] 0.0, 128
    %633 = vxpose.xlu0.b32.cont [9/16] 0.0, 128
    %634 = vxpose.xlu0.b32.cont [10/16] 0.0, 128
    %635 = vxpose.xlu0.b32.cont [11/16] 0.0, 128
    %636 = vxpose.xlu0.b32.cont [12/16] 0.0, 128
    %637 = vxpose.xlu0.b32.cont [13/16] 0.0, 128
    %638 = vxpose.xlu0.b32.cont [14/16] 0.0, 128
    %639 = vxpose.xlu0.b32.cont [15/16] 0.0, 128
    %640 = vxpose.xlu0.b32.end [16/16] 0.0, 128
    %v641 = vpop.trf.xlu0
    %v642 = vpop.trf.xlu0
    %v643 = vpop.trf.xlu0
    %v644 = vpop.trf.xlu0
    %v645 = vpop.trf.xlu0
    %v646 = vpop.trf.xlu0
    %v647 = vpop.trf.xlu0
    %v648 = vpop.trf.xlu0
    %v649 = vpop.trf.xlu0
    %v650 = vpop.trf.xlu0
    %v651 = vpop.trf.xlu0
    %v652 = vpop.trf.xlu0
    %v653 = vpop.trf.xlu0
    %v654 = vpop.trf.xlu0
    %v655 = vpop.trf.xlu0
    %v656 = vpop.trf.xlu0
    %v658 = vsel %vm317, %v641, 0
    %v661 = vsel %vm317, %v642, 0
    %663 = vmatprep.subr.mxu0 0.0
    %664 = vmatpush1.msra.mxu0 %v276
    %665 = vmatprep.subr.mxu0 0.0
    %666 = vmatpush1.msra.mxu0 0.0
    %667 = vmatprep.subr.mxu0 0.0
    %668 = vmatpush1.msra.mxu0 0.0
    %669 = vmatprep.subr.mxu0 0.0
    %670 = vmatpush1.msra.mxu0 0.0
    %671 = vmatprep.subr.mxu0 0.0
    %672 = vmatpush1.msra.mxu0 0.0
    %673 = vmatprep.subr.mxu0 0.0
    %674 = vmatpush1.msra.mxu0 0.0
    %675 = vmatprep.subr.mxu0 0.0
    %676 = vmatpush1.msra.mxu0 0.0
    %677 = vmatprep.subr.mxu0 0.0
    %678 = vmatpush1.msra.mxu0 0.0
    %679 = vmatprep.subr.mxu0 0.0
    %680 = vmatpush1.msra.mxu0 0.0
    %681 = vmatprep.subr.mxu0 0.0
    %682 = vmatpush1.msra.mxu0 0.0
    %683 = vmatprep.subr.mxu0 0.0
    %684 = vmatpush1.msra.mxu0 0.0
    %685 = vmatprep.subr.mxu0 0.0
    %686 = vmatpush1.msra.mxu0 0.0
    %687 = vmatprep.subr.mxu0 0.0
    %688 = vmatpush1.msra.mxu0 0.0
    %689 = vmatprep.subr.mxu0 0.0
    %690 = vmatpush1.msra.mxu0 0.0
    %691 = vmatprep.subr.mxu0 0.0
    %692 = vmatpush1.msra.mxu0 0.0
    %693 = vmatprep.subr.mxu0 0.0
    %694 = vmatpush1.msra.mxu0 0.0
    %695 = vmatprep.subr.mxu0 0.0
    %696 = vmatpush1.msra.mxu0 0.0
    %697 = vmatprep.subr.mxu0 0.0
    %698 = vmatpush1.msra.mxu0 0.0
    %699 = vmatprep.subr.mxu0 0.0
    %700 = vmatpush1.msra.mxu0 0.0
    %701 = vmatprep.subr.mxu0 0.0
    %702 = vmatpush1.msra.mxu0 0.0
    %703 = vmatprep.subr.mxu0 0.0
    %704 = vmatpush1.msra.mxu0 0.0
    %705 = vmatprep.subr.mxu0 0.0
    %706 = vmatpush1.msra.mxu0 0.0
    %707 = vmatprep.subr.mxu0 0.0
    %708 = vmatpush1.msra.mxu0 0.0
    %709 = vmatprep.subr.mxu0 0.0
    %710 = vmatpush1.msra.mxu0 0.0
    %711 = vmatprep.subr.mxu0 0.0
    %712 = vmatpush1.msra.mxu0 0.0
    %713 = vmatprep.subr.mxu0 0.0
    %714 = vmatpush1.msra.mxu0 0.0
    %715 = vmatprep.subr.mxu0 0.0
    %716 = vmatpush1.msra.mxu0 0.0
    %717 = vmatprep.subr.mxu0 0.0
    %718 = vmatpush1.msra.mxu0 0.0
    %719 = vmatprep.subr.mxu0 0.0
    %720 = vmatpush1.msra.mxu0 0.0
    %721 = vmatprep.subr.mxu0 0.0
    %722 = vmatpush1.msra.mxu0 0.0
    %723 = vmatprep.subr.mxu0 0.0
    %724 = vmatpush1.msra.mxu0 0.0
    %725 = vmatprep.subr.mxu0 0.0
    %726 = vmatpush1.msra.mxu0 0.0
    %727 = vmatprep.mubr.f32.mxu0 0.0
    %728 = vmatmul.mubr.f32.gmra.mrb[0].mxu0 %v658
    %v729 = vpop.f32.mrb[0].mxu0
    %v730 = vadd.f32 0.0, %v729
    %v731 = vpop.f32.mrb[0].mxu0
    %732 = vmatprep.mubr.f32.mxu0 0.0
    %733 = vmatmul.mubr.f32.gmra.mrb[0].mxu0 %v661
    %v734 = vpop.f32.mrb[0].mxu0
    %v735 = vadd.f32 0.0, %v734
    %v736 = vpop.f32.mrb[0].mxu0
    %737 = vdwg.mxu0
    %v738 = vmul.f32 %v391, 0.35355338
    %v739 = vmul.f32 %v396, 0.35355338
    %v740 = vmul.f32 %v504, 0.35355338
    %v741 = vmul.f32 %v509, 0.35355338
    %v742 = vmul.f32 %v617, 0.35355338
    %v743 = vmul.f32 %v622, 0.35355338
    %v744 = vmul.f32 %v730, 0.35355338
    %v745 = vmul.f32 %v735, 0.35355338
    %v746 = vadd.f32 %v738, %v144
    %v747 = vadd.f32 %v739, %v145
    %v748 = vadd.f32 %v740, %v144
    %v749 = vadd.f32 %v741, %v145
    %v750 = vadd.f32 %v742, %v144
    %v751 = vadd.f32 %v743, %v145
    %v752 = vadd.f32 %v744, %v144
    %v753 = vadd.f32 %v745, %v145
    %vm754 = vcmask 130048
    %v755 = vsel %vm754, %v746, -inf
    %756 = vmax.xlane.f32.xlu0 %v755
    %v757 = vpop.xlane.xlu0 %756
    %v758 = vsel %vm754, %v747, -inf
    %759 = vmax.xlane.f32.xlu0 %v758
    %v760 = vpop.xlane.xlu0 %759
    %v761 = vsel %vm754, %v748, -inf
    %762 = vmax.xlane.f32.xlu0 %v761
    %v763 = vpop.xlane.xlu0 %762
    %v764 = vsel %vm754, %v749, -inf
    %765 = vmax.xlane.f32.xlu0 %v764
    %v766 = vpop.xlane.xlu0 %765
    %v767 = vsel %vm754, %v750, -inf
    %768 = vmax.xlane.f32.xlu0 %v767
    %v769 = vpop.xlane.xlu0 %768
    %v770 = vsel %vm754, %v751, -inf
    %771 = vmax.xlane.f32.xlu0 %v770
    %v772 = vpop.xlane.xlu0 %771
    %v773 = vsel %vm754, %v752, -inf
    %774 = vmax.xlane.f32.xlu0 %v773
    %v775 = vpop.xlane.xlu0 %774
    %v776 = vsel %vm754, %v753, -inf
    %777 = vmax.xlane.f32.xlu0 %v776
    %v778 = vpop.xlane.xlu0 %777
    %v779 = vsub.f32 %v746, %v757
    %v780 = vsub.f32 %v747, %v760
    %v781 = vsub.f32 %v748, %v763
    %v782 = vsub.f32 %v749, %v766
    %v783 = vsub.f32 %v750, %v769
    %v784 = vsub.f32 %v751, %v772
    %v785 = vsub.f32 %v752, %v775
    %v786 = vsub.f32 %v753, %v778
    %v787 = vmul.f32 %v779, 1.442695
    %v788 = vpow.pop %v787
    %v789 = vmul.f32 %v780, 1.442695
    %v790 = vpow.pop %v789
    %v791 = vmul.f32 %v781, 1.442695
    %v792 = vpow.pop %v791
    %v793 = vmul.f32 %v782, 1.442695
    %v794 = vpow.pop %v793
    %v795 = vmul.f32 %v783, 1.442695
    %v796 = vpow.pop %v795
    %v797 = vmul.f32 %v784, 1.442695
    %v798 = vpow.pop %v797
    %v799 = vmul.f32 %v785, 1.442695
    %v800 = vpow.pop %v799
    %v801 = vmul.f32 %v786, 1.442695
    %v802 = vpow.pop %v801
    %v803 = vsel %vm754, %v788, 0.0
    %804 = vadd.xlane.f32.xlu0 %v803
    %v805 = vpop.xlane.xlu0 %804
    %v806 = vsel %vm754, %v790, 0.0
    %807 = vadd.xlane.f32.xlu0 %v806
    %v808 = vpop.xlane.xlu0 %807
    %v809 = vsel %vm754, %v792, 0.0
    %810 = vadd.xlane.f32.xlu0 %v809
    %v811 = vpop.xlane.xlu0 %810
    %v812 = vsel %vm754, %v794, 0.0
    %813 = vadd.xlane.f32.xlu0 %v812
    %v814 = vpop.xlane.xlu0 %813
    %v815 = vsel %vm754, %v796, 0.0
    %816 = vadd.xlane.f32.xlu0 %v815
    %v817 = vpop.xlane.xlu0 %816
    %v818 = vsel %vm754, %v798, 0.0
    %819 = vadd.xlane.f32.xlu0 %v818
    %v820 = vpop.xlane.xlu0 %819
    %v821 = vsel %vm754, %v800, 0.0
    %822 = vadd.xlane.f32.xlu0 %v821
    %v823 = vpop.xlane.xlu0 %822
    %v824 = vsel %vm754, %v802, 0.0
    %825 = vadd.xlane.f32.xlu0 %v824
    %v826 = vpop.xlane.xlu0 %825
    %v827 = vrcp.pop %v805
    %v828 = vrcp.pop %v808
    %v829 = vrcp.pop %v811
    %v830 = vrcp.pop %v814
    %v831 = vrcp.pop %v817
    %v832 = vrcp.pop %v820
    %v833 = vrcp.pop %v823
    %v834 = vrcp.pop %v826
    %v835 = vmul.f32 %v788, %v827
    %v836 = vmul.f32 %v790, %v828
    %v837 = vmul.f32 %v792, %v829
    %v838 = vmul.f32 %v794, %v830
    %v839 = vmul.f32 %v796, %v831
    %v840 = vmul.f32 %v798, %v832
    %v841 = vmul.f32 %v800, %v833
    %v842 = vmul.f32 %v802, %v834
    %v844 = vsel %vm754, %v835, 0
    %v847 = vsel %vm754, %v836, 0
    %v850 = vsel %vm754, %v277, 0
    %852 = vmatprep.subr.mxu0 0.0
    %853 = vmatpush1.xpose.msra.mxu0 %v850
    %854 = vmatprep.subr.mxu0 0.0
    %855 = vmatpush1.xpose.msra.mxu0 0.0
    %856 = vmatprep.subr.mxu0 0.0
    %857 = vmatpush1.xpose.msra.mxu0 0.0
    %858 = vmatprep.subr.mxu0 0.0
    %859 = vmatpush1.xpose.msra.mxu0 0.0
    %860 = vmatprep.subr.mxu0 0.0
    %861 = vmatpush1.xpose.msra.mxu0 0.0
    %862 = vmatprep.subr.mxu0 0.0
    %863 = vmatpush1.xpose.msra.mxu0 0.0
    %864 = vmatprep.subr.mxu0 0.0
    %865 = vmatpush1.xpose.msra.mxu0 0.0
    %866 = vmatprep.subr.mxu0 0.0
    %867 = vmatpush1.xpose.msra.mxu0 0.0
    %868 = vmatprep.subr.mxu0 0.0
    %869 = vmatpush1.xpose.msra.mxu0 0.0
    %870 = vmatprep.subr.mxu0 0.0
    %871 = vmatpush1.xpose.msra.mxu0 0.0
    %872 = vmatprep.subr.mxu0 0.0
    %873 = vmatpush1.xpose.msra.mxu0 0.0
    %874 = vmatprep.subr.mxu0 0.0
    %875 = vmatpush1.xpose.msra.mxu0 0.0
    %876 = vmatprep.subr.mxu0 0.0
    %877 = vmatpush1.xpose.msra.mxu0 0.0
    %878 = vmatprep.subr.mxu0 0.0
    %879 = vmatpush1.xpose.msra.mxu0 0.0
    %880 = vmatprep.subr.mxu0 0.0
    %881 = vmatpush1.xpose.msra.mxu0 0.0
    %882 = vmatprep.subr.mxu0 0.0
    %883 = vmatpush1.xpose.msra.mxu0 0.0
    %884 = vmatprep.subr.mxu0 0.0
    %885 = vmatpush1.xpose.msra.mxu0 0.0
    %886 = vmatprep.subr.mxu0 0.0
    %887 = vmatpush1.xpose.msra.mxu0 0.0
    %888 = vmatprep.subr.mxu0 0.0
    %889 = vmatpush1.xpose.msra.mxu0 0.0
    %890 = vmatprep.subr.mxu0 0.0
    %891 = vmatpush1.xpose.msra.mxu0 0.0
    %892 = vmatprep.subr.mxu0 0.0
    %893 = vmatpush1.xpose.msra.mxu0 0.0
    %894 = vmatprep.subr.mxu0 0.0
    %895 = vmatpush1.xpose.msra.mxu0 0.0
    %896 = vmatprep.subr.mxu0 0.0
    %897 = vmatpush1.xpose.msra.mxu0 0.0
    %898 = vmatprep.subr.mxu0 0.0
    %899 = vmatpush1.xpose.msra.mxu0 0.0
    %900 = vmatprep.subr.mxu0 0.0
    %901 = vmatpush1.xpose.msra.mxu0 0.0
    %902 = vmatprep.subr.mxu0 0.0
    %903 = vmatpush1.xpose.msra.mxu0 0.0
    %904 = vmatprep.subr.mxu0 0.0
    %905 = vmatpush1.xpose.msra.mxu0 0.0
    %906 = vmatprep.subr.mxu0 0.0
    %907 = vmatpush1.xpose.msra.mxu0 0.0
    %908 = vmatprep.subr.mxu0 0.0
    %909 = vmatpush1.xpose.msra.mxu0 0.0
    %910 = vmatprep.subr.mxu0 0.0
    %911 = vmatpush1.xpose.msra.mxu0 0.0
    %912 = vmatprep.subr.mxu0 0.0
    %913 = vmatpush1.xpose.msra.mxu0 0.0
    %914 = vmatprep.subr.mxu0 0.0
    %915 = vmatpush1.xpose.msra.mxu0 0.0
    %916 = vmatprep.mubr.f32.mxu0 0.0
    %917 = vmatmul.mubr.f32.gmra.mrb[0].mxu0 %v844
    %v918 = vpop.f32.mrb[0].mxu0
    %v919 = vadd.f32 0.0, %v918
    %v920 = vpop.f32.mrb[0].mxu0
    %921 = vmatprep.mubr.f32.mxu0 0.0
    %922 = vmatmul.mubr.f32.gmra.mrb[0].mxu0 %v847
    %v923 = vpop.f32.mrb[0].mxu0
    %v924 = vadd.f32 0.0, %v923
    %v925 = vpop.f32.mrb[0].mxu0
    %926 = vdwg.mxu0
    %v928 = vsel %vm754, %v837, 0
    %v931 = vsel %vm754, %v838, 0
    %v934 = vsel %vm754, %v278, 0
    %936 = vmatprep.subr.mxu0 0.0
    %937 = vmatpush1.xpose.msra.mxu0 %v934
    %938 = vmatprep.subr.mxu0 0.0
    %939 = vmatpush1.xpose.msra.mxu0 0.0
    %940 = vmatprep.subr.mxu0 0.0
    %941 = vmatpush1.xpose.msra.mxu0 0.0
    %942 = vmatprep.subr.mxu0 0.0
    %943 = vmatpush1.xpose.msra.mxu0 0.0
    %944 = vmatprep.subr.mxu0 0.0
    %945 = vmatpush1.xpose.msra.mxu0 0.0
    %946 = vmatprep.subr.mxu0 0.0
    %947 = vmatpush1.xpose.msra.mxu0 0.0
    %948 = vmatprep.subr.mxu0 0.0
    %949 = vmatpush1.xpose.msra.mxu0 0.0
    %950 = vmatprep.subr.mxu0 0.0
    %951 = vmatpush1.xpose.msra.mxu0 0.0
    %952 = vmatprep.subr.mxu0 0.0
    %953 = vmatpush1.xpose.msra.mxu0 0.0
    %954 = vmatprep.subr.mxu0 0.0
    %955 = vmatpush1.xpose.msra.mxu0 0.0
    %956 = vmatprep.subr.mxu0 0.0
    %957 = vmatpush1.xpose.msra.mxu0 0.0
    %958 = vmatprep.subr.mxu0 0.0
    %959 = vmatpush1.xpose.msra.mxu0 0.0
    %960 = vmatprep.subr.mxu0 0.0
    %961 = vmatpush1.xpose.msra.mxu0 0.0
    %962 = vmatprep.subr.mxu0 0.0
    %963 = vmatpush1.xpose.msra.mxu0 0.0
    %964 = vmatprep.subr.mxu0 0.0
    %965 = vmatpush1.xpose.msra.mxu0 0.0
    %966 = vmatprep.subr.mxu0 0.0
    %967 = vmatpush1.xpose.msra.mxu0 0.0
    %968 = vmatprep.subr.mxu0 0.0
    %969 = vmatpush1.xpose.msra.mxu0 0.0
    %970 = vmatprep.subr.mxu0 0.0
    %971 = vmatpush1.xpose.msra.mxu0 0.0
    %972 = vmatprep.subr.mxu0 0.0
    %973 = vmatpush1.xpose.msra.mxu0 0.0
    %974 = vmatprep.subr.mxu0 0.0
    %975 = vmatpush1.xpose.msra.mxu0 0.0
    %976 = vmatprep.subr.mxu0 0.0
    %977 = vmatpush1.xpose.msra.mxu0 0.0
    %978 = vmatprep.subr.mxu0 0.0
    %979 = vmatpush1.xpose.msra.mxu0 0.0
    %980 = vmatprep.subr.mxu0 0.0
    %981 = vmatpush1.xpose.msra.mxu0 0.0
    %982 = vmatprep.subr.mxu0 0.0
    %983 = vmatpush1.xpose.msra.mxu0 0.0
    %984 = vmatprep.subr.mxu0 0.0
    %985 = vmatpush1.xpose.msra.mxu0 0.0
    %986 = vmatprep.subr.mxu0 0.0
    %987 = vmatpush1.xpose.msra.mxu0 0.0
    %988 = vmatprep.subr.mxu0 0.0
    %989 = vmatpush1.xpose.msra.mxu0 0.0
    %990 = vmatprep.subr.mxu0 0.0
    %991 = vmatpush1.xpose.msra.mxu0 0.0
    %992 = vmatprep.subr.mxu0 0.0
    %993 = vmatpush1.xpose.msra.mxu0 0.0
    %994 = vmatprep.subr.mxu0 0.0
    %995 = vmatpush1.xpose.msra.mxu0 0.0
    %996 = vmatprep.subr.mxu0 0.0
    %997 = vmatpush1.xpose.msra.mxu0 0.0
    %998 = vmatprep.subr.mxu0 0.0
    %999 = vmatpush1.xpose.msra.mxu0 0.0
    %1000 = vmatprep.mubr.f32.mxu0 0.0
    %1001 = vmatmul.mubr.f32.gmra.mrb[0].mxu0 %v928
    %v1002 = vpop.f32.mrb[0].mxu0
    %v1003 = vadd.f32 0.0, %v1002
    %v1004 = vpop.f32.mrb[0].mxu0
    %1005 = vmatprep.mubr.f32.mxu0 0.0
    %1006 = vmatmul.mubr.f32.gmra.mrb[0].mxu0 %v931
    %v1007 = vpop.f32.mrb[0].mxu0
    %v1008 = vadd.f32 0.0, %v1007
    %v1009 = vpop.f32.mrb[0].mxu0
    %1010 = vdwg.mxu0
    %v1012 = vsel %vm754, %v839, 0
    %v1015 = vsel %vm754, %v840, 0
    %v1018 = vsel %vm754, %v279, 0
    %1020 = vmatprep.subr.mxu0 0.0
    %1021 = vmatpush1.xpose.msra.mxu0 %v1018
    %1022 = vmatprep.subr.mxu0 0.0
    %1023 = vmatpush1.xpose.msra.mxu0 0.0
    %1024 = vmatprep.subr.mxu0 0.0
    %1025 = vmatpush1.xpose.msra.mxu0 0.0
    %1026 = vmatprep.subr.mxu0 0.0
    %1027 = vmatpush1.xpose.msra.mxu0 0.0
    %1028 = vmatprep.subr.mxu0 0.0
    %1029 = vmatpush1.xpose.msra.mxu0 0.0
    %1030 = vmatprep.subr.mxu0 0.0
    %1031 = vmatpush1.xpose.msra.mxu0 0.0
    %1032 = vmatprep.subr.mxu0 0.0
    %1033 = vmatpush1.xpose.msra.mxu0 0.0
    %1034 = vmatprep.subr.mxu0 0.0
    %1035 = vmatpush1.xpose.msra.mxu0 0.0
    %1036 = vmatprep.subr.mxu0 0.0
    %1037 = vmatpush1.xpose.msra.mxu0 0.0
    %1038 = vmatprep.subr.mxu0 0.0
    %1039 = vmatpush1.xpose.msra.mxu0 0.0
    %1040 = vmatprep.subr.mxu0 0.0
    %1041 = vmatpush1.xpose.msra.mxu0 0.0
    %1042 = vmatprep.subr.mxu0 0.0
    %1043 = vmatpush1.xpose.msra.mxu0 0.0
    %1044 = vmatprep.subr.mxu0 0.0
    %1045 = vmatpush1.xpose.msra.mxu0 0.0
    %1046 = vmatprep.subr.mxu0 0.0
    %1047 = vmatpush1.xpose.msra.mxu0 0.0
    %1048 = vmatprep.subr.mxu0 0.0
    %1049 = vmatpush1.xpose.msra.mxu0 0.0
    %1050 = vmatprep.subr.mxu0 0.0
    %1051 = vmatpush1.xpose.msra.mxu0 0.0
    %1052 = vmatprep.subr.mxu0 0.0
    %1053 = vmatpush1.xpose.msra.mxu0 0.0
    %1054 = vmatprep.subr.mxu0 0.0
    %1055 = vmatpush1.xpose.msra.mxu0 0.0
    %1056 = vmatprep.subr.mxu0 0.0
    %1057 = vmatpush1.xpose.msra.mxu0 0.0
    %1058 = vmatprep.subr.mxu0 0.0
    %1059 = vmatpush1.xpose.msra.mxu0 0.0
    %1060 = vmatprep.subr.mxu0 0.0
    %1061 = vmatpush1.xpose.msra.mxu0 0.0
    %1062 = vmatprep.subr.mxu0 0.0
    %1063 = vmatpush1.xpose.msra.mxu0 0.0
    %1064 = vmatprep.subr.mxu0 0.0
    %1065 = vmatpush1.xpose.msra.mxu0 0.0
    %1066 = vmatprep.subr.mxu0 0.0
    %1067 = vmatpush1.xpose.msra.mxu0 0.0
    %1068 = vmatprep.subr.mxu0 0.0
    %1069 = vmatpush1.xpose.msra.mxu0 0.0
    %1070 = vmatprep.subr.mxu0 0.0
    %1071 = vmatpush1.xpose.msra.mxu0 0.0
    %1072 = vmatprep.subr.mxu0 0.0
    %1073 = vmatpush1.xpose.msra.mxu0 0.0
    %1074 = vmatprep.subr.mxu0 0.0
    %1075 = vmatpush1.xpose.msra.mxu0 0.0
    %1076 = vmatprep.subr.mxu0 0.0
    %1077 = vmatpush1.xpose.msra.mxu0 0.0
    %1078 = vmatprep.subr.mxu0 0.0
    %1079 = vmatpush1.xpose.msra.mxu0 0.0
    %1080 = vmatprep.subr.mxu0 0.0
    %1081 = vmatpush1.xpose.msra.mxu0 0.0
    %1082 = vmatprep.subr.mxu0 0.0
    %1083 = vmatpush1.xpose.msra.mxu0 0.0
    %1084 = vmatprep.mubr.f32.mxu0 0.0
    %1085 = vmatmul.mubr.f32.gmra.mrb[0].mxu0 %v1012
    %v1086 = vpop.f32.mrb[0].mxu0
    %v1087 = vadd.f32 0.0, %v1086
    %v1088 = vpop.f32.mrb[0].mxu0
    %1089 = vmatprep.mubr.f32.mxu0 0.0
    %1090 = vmatmul.mubr.f32.gmra.mrb[0].mxu0 %v1015
    %v1091 = vpop.f32.mrb[0].mxu0
    %v1092 = vadd.f32 0.0, %v1091
    %v1093 = vpop.f32.mrb[0].mxu0
    %1094 = vdwg.mxu0
    %v1096 = vsel %vm754, %v841, 0
    %v1099 = vsel %vm754, %v842, 0
    %v1102 = vsel %vm754, %v280, 0
    %1104 = vmatprep.subr.mxu0 0.0
    %1105 = vmatpush1.xpose.msra.mxu0 %v1102
    %1106 = vmatprep.subr.mxu0 0.0
    %1107 = vmatpush1.xpose.msra.mxu0 0.0
    %1108 = vmatprep.subr.mxu0 0.0
    %1109 = vmatpush1.xpose.msra.mxu0 0.0
    %1110 = vmatprep.subr.mxu0 0.0
    %1111 = vmatpush1.xpose.msra.mxu0 0.0
    %1112 = vmatprep.subr.mxu0 0.0
    %1113 = vmatpush1.xpose.msra.mxu0 0.0
    %1114 = vmatprep.subr.mxu0 0.0
    %1115 = vmatpush1.xpose.msra.mxu0 0.0
    %1116 = vmatprep.subr.mxu0 0.0
    %1117 = vmatpush1.xpose.msra.mxu0 0.0
    %1118 = vmatprep.subr.mxu0 0.0
    %1119 = vmatpush1.xpose.msra.mxu0 0.0
    %1120 = vmatprep.subr.mxu0 0.0
    %1121 = vmatpush1.xpose.msra.mxu0 0.0
    %1122 = vmatprep.subr.mxu0 0.0
    %1123 = vmatpush1.xpose.msra.mxu0 0.0
    %1124 = vmatprep.subr.mxu0 0.0
    %1125 = vmatpush1.xpose.msra.mxu0 0.0
    %1126 = vmatprep.subr.mxu0 0.0
    %1127 = vmatpush1.xpose.msra.mxu0 0.0
    %1128 = vmatprep.subr.mxu0 0.0
    %1129 = vmatpush1.xpose.msra.mxu0 0.0
    %1130 = vmatprep.subr.mxu0 0.0
    %1131 = vmatpush1.xpose.msra.mxu0 0.0
    %1132 = vmatprep.subr.mxu0 0.0
    %1133 = vmatpush1.xpose.msra.mxu0 0.0
    %1134 = vmatprep.subr.mxu0 0.0
    %1135 = vmatpush1.xpose.msra.mxu0 0.0
    %1136 = vmatprep.subr.mxu0 0.0
    %1137 = vmatpush1.xpose.msra.mxu0 0.0
    %1138 = vmatprep.subr.mxu0 0.0
    %1139 = vmatpush1.xpose.msra.mxu0 0.0
    %1140 = vmatprep.subr.mxu0 0.0
    %1141 = vmatpush1.xpose.msra.mxu0 0.0
    %1142 = vmatprep.subr.mxu0 0.0
    %1143 = vmatpush1.xpose.msra.mxu0 0.0
    %1144 = vmatprep.subr.mxu0 0.0
    %1145 = vmatpush1.xpose.msra.mxu0 0.0
    %1146 = vmatprep.subr.mxu0 0.0
    %1147 = vmatpush1.xpose.msra.mxu0 0.0
    %1148 = vmatprep.subr.mxu0 0.0
    %1149 = vmatpush1.xpose.msra.mxu0 0.0
    %1150 = vmatprep.subr.mxu0 0.0
    %1151 = vmatpush1.xpose.msra.mxu0 0.0
    %1152 = vmatprep.subr.mxu0 0.0
    %1153 = vmatpush1.xpose.msra.mxu0 0.0
    %1154 = vmatprep.subr.mxu0 0.0
    %1155 = vmatpush1.xpose.msra.mxu0 0.0
    %1156 = vmatprep.subr.mxu0 0.0
    %1157 = vmatpush1.xpose.msra.mxu0 0.0
    %1158 = vmatprep.subr.mxu0 0.0
    %1159 = vmatpush1.xpose.msra.mxu0 0.0
    %1160 = vmatprep.subr.mxu0 0.0
    %1161 = vmatpush1.xpose.msra.mxu0 0.0
    %1162 = vmatprep.subr.mxu0 0.0
    %1163 = vmatpush1.xpose.msra.mxu0 0.0
    %1164 = vmatprep.subr.mxu0 0.0
    %1165 = vmatpush1.xpose.msra.mxu0 0.0
    %1166 = vmatprep.subr.mxu0 0.0
    %1167 = vmatpush1.xpose.msra.mxu0 0.0
    %1168 = vmatprep.mubr.f32.mxu0 0.0
    %1169 = vmatmul.mubr.f32.gmra.mrb[0].mxu0 %v1096
    %v1170 = vpop.f32.mrb[0].mxu0
    %v1171 = vadd.f32 0.0, %v1170
    %v1172 = vpop.f32.mrb[0].mxu0
    %1173 = vmatprep.mubr.f32.mxu0 0.0
    %1174 = vmatmul.mubr.f32.gmra.mrb[0].mxu0 %v1099
    %v1175 = vpop.f32.mrb[0].mxu0
    %v1176 = vadd.f32 0.0, %v1175
    %v1177 = vpop.f32.mrb[0].mxu0
    %1178 = vdwg.mxu0
    %v1180 = vsel %vm317, %v919, 0
    %v1183 = vsel %vm317, %v924, 0
    %1185 = vmatprep.subr.mxu0 0.0
    %1186 = vmatpush1.msra.mxu0 %v150
    %1187 = vmatprep.subr.mxu0 0.0
    %1188 = vmatpush1.msra.mxu0 0.0
    %1189 = vmatprep.subr.mxu0 0.0
    %1190 = vmatpush1.msra.mxu0 0.0
    %1191 = vmatprep.subr.mxu0 0.0
    %1192 = vmatpush1.msra.mxu0 0.0
    %1193 = vmatprep.subr.mxu0 0.0
    %1194 = vmatpush1.msra.mxu0 0.0
    %1195 = vmatprep.subr.mxu0 0.0
    %1196 = vmatpush1.msra.mxu0 0.0
    %1197 = vmatprep.subr.mxu0 0.0
    %1198 = vmatpush1.msra.mxu0 0.0
    %1199 = vmatprep.subr.mxu0 0.0
    %1200 = vmatpush1.msra.mxu0 0.0
    %1201 = vmatprep.subr.mxu0 0.0
    %1202 = vmatpush1.msra.mxu0 0.0
    %1203 = vmatprep.subr.mxu0 0.0
    %1204 = vmatpush1.msra.mxu0 0.0
    %1205 = vmatprep.subr.mxu0 0.0
    %1206 = vmatpush1.msra.mxu0 0.0
    %1207 = vmatprep.subr.mxu0 0.0
    %1208 = vmatpush1.msra.mxu0 0.0
    %1209 = vmatprep.subr.mxu0 0.0
    %1210 = vmatpush1.msra.mxu0 0.0
    %1211 = vmatprep.subr.mxu0 0.0
    %1212 = vmatpush1.msra.mxu0 0.0
    %1213 = vmatprep.subr.mxu0 0.0
    %1214 = vmatpush1.msra.mxu0 0.0
    %1215 = vmatprep.subr.mxu0 0.0
    %1216 = vmatpush1.msra.mxu0 0.0
    %1217 = vmatprep.subr.mxu0 0.0
    %1218 = vmatpush1.msra.mxu0 0.0
    %1219 = vmatprep.subr.mxu0 0.0
    %1220 = vmatpush1.msra.mxu0 0.0
    %1221 = vmatprep.subr.mxu0 0.0
    %1222 = vmatpush1.msra.mxu0 0.0
    %1223 = vmatprep.subr.mxu0 0.0
    %1224 = vmatpush1.msra.mxu0 0.0
    %1225 = vmatprep.subr.mxu0 0.0
    %1226 = vmatpush1.msra.mxu0 0.0
    %1227 = vmatprep.subr.mxu0 0.0
    %1228 = vmatpush1.msra.mxu0 0.0
    %1229 = vmatprep.subr.mxu0 0.0
    %1230 = vmatpush1.msra.mxu0 0.0
    %1231 = vmatprep.subr.mxu0 0.0
    %1232 = vmatpush1.msra.mxu0 0.0
    %1233 = vmatprep.subr.mxu0 0.0
    %1234 = vmatpush1.msra.mxu0 0.0
    %1235 = vmatprep.subr.mxu0 0.0
    %1236 = vmatpush1.msra.mxu0 0.0
    %1237 = vmatprep.subr.mxu0 0.0
    %1238 = vmatpush1.msra.mxu0 0.0
    %1239 = vmatprep.subr.mxu0 0.0
    %1240 = vmatpush1.msra.mxu0 0.0
    %1241 = vmatprep.subr.mxu0 0.0
    %1242 = vmatpush1.msra.mxu0 0.0
    %1243 = vmatprep.subr.mxu0 0.0
    %1244 = vmatpush1.msra.mxu0 0.0
    %1245 = vmatprep.subr.mxu0 0.0
    %1246 = vmatpush1.msra.mxu0 0.0
    %1247 = vmatprep.subr.mxu0 0.0
    %1248 = vmatpush1.msra.mxu0 0.0
    %1249 = vmatprep.mubr.f32.mxu0 0.0
    %1250 = vmatmul.mubr.f32.gmra.mrb[0].mxu0 %v1180
    %v1251 = vpop.f32.mrb[0].mxu0
    %v1252 = vadd.f32 0.0, %v1251
    %v1253 = vpop.f32.mrb[0].mxu0
    %1254 = vmatprep.mubr.f32.mxu0 0.0
    %1255 = vmatmul.mubr.f32.gmra.mrb[0].mxu0 %v1183
    %v1256 = vpop.f32.mrb[0].mxu0
    %v1257 = vadd.f32 0.0, %v1256
    %v1258 = vpop.f32.mrb[0].mxu0
    %1259 = vdwg.mxu0
    %v1261 = vsel %vm317, %v1003, 0
    %v1264 = vsel %vm317, %v1008, 0
    %1266 = vmatprep.subr.mxu0 0.0
    %1267 = vmatpush1.msra.mxu0 %v151
    %1268 = vmatprep.subr.mxu0 0.0
    %1269 = vmatpush1.msra.mxu0 0.0
    %1270 = vmatprep.subr.mxu0 0.0
    %1271 = vmatpush1.msra.mxu0 0.0
    %1272 = vmatprep.subr.mxu0 0.0
    %1273 = vmatpush1.msra.mxu0 0.0
    %1274 = vmatprep.subr.mxu0 0.0
    %1275 = vmatpush1.msra.mxu0 0.0
    %1276 = vmatprep.subr.mxu0 0.0
    %1277 = vmatpush1.msra.mxu0 0.0
    %1278 = vmatprep.subr.mxu0 0.0
    %1279 = vmatpush1.msra.mxu0 0.0
    %1280 = vmatprep.subr.mxu0 0.0
    %1281 = vmatpush1.msra.mxu0 0.0
    %1282 = vmatprep.subr.mxu0 0.0
    %1283 = vmatpush1.msra.mxu0 0.0
    %1284 = vmatprep.subr.mxu0 0.0
    %1285 = vmatpush1.msra.mxu0 0.0
    %1286 = vmatprep.subr.mxu0 0.0
    %1287 = vmatpush1.msra.mxu0 0.0
    %1288 = vmatprep.subr.mxu0 0.0
    %1289 = vmatpush1.msra.mxu0 0.0
    %1290 = vmatprep.subr.mxu0 0.0
    %1291 = vmatpush1.msra.mxu0 0.0
    %1292 = vmatprep.subr.mxu0 0.0
    %1293 = vmatpush1.msra.mxu0 0.0
    %1294 = vmatprep.subr.mxu0 0.0
    %1295 = vmatpush1.msra.mxu0 0.0
    %1296 = vmatprep.subr.mxu0 0.0
    %1297 = vmatpush1.msra.mxu0 0.0
    %1298 = vmatprep.subr.mxu0 0.0
    %1299 = vmatpush1.msra.mxu0 0.0
    %1300 = vmatprep.subr.mxu0 0.0
    %1301 = vmatpush1.msra.mxu0 0.0
    %1302 = vmatprep.subr.mxu0 0.0
    %1303 = vmatpush1.msra.mxu0 0.0
    %1304 = vmatprep.subr.mxu0 0.0
    %1305 = vmatpush1.msra.mxu0 0.0
    %1306 = vmatprep.subr.mxu0 0.0
    %1307 = vmatpush1.msra.mxu0 0.0
    %1308 = vmatprep.subr.mxu0 0.0
    %1309 = vmatpush1.msra.mxu0 0.0
    %1310 = vmatprep.subr.mxu0 0.0
    %1311 = vmatpush1.msra.mxu0 0.0
    %1312 = vmatprep.subr.mxu0 0.0
    %1313 = vmatpush1.msra.mxu0 0.0
    %1314 = vmatprep.subr.mxu0 0.0
    %1315 = vmatpush1.msra.mxu0 0.0
    %1316 = vmatprep.subr.mxu0 0.0
    %1317 = vmatpush1.msra.mxu0 0.0
    %1318 = vmatprep.subr.mxu0 0.0
    %1319 = vmatpush1.msra.mxu0 0.0
    %1320 = vmatprep.subr.mxu0 0.0
    %1321 = vmatpush1.msra.mxu0 0.0
    %1322 = vmatprep.subr.mxu0 0.0
    %1323 = vmatpush1.msra.mxu0 0.0
    %1324 = vmatprep.subr.mxu0 0.0
    %1325 = vmatpush1.msra.mxu0 0.0
    %1326 = vmatprep.subr.mxu0 0.0
    %1327 = vmatpush1.msra.mxu0 0.0
    %1328 = vmatprep.subr.mxu0 0.0
    %1329 = vmatpush1.msra.mxu0 0.0
    %1330 = vmatprep.mubr.f32.mxu0 0.0
    %1331 = vmatmul.mubr.f32.gmra.mrb[0].mxu0 %v1261
    %v1332 = vpop.f32.mrb[0].mxu0
    %v1333 = vadd.f32 0.0, %v1332
    %v1334 = vpop.f32.mrb[0].mxu0
    %1335 = vmatprep.mubr.f32.mxu0 0.0
    %1336 = vmatmul.mubr.f32.gmra.mrb[0].mxu0 %v1264
    %v1337 = vpop.f32.mrb[0].mxu0
    %v1338 = vadd.f32 0.0, %v1337
    %v1339 = vpop.f32.mrb[0].mxu0
    %1340 = vdwg.mxu0
    %v1342 = vsel %vm317, %v1087, 0
    %v1345 = vsel %vm317, %v1092, 0
    %1347 = vmatprep.subr.mxu0 0.0
    %1348 = vmatpush1.msra.mxu0 %v152
    %1349 = vmatprep.subr.mxu0 0.0
    %1350 = vmatpush1.msra.mxu0 0.0
    %1351 = vmatprep.subr.mxu0 0.0
    %1352 = vmatpush1.msra.mxu0 0.0
    %1353 = vmatprep.subr.mxu0 0.0
    %1354 = vmatpush1.msra.mxu0 0.0
    %1355 = vmatprep.subr.mxu0 0.0
    %1356 = vmatpush1.msra.mxu0 0.0
    %1357 = vmatprep.subr.mxu0 0.0
    %1358 = vmatpush1.msra.mxu0 0.0
    %1359 = vmatprep.subr.mxu0 0.0
    %1360 = vmatpush1.msra.mxu0 0.0
    %1361 = vmatprep.subr.mxu0 0.0
    %1362 = vmatpush1.msra.mxu0 0.0
    %1363 = vmatprep.subr.mxu0 0.0
    %1364 = vmatpush1.msra.mxu0 0.0
    %1365 = vmatprep.subr.mxu0 0.0
    %1366 = vmatpush1.msra.mxu0 0.0
    %1367 = vmatprep.subr.mxu0 0.0
    %1368 = vmatpush1.msra.mxu0 0.0
    %1369 = vmatprep.subr.mxu0 0.0
    %1370 = vmatpush1.msra.mxu0 0.0
    %1371 = vmatprep.subr.mxu0 0.0
    %1372 = vmatpush1.msra.mxu0 0.0
    %1373 = vmatprep.subr.mxu0 0.0
    %1374 = vmatpush1.msra.mxu0 0.0
    %1375 = vmatprep.subr.mxu0 0.0
    %1376 = vmatpush1.msra.mxu0 0.0
    %1377 = vmatprep.subr.mxu0 0.0
    %1378 = vmatpush1.msra.mxu0 0.0
    %1379 = vmatprep.subr.mxu0 0.0
    %1380 = vmatpush1.msra.mxu0 0.0
    %1381 = vmatprep.subr.mxu0 0.0
    %1382 = vmatpush1.msra.mxu0 0.0
    %1383 = vmatprep.subr.mxu0 0.0
    %1384 = vmatpush1.msra.mxu0 0.0
    %1385 = vmatprep.subr.mxu0 0.0
    %1386 = vmatpush1.msra.mxu0 0.0
    %1387 = vmatprep.subr.mxu0 0.0
    %1388 = vmatpush1.msra.mxu0 0.0
    %1389 = vmatprep.subr.mxu0 0.0
    %1390 = vmatpush1.msra.mxu0 0.0
    %1391 = vmatprep.subr.mxu0 0.0
    %1392 = vmatpush1.msra.mxu0 0.0
    %1393 = vmatprep.subr.mxu0 0.0
    %1394 = vmatpush1.msra.mxu0 0.0
    %1395 = vmatprep.subr.mxu0 0.0
    %1396 = vmatpush1.msra.mxu0 0.0
    %1397 = vmatprep.subr.mxu0 0.0
    %1398 = vmatpush1.msra.mxu0 0.0
    %1399 = vmatprep.subr.mxu0 0.0
    %1400 = vmatpush1.msra.mxu0 0.0
    %1401 = vmatprep.subr.mxu0 0.0
    %1402 = vmatpush1.msra.mxu0 0.0
    %1403 = vmatprep.subr.mxu0 0.0
    %1404 = vmatpush1.msra.mxu0 0.0
    %1405 = vmatprep.subr.mxu0 0.0
    %1406 = vmatpush1.msra.mxu0 0.0
    %1407 = vmatprep.subr.mxu0 0.0
    %1408 = vmatpush1.msra.mxu0 0.0
    %1409 = vmatprep.subr.mxu0 0.0
    %1410 = vmatpush1.msra.mxu0 0.0
    %1411 = vmatprep.mubr.f32.mxu0 0.0
    %1412 = vmatmul.mubr.f32.gmra.mrb[0].mxu0 %v1342
    %v1413 = vpop.f32.mrb[0].mxu0
    %v1414 = vadd.f32 0.0, %v1413
    %v1415 = vpop.f32.mrb[0].mxu0
    %1416 = vmatprep.mubr.f32.mxu0 0.0
    %1417 = vmatmul.mubr.f32.gmra.mrb[0].mxu0 %v1345
    %v1418 = vpop.f32.mrb[0].mxu0
    %v1419 = vadd.f32 0.0, %v1418
    %v1420 = vpop.f32.mrb[0].mxu0
    %1421 = vdwg.mxu0
    %v1423 = vsel %vm317, %v1171, 0
    %v1426 = vsel %vm317, %v1176, 0
    %1428 = vmatprep.subr.mxu0 0.0
    %1429 = vmatpush1.msra.mxu0 %v153
    %1430 = vmatprep.subr.mxu0 0.0
    %1431 = vmatpush1.msra.mxu0 0.0
    %1432 = vmatprep.subr.mxu0 0.0
    %1433 = vmatpush1.msra.mxu0 0.0
    %1434 = vmatprep.subr.mxu0 0.0
    %1435 = vmatpush1.msra.mxu0 0.0
    %1436 = vmatprep.subr.mxu0 0.0
    %1437 = vmatpush1.msra.mxu0 0.0
    %1438 = vmatprep.subr.mxu0 0.0
    %1439 = vmatpush1.msra.mxu0 0.0
    %1440 = vmatprep.subr.mxu0 0.0
    %1441 = vmatpush1.msra.mxu0 0.0
    %1442 = vmatprep.subr.mxu0 0.0
    %1443 = vmatpush1.msra.mxu0 0.0
    %1444 = vmatprep.subr.mxu0 0.0
    %1445 = vmatpush1.msra.mxu0 0.0
    %1446 = vmatprep.subr.mxu0 0.0
    %1447 = vmatpush1.msra.mxu0 0.0
    %1448 = vmatprep.subr.mxu0 0.0
    %1449 = vmatpush1.msra.mxu0 0.0
    %1450 = vmatprep.subr.mxu0 0.0
    %1451 = vmatpush1.msra.mxu0 0.0
    %1452 = vmatprep.subr.mxu0 0.0
    %1453 = vmatpush1.msra.mxu0 0.0
    %1454 = vmatprep.subr.mxu0 0.0
    %1455 = vmatpush1.msra.mxu0 0.0
    %1456 = vmatprep.subr.mxu0 0.0
    %1457 = vmatpush1.msra.mxu0 0.0
    %1458 = vmatprep.subr.mxu0 0.0
    %1459 = vmatpush1.msra.mxu0 0.0
    %1460 = vmatprep.subr.mxu0 0.0
    %1461 = vmatpush1.msra.mxu0 0.0
    %1462 = vmatprep.subr.mxu0 0.0
    %1463 = vmatpush1.msra.mxu0 0.0
    %1464 = vmatprep.subr.mxu0 0.0
    %1465 = vmatpush1.msra.mxu0 0.0
    %1466 = vmatprep.subr.mxu0 0.0
    %1467 = vmatpush1.msra.mxu0 0.0
    %1468 = vmatprep.subr.mxu0 0.0
    %1469 = vmatpush1.msra.mxu0 0.0
    %1470 = vmatprep.subr.mxu0 0.0
    %1471 = vmatpush1.msra.mxu0 0.0
    %1472 = vmatprep.subr.mxu0 0.0
    %1473 = vmatpush1.msra.mxu0 0.0
    %1474 = vmatprep.subr.mxu0 0.0
    %1475 = vmatpush1.msra.mxu0 0.0
    %1476 = vmatprep.subr.mxu0 0.0
    %1477 = vmatpush1.msra.mxu0 0.0
    %1478 = vmatprep.subr.mxu0 0.0
    %1479 = vmatpush1.msra.mxu0 0.0
    %1480 = vmatprep.subr.mxu0 0.0
    %1481 = vmatpush1.msra.mxu0 0.0
    %1482 = vmatprep.subr.mxu0 0.0
    %1483 = vmatpush1.msra.mxu0 0.0
    %1484 = vmatprep.subr.mxu0 0.0
    %1485 = vmatpush1.msra.mxu0 0.0
    %1486 = vmatprep.subr.mxu0 0.0
    %1487 = vmatpush1.msra.mxu0 0.0
    %1488 = vmatprep.subr.mxu0 0.0
    %1489 = vmatpush1.msra.mxu0 0.0
    %1490 = vmatprep.subr.mxu0 0.0
    %1491 = vmatpush1.msra.mxu0 0.0
    %1492 = vmatprep.mubr.f32.mxu0 0.0
    %1493 = vmatmul.mubr.f32.gmra.mrb[0].mxu0 %v1423
    %v1494 = vpop.f32.mrb[0].mxu0
    %v1495 = vadd.f32 0.0, %v1494
    %v1496 = vpop.f32.mrb[0].mxu0
    %1497 = vmatprep.mubr.f32.mxu0 0.0
    %1498 = vmatmul.mubr.f32.gmra.mrb[0].mxu0 %v1426
    %v1499 = vpop.f32.mrb[0].mxu0
    %v1500 = vadd.f32 0.0, %v1499
    %v1501 = vpop.f32.mrb[0].mxu0
    %1502 = vdwg.mxu0
    %v1503 = vsel %vm171, %v1252, 0.0
    %v1504 = vsel %vm171, %v1333, 0.0
    %v1505 = vadd.f32 %v1503, %v1504
    %v1506 = vsel %vm171, %v1414, 0.0
    %v1507 = vadd.f32 %v1505, %v1506
    %v1508 = vsel %vm171, %v1495, 0.0
    %v1509 = vadd.f32 %v1507, %v1508
    %v1510 = vsel %vm171, %v1257, 0.0
    %v1511 = vsel %vm171, %v1338, 0.0
    %v1512 = vadd.f32 %v1510, %v1511
    %v1513 = vsel %vm171, %v1419, 0.0
    %v1514 = vadd.f32 %v1512, %v1513
    %v1515 = vsel %vm171, %v1500, 0.0
    %v1516 = vadd.f32 %v1514, %v1515
    %v1517 = vlaneseq
    %v1518 = vshrl.u32 %v1517, 7
    %v1519 = vsub.s32 1, %v1518
    %v1520 = vrot.slane %v166, %v1519
    %v1521 = vadd.f32 %v1509, %v1520
    %v1522 = vadd.f32 %v1516, %v1520
    %v1523 = vadd.f32 %v142, %v1521
    %v1524 = vadd.f32 %v143, %v1522
    %v1525 = vsel %vm171, %v1523, 0.0
    %1526 = vadd.xlane.f32.xlu0 %v1525
    %v1527 = vpop.xlane.xlu0 %1526
    %v1528 = vsel %vm171, %v1524, 0.0
    %1529 = vadd.xlane.f32.xlu0 %v1528
    %v1530 = vpop.xlane.xlu0 %1529
    %v1531 = vrcp.pop 32.0
    %v1532 = vmul.f32 %v1527, %v1531
    %v1533 = vmul.f32 %v1530, %v1531
    %v1534 = vsub.f32 %v1523, %v1532
    %v1535 = vsub.f32 %v1524, %v1533
    %v1536 = vmul.f32 %v1534, %v1534
    %v1537 = vmul.f32 %v1535, %v1535
    %v1538 = vsel %vm171, %v1536, 0.0
    %1539 = vadd.xlane.f32.xlu0 %v1538
    %v1540 = vpop.xlane.xlu0 %1539
    %v1541 = vsel %vm171, %v1537, 0.0
    %1542 = vadd.xlane.f32.xlu0 %v1541
    %v1543 = vpop.xlane.xlu0 %1542
    %v1544 = vmul.f32 %v1540, %v1531
    %v1545 = vmul.f32 %v1543, %v1531
    %v1546 = vadd.f32 %v1544, 1e-06
    %v1547 = vadd.f32 %v1545, 1e-06
    %v1548 = vrsqrt.pop %v1546
    %v1549 = vrsqrt.pop %v1547
    %v1550 = vmul.f32 %v1534, %v1548
    %v1551 = vmul.f32 %v1535, %v1549
    %v1552 = vlaneseq
    %v1553 = vshrl.u32 %v1552, 7
    %v1554 = vsub.s32 4, %v1553
    %v1555 = vrot.slane %v166, %v1554
    %v1556 = vmul.f32 %v1550, %v1555
    %v1557 = vmul.f32 %v1551, %v1555
    %v1558 = vlaneseq
    %v1559 = vshrl.u32 %v1558, 7
    %v1560 = vsub.s32 5, %v1559
    %v1561 = vrot.slane %v166, %v1560
    %v1562 = vadd.f32 %v1556, %v1561
    %v1563 = vadd.f32 %v1557, %v1561
    %v1564 = vlaneseq
    %v1565 = vshrl.u32 %v1564, 7
    %v1566 = vsub.s32 2, %v1565
    %v1567 = vrot.slane %v166, %v1566
    %v1569 = vsel %vm171, %v1562, 0
    %v1572 = vsel %vm171, %v1563, 0
    %1574 = vmatprep.subr.mxu0 0.0
    %1575 = vmatpush1.msra.mxu0 %v154
    %1576 = vmatprep.subr.mxu0 0.0
    %1577 = vmatpush1.msra.mxu0 %v155
    %1578 = vmatprep.subr.mxu0 0.0
    %1579 = vmatpush1.msra.mxu0 %v156
    %1580 = vmatprep.subr.mxu0 0.0
    %1581 = vmatpush1.msra.mxu0 %v157
    %1582 = vmatprep.subr.mxu0 0.0
    %1583 = vmatpush1.msra.mxu0 0.0
    %1584 = vmatprep.subr.mxu0 0.0
    %1585 = vmatpush1.msra.mxu0 0.0
    %1586 = vmatprep.subr.mxu0 0.0
    %1587 = vmatpush1.msra.mxu0 0.0
    %1588 = vmatprep.subr.mxu0 0.0
    %1589 = vmatpush1.msra.mxu0 0.0
    %1590 = vmatprep.subr.mxu0 0.0
    %1591 = vmatpush1.msra.mxu0 0.0
    %1592 = vmatprep.subr.mxu0 0.0
    %1593 = vmatpush1.msra.mxu0 0.0
    %1594 = vmatprep.subr.mxu0 0.0
    %1595 = vmatpush1.msra.mxu0 0.0
    %1596 = vmatprep.subr.mxu0 0.0
    %1597 = vmatpush1.msra.mxu0 0.0
    %1598 = vmatprep.subr.mxu0 0.0
    %1599 = vmatpush1.msra.mxu0 0.0
    %1600 = vmatprep.subr.mxu0 0.0
    %1601 = vmatpush1.msra.mxu0 0.0
    %1602 = vmatprep.subr.mxu0 0.0
    %1603 = vmatpush1.msra.mxu0 0.0
    %1604 = vmatprep.subr.mxu0 0.0
    %1605 = vmatpush1.msra.mxu0 0.0
    %1606 = vmatprep.subr.mxu0 0.0
    %1607 = vmatpush1.msra.mxu0 0.0
    %1608 = vmatprep.subr.mxu0 0.0
    %1609 = vmatpush1.msra.mxu0 0.0
    %1610 = vmatprep.subr.mxu0 0.0
    %1611 = vmatpush1.msra.mxu0 0.0
    %1612 = vmatprep.subr.mxu0 0.0
    %1613 = vmatpush1.msra.mxu0 0.0
    %1614 = vmatprep.subr.mxu0 0.0
    %1615 = vmatpush1.msra.mxu0 0.0
    %1616 = vmatprep.subr.mxu0 0.0
    %1617 = vmatpush1.msra.mxu0 0.0
    %1618 = vmatprep.subr.mxu0 0.0
    %1619 = vmatpush1.msra.mxu0 0.0
    %1620 = vmatprep.subr.mxu0 0.0
    %1621 = vmatpush1.msra.mxu0 0.0
    %1622 = vmatprep.subr.mxu0 0.0
    %1623 = vmatpush1.msra.mxu0 0.0
    %1624 = vmatprep.subr.mxu0 0.0
    %1625 = vmatpush1.msra.mxu0 0.0
    %1626 = vmatprep.subr.mxu0 0.0
    %1627 = vmatpush1.msra.mxu0 0.0
    %1628 = vmatprep.subr.mxu0 0.0
    %1629 = vmatpush1.msra.mxu0 0.0
    %1630 = vmatprep.subr.mxu0 0.0
    %1631 = vmatpush1.msra.mxu0 0.0
    %1632 = vmatprep.subr.mxu0 0.0
    %1633 = vmatpush1.msra.mxu0 0.0
    %1634 = vmatprep.subr.mxu0 0.0
    %1635 = vmatpush1.msra.mxu0 0.0
    %1636 = vmatprep.subr.mxu0 0.0
    %1637 = vmatpush1.msra.mxu0 0.0
    %1638 = vmatprep.mubr.f32.mxu0 0.0
    %1639 = vmatmul.mubr.f32.gmra.mrb[0].mxu0 %v1569
    %v1640 = vpop.f32.mrb[0].mxu0
    %v1641 = vadd.f32 %v1567, %v1640
    %v1642 = vpop.f32.mrb[0].mxu0
    %1643 = vmatprep.mubr.f32.mxu0 0.0
    %1644 = vmatmul.mubr.f32.gmra.mrb[0].mxu0 %v1572
    %v1645 = vpop.f32.mrb[0].mxu0
    %v1646 = vadd.f32 %v1567, %v1645
    %v1647 = vpop.f32.mrb[0].mxu0
    %1648 = vdwg.mxu0
    %v1649 = vmax.f32 %v1641, 0.0
    %v1650 = vmax.f32 %v1646, 0.0
    %v1651 = vlaneseq
    %v1652 = vshrl.u32 %v1651, 7
    %v1653 = vsub.s32 3, %v1652
    %v1654 = vrot.slane %v166, %v1653
    %v1656 = vsel %vm57, %v1649, 0
    %v1659 = vsel %vm57, %v1650, 0
    %1661 = vmatprep.subr.mxu0 0.0
    %1662 = vmatpush1.msra.mxu0 %v158
    %1663 = vmatprep.subr.mxu0 0.0
    %1664 = vmatpush1.msra.mxu0 %v159
    %1665 = vmatprep.subr.mxu0 0.0
    %1666 = vmatpush1.msra.mxu0 %v160
    %1667 = vmatprep.subr.mxu0 0.0
    %1668 = vmatpush1.msra.mxu0 %v161
    %1669 = vmatprep.subr.mxu0 0.0
    %1670 = vmatpush1.msra.mxu0 %v162
    %1671 = vmatprep.subr.mxu0 0.0
    %1672 = vmatpush1.msra.mxu0 %v163
    %1673 = vmatprep.subr.mxu0 0.0
    %1674 = vmatpush1.msra.mxu0 %v164
    %1675 = vmatprep.subr.mxu0 0.0
    %1676 = vmatpush1.msra.mxu0 %v165
    %1677 = vmatprep.subr.mxu0 0.0
    %1678 = vmatpush1.msra.mxu0 0.0
    %1679 = vmatprep.subr.mxu0 0.0
    %1680 = vmatpush1.msra.mxu0 0.0
    %1681 = vmatprep.subr.mxu0 0.0
    %1682 = vmatpush1.msra.mxu0 0.0
    %1683 = vmatprep.subr.mxu0 0.0
    %1684 = vmatpush1.msra.mxu0 0.0
    %1685 = vmatprep.subr.mxu0 0.0
    %1686 = vmatpush1.msra.mxu0 0.0
    %1687 = vmatprep.subr.mxu0 0.0
    %1688 = vmatpush1.msra.mxu0 0.0
    %1689 = vmatprep.subr.mxu0 0.0
    %1690 = vmatpush1.msra.mxu0 0.0
    %1691 = vmatprep.subr.mxu0 0.0
    %1692 = vmatpush1.msra.mxu0 0.0
    %1693 = vmatprep.subr.mxu0 0.0
    %1694 = vmatpush1.msra.mxu0 0.0
    %1695 = vmatprep.subr.mxu0 0.0
    %1696 = vmatpush1.msra.mxu0 0.0
    %1697 = vmatprep.subr.mxu0 0.0
    %1698 = vmatpush1.msra.mxu0 0.0
    %1699 = vmatprep.subr.mxu0 0.0
    %1700 = vmatpush1.msra.mxu0 0.0
    %1701 = vmatprep.subr.mxu0 0.0
    %1702 = vmatpush1.msra.mxu0 0.0
    %1703 = vmatprep.subr.mxu0 0.0
    %1704 = vmatpush1.msra.mxu0 0.0
    %1705 = vmatprep.subr.mxu0 0.0
    %1706 = vmatpush1.msra.mxu0 0.0
    %1707 = vmatprep.subr.mxu0 0.0
    %1708 = vmatpush1.msra.mxu0 0.0
    %1709 = vmatprep.subr.mxu0 0.0
    %1710 = vmatpush1.msra.mxu0 0.0
    %1711 = vmatprep.subr.mxu0 0.0
    %1712 = vmatpush1.msra.mxu0 0.0
    %1713 = vmatprep.subr.mxu0 0.0
    %1714 = vmatpush1.msra.mxu0 0.0
    %1715 = vmatprep.subr.mxu0 0.0
    %1716 = vmatpush1.msra.mxu0 0.0
    %1717 = vmatprep.subr.mxu0 0.0
    %1718 = vmatpush1.msra.mxu0 0.0
    %1719 = vmatprep.subr.mxu0 0.0
    %1720 = vmatpush1.msra.mxu0 0.0
    %1721 = vmatprep.subr.mxu0 0.0
    %1722 = vmatpush1.msra.mxu0 0.0
    %1723 = vmatprep.subr.mxu0 0.0
    %1724 = vmatpush1.msra.mxu0 0.0
    %1725 = vmatprep.mubr.f32.mxu0 0.0
    %1726 = vmatmul.mubr.f32.gmra.mrb[0].mxu0 %v1656
    %v1727 = vpop.f32.mrb[0].mxu0
    %v1728 = vadd.f32 %v1654, %v1727
    %v1729 = vpop.f32.mrb[0].mxu0
    %1730 = vmatprep.mubr.f32.mxu0 0.0
    %1731 = vmatmul.mubr.f32.gmra.mrb[0].mxu0 %v1659
    %v1732 = vpop.f32.mrb[0].mxu0
    %v1733 = vadd.f32 %v1654, %v1732
    %v1734 = vpop.f32.mrb[0].mxu0
    %1735 = vdwg.mxu0
    %v1736 = vadd.f32 %v1562, %v1728
    %v1737 = vadd.f32 %v1563, %v1733
    %v1738 = vsel %vm171, %v1736, 0.0
    %1739 = vadd.xlane.f32.xlu0 %v1738
    %v1740 = vpop.xlane.xlu0 %1739
    %v1741 = vsel %vm171, %v1737, 0.0
    %1742 = vadd.xlane.f32.xlu0 %v1741
    %v1743 = vpop.xlane.xlu0 %1742
    %v1744 = vmul.f32 %v1740, %v1531
    %v1745 = vmul.f32 %v1743, %v1531
    %v1746 = vsub.f32 %v1736, %v1744
    %v1747 = vsub.f32 %v1737, %v1745
    %v1748 = vmul.f32 %v1746, %v1746
    %v1749 = vmul.f32 %v1747, %v1747
    %v1750 = vsel %vm171, %v1748, 0.0
    %1751 = vadd.xlane.f32.xlu0 %v1750
    %v1752 = vpop.xlane.xlu0 %1751
    %v1753 = vsel %vm171, %v1749, 0.0
    %1754 = vadd.xlane.f32.xlu0 %v1753
    %v1755 = vpop.xlane.xlu0 %1754
    %v1756 = vmul.f32 %v1752, %v1531
    %v1757 = vmul.f32 %v1755, %v1531
    %v1758 = vadd.f32 %v1756, 1e-06
    %v1759 = vadd.f32 %v1757, 1e-06
    %v1760 = vrsqrt.pop %v1758
    %v1761 = vrsqrt.pop %v1759
    %v1762 = vmul.f32 %v1746, %v1760
    %v1763 = vmul.f32 %v1747, %v1761
    %v1764 = vlaneseq
    %v1765 = vshrl.u32 %v1764, 7
    %v1766 = vsub.s32 6, %v1765
    %v1767 = vrot.slane %v166, %v1766
    %v1768 = vmul.f32 %v1762, %v1767
    %v1769 = vmul.f32 %v1763, %v1767
    %v1770 = vlaneseq
    %v1771 = vshrl.u32 %v1770, 7
    %v1772 = vsub.s32 7, %v1771
    %v1773 = vrot.slane %v166, %v1772
    %v1774 = vadd.f32 %v1768, %v1773
    %v1775 = vadd.f32 %v1769, %v1773
    %s1776 = scalar_lea.vmem %s4, 32
    %v1777 = vld [vmem:[%s1776] sm:$0xff]
    %v1778 = vld [vmem:[%s1776 + $0x8] sm:$0xff]
    %v1779 = vld [vmem:[%s1776 + $0x10] sm:$0xff]
    %v1780 = vld [vmem:[%s1776 + $0x18] sm:$0xff]
    %s1781 = scalar_lea.vmem %s5, 32
    %v1782 = vld [vmem:[%s1781] sm:$0xff]
    %v1783 = vld [vmem:[%s1781 + $0x8] sm:$0xff]
    %v1784 = vld [vmem:[%s1781 + $0x10] sm:$0xff]
    %v1785 = vld [vmem:[%s1781 + $0x18] sm:$0xff]
    %s1786 = scalar_lea.vmem %s6, 32
    %v1787 = vld [vmem:[%s1786] sm:$0xff]
    %v1788 = vld [vmem:[%s1786 + $0x8] sm:$0xff]
    %v1789 = vld [vmem:[%s1786 + $0x10] sm:$0xff]
    %v1790 = vld [vmem:[%s1786 + $0x18] sm:$0xff]
    %s1791 = scalar_lea.vmem %s7, 64
    %v1792 = vld [vmem:[%s1791] sm:$0xff]
    %v1793 = vld [vmem:[%s1791 + $0x8] sm:$0xff]
    %v1794 = vld [vmem:[%s1791 + $0x10] sm:$0xff]
    %v1795 = vld [vmem:[%s1791 + $0x18] sm:$0xff]
    %v1796 = vld [vmem:[%s1791 + $0x20] sm:$0xff]
    %v1797 = vld [vmem:[%s1791 + $0x28] sm:$0xff]
    %v1798 = vld [vmem:[%s1791 + $0x30] sm:$0xff]
    %v1799 = vld [vmem:[%s1791 + $0x38] sm:$0xff]
    %s1800 = scalar_lea.vmem %s8, 8
    %v1801 = vld [vmem:[%s1800] sm:$0xff]
    %v1802 = vlaneseq
    %v1803 = vshrl.u32 %v1802, 7
    %v1804 = vsub.s32 0, %v1803
    %v1805 = vrot.slane %v1801, %v1804
    %v1807 = vsel %vm171, %v1774, 0
    %v1810 = vsel %vm171, %v1775, 0
    %1812 = vmatprep.subr.mxu0 0.0
    %1813 = vmatpush1.msra.mxu0 %v1777
    %1814 = vmatprep.subr.mxu0 0.0
    %1815 = vmatpush1.msra.mxu0 %v1778
    %1816 = vmatprep.subr.mxu0 0.0
    %1817 = vmatpush1.msra.mxu0 %v1779
    %1818 = vmatprep.subr.mxu0 0.0
    %1819 = vmatpush1.msra.mxu0 %v1780
    %1820 = vmatprep.subr.mxu0 0.0
    %1821 = vmatpush1.msra.mxu0 0.0
    %1822 = vmatprep.subr.mxu0 0.0
    %1823 = vmatpush1.msra.mxu0 0.0
    %1824 = vmatprep.subr.mxu0 0.0
    %1825 = vmatpush1.msra.mxu0 0.0
    %1826 = vmatprep.subr.mxu0 0.0
    %1827 = vmatpush1.msra.mxu0 0.0
    %1828 = vmatprep.subr.mxu0 0.0
    %1829 = vmatpush1.msra.mxu0 0.0
    %1830 = vmatprep.subr.mxu0 0.0
    %1831 = vmatpush1.msra.mxu0 0.0
    %1832 = vmatprep.subr.mxu0 0.0
    %1833 = vmatpush1.msra.mxu0 0.0
    %1834 = vmatprep.subr.mxu0 0.0
    %1835 = vmatpush1.msra.mxu0 0.0
    %1836 = vmatprep.subr.mxu0 0.0
    %1837 = vmatpush1.msra.mxu0 0.0
    %1838 = vmatprep.subr.mxu0 0.0
    %1839 = vmatpush1.msra.mxu0 0.0
    %1840 = vmatprep.subr.mxu0 0.0
    %1841 = vmatpush1.msra.mxu0 0.0
    %1842 = vmatprep.subr.mxu0 0.0
    %1843 = vmatpush1.msra.mxu0 0.0
    %1844 = vmatprep.subr.mxu0 0.0
    %1845 = vmatpush1.msra.mxu0 0.0
    %1846 = vmatprep.subr.mxu0 0.0
    %1847 = vmatpush1.msra.mxu0 0.0
    %1848 = vmatprep.subr.mxu0 0.0
    %1849 = vmatpush1.msra.mxu0 0.0
    %1850 = vmatprep.subr.mxu0 0.0
    %1851 = vmatpush1.msra.mxu0 0.0
    %1852 = vmatprep.subr.mxu0 0.0
    %1853 = vmatpush1.msra.mxu0 0.0
    %1854 = vmatprep.subr.mxu0 0.0
    %1855 = vmatpush1.msra.mxu0 0.0
    %1856 = vmatprep.subr.mxu0 0.0
    %1857 = vmatpush1.msra.mxu0 0.0
    %1858 = vmatprep.subr.mxu0 0.0
    %1859 = vmatpush1.msra.mxu0 0.0
    %1860 = vmatprep.subr.mxu0 0.0
    %1861 = vmatpush1.msra.mxu0 0.0
    %1862 = vmatprep.subr.mxu0 0.0
    %1863 = vmatpush1.msra.mxu0 0.0
    %1864 = vmatprep.subr.mxu0 0.0
    %1865 = vmatpush1.msra.mxu0 0.0
    %1866 = vmatprep.subr.mxu0 0.0
    %1867 = vmatpush1.msra.mxu0 0.0
    %1868 = vmatprep.subr.mxu0 0.0
    %1869 = vmatpush1.msra.mxu0 0.0
    %1870 = vmatprep.subr.mxu0 0.0
    %1871 = vmatpush1.msra.mxu0 0.0
    %1872 = vmatprep.subr.mxu0 0.0
    %1873 = vmatpush1.msra.mxu0 0.0
    %1874 = vmatprep.subr.mxu0 0.0
    %1875 = vmatpush1.msra.mxu0 0.0
    %1876 = vmatprep.mubr.f32.mxu0 0.0
    %1877 = vmatmul.mubr.f32.gmra.mrb[0].mxu0 %v1807
    %v1878 = vpop.f32.mrb[0].mxu0
    %v1879 = vadd.f32 %v1805, %v1878
    %v1880 = vpop.f32.mrb[0].mxu0
    %1881 = vmatprep.mubr.f32.mxu0 0.0
    %1882 = vmatmul.mubr.f32.gmra.mrb[0].mxu0 %v1810
    %v1883 = vpop.f32.mrb[0].mxu0
    %v1884 = vadd.f32 %v1805, %v1883
    %v1885 = vpop.f32.mrb[0].mxu0
    %1886 = vdwg.mxu0
    %1887 = vxpose.xlu0.b32.start [1/16] %v1879, 128
    %1888 = vxpose.xlu0.b32.cont [2/16] %v1884, 128
    %1889 = vxpose.xlu0.b32.cont [3/16] 0.0, 128
    %1890 = vxpose.xlu0.b32.cont [4/16] 0.0, 128
    %1891 = vxpose.xlu0.b32.cont [5/16] 0.0, 128
    %1892 = vxpose.xlu0.b32.cont [6/16] 0.0, 128
    %1893 = vxpose.xlu0.b32.cont [7/16] 0.0, 128
    %1894 = vxpose.xlu0.b32.cont [8/16] 0.0, 128
    %1895 = vxpose.xlu0.b32.cont [9/16] 0.0, 128
    %1896 = vxpose.xlu0.b32.cont [10/16] 0.0, 128
    %1897 = vxpose.xlu0.b32.cont [11/16] 0.0, 128
    %1898 = vxpose.xlu0.b32.cont [12/16] 0.0, 128
    %1899 = vxpose.xlu0.b32.cont [13/16] 0.0, 128
    %1900 = vxpose.xlu0.b32.cont [14/16] 0.0, 128
    %1901 = vxpose.xlu0.b32.cont [15/16] 0.0, 128
    %1902 = vxpose.xlu0.b32.end [16/16] 0.0, 128
    %v1903 = vpop.trf.xlu0
    %v1904 = vpop.trf.xlu0
    %v1905 = vpop.trf.xlu0
    %v1906 = vpop.trf.xlu0
    %v1907 = vpop.trf.xlu0
    %v1908 = vpop.trf.xlu0
    %v1909 = vpop.trf.xlu0
    %v1910 = vpop.trf.xlu0
    %v1911 = vpop.trf.xlu0
    %v1912 = vpop.trf.xlu0
    %v1913 = vpop.trf.xlu0
    %v1914 = vpop.trf.xlu0
    %v1915 = vpop.trf.xlu0
    %v1916 = vpop.trf.xlu0
    %v1917 = vpop.trf.xlu0
    %v1918 = vpop.trf.xlu0
    %1919 = vxpose.xlu0.b32.start [1/16] %v1903, 128
    %1920 = vxpose.xlu0.b32.cont [2/16] 0.0, 128
    %1921 = vxpose.xlu0.b32.cont [3/16] 0.0, 128
    %1922 = vxpose.xlu0.b32.cont [4/16] 0.0, 128
    %1923 = vxpose.xlu0.b32.cont [5/16] 0.0, 128
    %1924 = vxpose.xlu0.b32.cont [6/16] 0.0, 128
    %1925 = vxpose.xlu0.b32.cont [7/16] 0.0, 128
    %1926 = vxpose.xlu0.b32.cont [8/16] 0.0, 128
    %1927 = vxpose.xlu0.b32.cont [9/16] 0.0, 128
    %1928 = vxpose.xlu0.b32.cont [10/16] 0.0, 128
    %1929 = vxpose.xlu0.b32.cont [11/16] 0.0, 128
    %1930 = vxpose.xlu0.b32.cont [12/16] 0.0, 128
    %1931 = vxpose.xlu0.b32.cont [13/16] 0.0, 128
    %1932 = vxpose.xlu0.b32.cont [14/16] 0.0, 128
    %1933 = vxpose.xlu0.b32.cont [15/16] 0.0, 128
    %1934 = vxpose.xlu0.b32.end [16/16] 0.0, 128
    %v1935 = vpop.trf.xlu0
    %v1936 = vpop.trf.xlu0
    %v1937 = vpop.trf.xlu0
    %v1938 = vpop.trf.xlu0
    %v1939 = vpop.trf.xlu0
    %v1940 = vpop.trf.xlu0
    %v1941 = vpop.trf.xlu0
    %v1942 = vpop.trf.xlu0
    %v1943 = vpop.trf.xlu0
    %v1944 = vpop.trf.xlu0
    %v1945 = vpop.trf.xlu0
    %v1946 = vpop.trf.xlu0
    %v1947 = vpop.trf.xlu0
    %v1948 = vpop.trf.xlu0
    %v1949 = vpop.trf.xlu0
    %v1950 = vpop.trf.xlu0
    %v1952 = vsel %vm317, %v1935, 0
    %v1955 = vsel %vm317, %v1936, 0
    %1957 = vmatprep.subr.mxu0 0.0
    %1958 = vmatpush1.msra.mxu0 %v1907
    %1959 = vmatprep.subr.mxu0 0.0
    %1960 = vmatpush1.msra.mxu0 0.0
    %1961 = vmatprep.subr.mxu0 0.0
    %1962 = vmatpush1.msra.mxu0 0.0
    %1963 = vmatprep.subr.mxu0 0.0
    %1964 = vmatpush1.msra.mxu0 0.0
    %1965 = vmatprep.subr.mxu0 0.0
    %1966 = vmatpush1.msra.mxu0 0.0
    %1967 = vmatprep.subr.mxu0 0.0
    %1968 = vmatpush1.msra.mxu0 0.0
    %1969 = vmatprep.subr.mxu0 0.0
    %1970 = vmatpush1.msra.mxu0 0.0
    %1971 = vmatprep.subr.mxu0 0.0
    %1972 = vmatpush1.msra.mxu0 0.0
    %1973 = vmatprep.subr.mxu0 0.0
    %1974 = vmatpush1.msra.mxu0 0.0
    %1975 = vmatprep.subr.mxu0 0.0
    %1976 = vmatpush1.msra.mxu0 0.0
    %1977 = vmatprep.subr.mxu0 0.0
    %1978 = vmatpush1.msra.mxu0 0.0
    %1979 = vmatprep.subr.mxu0 0.0
    %1980 = vmatpush1.msra.mxu0 0.0
    %1981 = vmatprep.subr.mxu0 0.0
    %1982 = vmatpush1.msra.mxu0 0.0
    %1983 = vmatprep.subr.mxu0 0.0
    %1984 = vmatpush1.msra.mxu0 0.0
    %1985 = vmatprep.subr.mxu0 0.0
    %1986 = vmatpush1.msra.mxu0 0.0
    %1987 = vmatprep.subr.mxu0 0.0
    %1988 = vmatpush1.msra.mxu0 0.0
    %1989 = vmatprep.subr.mxu0 0.0
    %1990 = vmatpush1.msra.mxu0 0.0
    %1991 = vmatprep.subr.mxu0 0.0
    %1992 = vmatpush1.msra.mxu0 0.0
    %1993 = vmatprep.subr.mxu0 0.0
    %1994 = vmatpush1.msra.mxu0 0.0
    %1995 = vmatprep.subr.mxu0 0.0
    %1996 = vmatpush1.msra.mxu0 0.0
    %1997 = vmatprep.subr.mxu0 0.0
    %1998 = vmatpush1.msra.mxu0 0.0
    %1999 = vmatprep.subr.mxu0 0.0
    %2000 = vmatpush1.msra.mxu0 0.0
    %2001 = vmatprep.subr.mxu0 0.0
    %2002 = vmatpush1.msra.mxu0 0.0
    %2003 = vmatprep.subr.mxu0 0.0
    %2004 = vmatpush1.msra.mxu0 0.0
    %2005 = vmatprep.subr.mxu0 0.0
    %2006 = vmatpush1.msra.mxu0 0.0
    %2007 = vmatprep.subr.mxu0 0.0
    %2008 = vmatpush1.msra.mxu0 0.0
    %2009 = vmatprep.subr.mxu0 0.0
    %2010 = vmatpush1.msra.mxu0 0.0
    %2011 = vmatprep.subr.mxu0 0.0
    %2012 = vmatpush1.msra.mxu0 0.0
    %2013 = vmatprep.subr.mxu0 0.0
    %2014 = vmatpush1.msra.mxu0 0.0
    %2015 = vmatprep.subr.mxu0 0.0
    %2016 = vmatpush1.msra.mxu0 0.0
    %2017 = vmatprep.subr.mxu0 0.0
    %2018 = vmatpush1.msra.mxu0 0.0
    %2019 = vmatprep.subr.mxu0 0.0
    %2020 = vmatpush1.msra.mxu0 0.0
    %2021 = vmatprep.mubr.f32.mxu0 0.0
    %2022 = vmatmul.mubr.f32.gmra.mrb[0].mxu0 %v1952
    %v2023 = vpop.f32.mrb[0].mxu0
    %v2024 = vadd.f32 0.0, %v2023
    %v2025 = vpop.f32.mrb[0].mxu0
    %2026 = vmatprep.mubr.f32.mxu0 0.0
    %2027 = vmatmul.mubr.f32.gmra.mrb[0].mxu0 %v1955
    %v2028 = vpop.f32.mrb[0].mxu0
    %v2029 = vadd.f32 0.0, %v2028
    %v2030 = vpop.f32.mrb[0].mxu0
    %2031 = vdwg.mxu0
    %2032 = vxpose.xlu0.b32.start [1/16] %v1904, 128
    %2033 = vxpose.xlu0.b32.cont [2/16] 0.0, 128
    %2034 = vxpose.xlu0.b32.cont [3/16] 0.0, 128
    %2035 = vxpose.xlu0.b32.cont [4/16] 0.0, 128
    %2036 = vxpose.xlu0.b32.cont [5/16] 0.0, 128
    %2037 = vxpose.xlu0.b32.cont [6/16] 0.0, 128
    %2038 = vxpose.xlu0.b32.cont [7/16] 0.0, 128
    %2039 = vxpose.xlu0.b32.cont [8/16] 0.0, 128
    %2040 = vxpose.xlu0.b32.cont [9/16] 0.0, 128
    %2041 = vxpose.xlu0.b32.cont [10/16] 0.0, 128
    %2042 = vxpose.xlu0.b32.cont [11/16] 0.0, 128
    %2043 = vxpose.xlu0.b32.cont [12/16] 0.0, 128
    %2044 = vxpose.xlu0.b32.cont [13/16] 0.0, 128
    %2045 = vxpose.xlu0.b32.cont [14/16] 0.0, 128
    %2046 = vxpose.xlu0.b32.cont [15/16] 0.0, 128
    %2047 = vxpose.xlu0.b32.end [16/16] 0.0, 128
    %v2048 = vpop.trf.xlu0
    %v2049 = vpop.trf.xlu0
    %v2050 = vpop.trf.xlu0
    %v2051 = vpop.trf.xlu0
    %v2052 = vpop.trf.xlu0
    %v2053 = vpop.trf.xlu0
    %v2054 = vpop.trf.xlu0
    %v2055 = vpop.trf.xlu0
    %v2056 = vpop.trf.xlu0
    %v2057 = vpop.trf.xlu0
    %v2058 = vpop.trf.xlu0
    %v2059 = vpop.trf.xlu0
    %v2060 = vpop.trf.xlu0
    %v2061 = vpop.trf.xlu0
    %v2062 = vpop.trf.xlu0
    %v2063 = vpop.trf.xlu0
    %v2065 = vsel %vm317, %v2048, 0
    %v2068 = vsel %vm317, %v2049, 0
    %2070 = vmatprep.subr.mxu0 0.0
    %2071 = vmatpush1.msra.mxu0 %v1908
    %2072 = vmatprep.subr.mxu0 0.0
    %2073 = vmatpush1.msra.mxu0 0.0
    %2074 = vmatprep.subr.mxu0 0.0
    %2075 = vmatpush1.msra.mxu0 0.0
    %2076 = vmatprep.subr.mxu0 0.0
    %2077 = vmatpush1.msra.mxu0 0.0
    %2078 = vmatprep.subr.mxu0 0.0
    %2079 = vmatpush1.msra.mxu0 0.0
    %2080 = vmatprep.subr.mxu0 0.0
    %2081 = vmatpush1.msra.mxu0 0.0
    %2082 = vmatprep.subr.mxu0 0.0
    %2083 = vmatpush1.msra.mxu0 0.0
    %2084 = vmatprep.subr.mxu0 0.0
    %2085 = vmatpush1.msra.mxu0 0.0
    %2086 = vmatprep.subr.mxu0 0.0
    %2087 = vmatpush1.msra.mxu0 0.0
    %2088 = vmatprep.subr.mxu0 0.0
    %2089 = vmatpush1.msra.mxu0 0.0
    %2090 = vmatprep.subr.mxu0 0.0
    %2091 = vmatpush1.msra.mxu0 0.0
    %2092 = vmatprep.subr.mxu0 0.0
    %2093 = vmatpush1.msra.mxu0 0.0
    %2094 = vmatprep.subr.mxu0 0.0
    %2095 = vmatpush1.msra.mxu0 0.0
    %2096 = vmatprep.subr.mxu0 0.0
    %2097 = vmatpush1.msra.mxu0 0.0
    %2098 = vmatprep.subr.mxu0 0.0
    %2099 = vmatpush1.msra.mxu0 0.0
    %2100 = vmatprep.subr.mxu0 0.0
    %2101 = vmatpush1.msra.mxu0 0.0
    %2102 = vmatprep.subr.mxu0 0.0
    %2103 = vmatpush1.msra.mxu0 0.0
    %2104 = vmatprep.subr.mxu0 0.0
    %2105 = vmatpush1.msra.mxu0 0.0
    %2106 = vmatprep.subr.mxu0 0.0
    %2107 = vmatpush1.msra.mxu0 0.0
    %2108 = vmatprep.subr.mxu0 0.0
    %2109 = vmatpush1.msra.mxu0 0.0
    %2110 = vmatprep.subr.mxu0 0.0
    %2111 = vmatpush1.msra.mxu0 0.0
    %2112 = vmatprep.subr.mxu0 0.0
    %2113 = vmatpush1.msra.mxu0 0.0
    %2114 = vmatprep.subr.mxu0 0.0
    %2115 = vmatpush1.msra.mxu0 0.0
    %2116 = vmatprep.subr.mxu0 0.0
    %2117 = vmatpush1.msra.mxu0 0.0
    %2118 = vmatprep.subr.mxu0 0.0
    %2119 = vmatpush1.msra.mxu0 0.0
    %2120 = vmatprep.subr.mxu0 0.0
    %2121 = vmatpush1.msra.mxu0 0.0
    %2122 = vmatprep.subr.mxu0 0.0
    %2123 = vmatpush1.msra.mxu0 0.0
    %2124 = vmatprep.subr.mxu0 0.0
    %2125 = vmatpush1.msra.mxu0 0.0
    %2126 = vmatprep.subr.mxu0 0.0
    %2127 = vmatpush1.msra.mxu0 0.0
    %2128 = vmatprep.subr.mxu0 0.0
    %2129 = vmatpush1.msra.mxu0 0.0
    %2130 = vmatprep.subr.mxu0 0.0
    %2131 = vmatpush1.msra.mxu0 0.0
    %2132 = vmatprep.subr.mxu0 0.0
    %2133 = vmatpush1.msra.mxu0 0.0
    %2134 = vmatprep.mubr.f32.mxu0 0.0
    %2135 = vmatmul.mubr.f32.gmra.mrb[0].mxu0 %v2065
    %v2136 = vpop.f32.mrb[0].mxu0
    %v2137 = vadd.f32 0.0, %v2136
    %v2138 = vpop.f32.mrb[0].mxu0
    %2139 = vmatprep.mubr.f32.mxu0 0.0
    %2140 = vmatmul.mubr.f32.gmra.mrb[0].mxu0 %v2068
    %v2141 = vpop.f32.mrb[0].mxu0
    %v2142 = vadd.f32 0.0, %v2141
    %v2143 = vpop.f32.mrb[0].mxu0
    %2144 = vdwg.mxu0
    %2145 = vxpose.xlu0.b32.start [1/16] %v1905, 128
    %2146 = vxpose.xlu0.b32.cont [2/16] 0.0, 128
    %2147 = vxpose.xlu0.b32.cont [3/16] 0.0, 128
    %2148 = vxpose.xlu0.b32.cont [4/16] 0.0, 128
    %2149 = vxpose.xlu0.b32.cont [5/16] 0.0, 128
    %2150 = vxpose.xlu0.b32.cont [6/16] 0.0, 128
    %2151 = vxpose.xlu0.b32.cont [7/16] 0.0, 128
    %2152 = vxpose.xlu0.b32.cont [8/16] 0.0, 128
    %2153 = vxpose.xlu0.b32.cont [9/16] 0.0, 128
    %2154 = vxpose.xlu0.b32.cont [10/16] 0.0, 128
    %2155 = vxpose.xlu0.b32.cont [11/16] 0.0, 128
    %2156 = vxpose.xlu0.b32.cont [12/16] 0.0, 128
    %2157 = vxpose.xlu0.b32.cont [13/16] 0.0, 128
    %2158 = vxpose.xlu0.b32.cont [14/16] 0.0, 128
    %2159 = vxpose.xlu0.b32.cont [15/16] 0.0, 128
    %2160 = vxpose.xlu0.b32.end [16/16] 0.0, 128
    %v2161 = vpop.trf.xlu0
    %v2162 = vpop.trf.xlu0
    %v2163 = vpop.trf.xlu0
    %v2164 = vpop.trf.xlu0
    %v2165 = vpop.trf.xlu0
    %v2166 = vpop.trf.xlu0
    %v2167 = vpop.trf.xlu0
    %v2168 = vpop.trf.xlu0
    %v2169 = vpop.trf.xlu0
    %v2170 = vpop.trf.xlu0
    %v2171 = vpop.trf.xlu0
    %v2172 = vpop.trf.xlu0
    %v2173 = vpop.trf.xlu0
    %v2174 = vpop.trf.xlu0
    %v2175 = vpop.trf.xlu0
    %v2176 = vpop.trf.xlu0
    %v2178 = vsel %vm317, %v2161, 0
    %v2181 = vsel %vm317, %v2162, 0
    %2183 = vmatprep.subr.mxu0 0.0
    %2184 = vmatpush1.msra.mxu0 %v1909
    %2185 = vmatprep.subr.mxu0 0.0
    %2186 = vmatpush1.msra.mxu0 0.0
    %2187 = vmatprep.subr.mxu0 0.0
    %2188 = vmatpush1.msra.mxu0 0.0
    %2189 = vmatprep.subr.mxu0 0.0
    %2190 = vmatpush1.msra.mxu0 0.0
    %2191 = vmatprep.subr.mxu0 0.0
    %2192 = vmatpush1.msra.mxu0 0.0
    %2193 = vmatprep.subr.mxu0 0.0
    %2194 = vmatpush1.msra.mxu0 0.0
    %2195 = vmatprep.subr.mxu0 0.0
    %2196 = vmatpush1.msra.mxu0 0.0
    %2197 = vmatprep.subr.mxu0 0.0
    %2198 = vmatpush1.msra.mxu0 0.0
    %2199 = vmatprep.subr.mxu0 0.0
    %2200 = vmatpush1.msra.mxu0 0.0
    %2201 = vmatprep.subr.mxu0 0.0
    %2202 = vmatpush1.msra.mxu0 0.0
    %2203 = vmatprep.subr.mxu0 0.0
    %2204 = vmatpush1.msra.mxu0 0.0
    %2205 = vmatprep.subr.mxu0 0.0
    %2206 = vmatpush1.msra.mxu0 0.0
    %2207 = vmatprep.subr.mxu0 0.0
    %2208 = vmatpush1.msra.mxu0 0.0
    %2209 = vmatprep.subr.mxu0 0.0
    %2210 = vmatpush1.msra.mxu0 0.0
    %2211 = vmatprep.subr.mxu0 0.0
    %2212 = vmatpush1.msra.mxu0 0.0
    %2213 = vmatprep.subr.mxu0 0.0
    %2214 = vmatpush1.msra.mxu0 0.0
    %2215 = vmatprep.subr.mxu0 0.0
    %2216 = vmatpush1.msra.mxu0 0.0
    %2217 = vmatprep.subr.mxu0 0.0
    %2218 = vmatpush1.msra.mxu0 0.0
    %2219 = vmatprep.subr.mxu0 0.0
    %2220 = vmatpush1.msra.mxu0 0.0
    %2221 = vmatprep.subr.mxu0 0.0
    %2222 = vmatpush1.msra.mxu0 0.0
    %2223 = vmatprep.subr.mxu0 0.0
    %2224 = vmatpush1.msra.mxu0 0.0
    %2225 = vmatprep.subr.mxu0 0.0
    %2226 = vmatpush1.msra.mxu0 0.0
    %2227 = vmatprep.subr.mxu0 0.0
    %2228 = vmatpush1.msra.mxu0 0.0
    %2229 = vmatprep.subr.mxu0 0.0
    %2230 = vmatpush1.msra.mxu0 0.0
    %2231 = vmatprep.subr.mxu0 0.0
    %2232 = vmatpush1.msra.mxu0 0.0
    %2233 = vmatprep.subr.mxu0 0.0
    %2234 = vmatpush1.msra.mxu0 0.0
    %2235 = vmatprep.subr.mxu0 0.0
    %2236 = vmatpush1.msra.mxu0 0.0
    %2237 = vmatprep.subr.mxu0 0.0
    %2238 = vmatpush1.msra.mxu0 0.0
    %2239 = vmatprep.subr.mxu0 0.0
    %2240 = vmatpush1.msra.mxu0 0.0
    %2241 = vmatprep.subr.mxu0 0.0
    %2242 = vmatpush1.msra.mxu0 0.0
    %2243 = vmatprep.subr.mxu0 0.0
    %2244 = vmatpush1.msra.mxu0 0.0
    %2245 = vmatprep.subr.mxu0 0.0
    %2246 = vmatpush1.msra.mxu0 0.0
    %2247 = vmatprep.mubr.f32.mxu0 0.0
    %2248 = vmatmul.mubr.f32.gmra.mrb[0].mxu0 %v2178
    %v2249 = vpop.f32.mrb[0].mxu0
    %v2250 = vadd.f32 0.0, %v2249
    %v2251 = vpop.f32.mrb[0].mxu0
    %2252 = vmatprep.mubr.f32.mxu0 0.0
    %2253 = vmatmul.mubr.f32.gmra.mrb[0].mxu0 %v2181
    %v2254 = vpop.f32.mrb[0].mxu0
    %v2255 = vadd.f32 0.0, %v2254
    %v2256 = vpop.f32.mrb[0].mxu0
    %2257 = vdwg.mxu0
    %2258 = vxpose.xlu0.b32.start [1/16] %v1906, 128
    %2259 = vxpose.xlu0.b32.cont [2/16] 0.0, 128
    %2260 = vxpose.xlu0.b32.cont [3/16] 0.0, 128
    %2261 = vxpose.xlu0.b32.cont [4/16] 0.0, 128
    %2262 = vxpose.xlu0.b32.cont [5/16] 0.0, 128
    %2263 = vxpose.xlu0.b32.cont [6/16] 0.0, 128
    %2264 = vxpose.xlu0.b32.cont [7/16] 0.0, 128
    %2265 = vxpose.xlu0.b32.cont [8/16] 0.0, 128
    %2266 = vxpose.xlu0.b32.cont [9/16] 0.0, 128
    %2267 = vxpose.xlu0.b32.cont [10/16] 0.0, 128
    %2268 = vxpose.xlu0.b32.cont [11/16] 0.0, 128
    %2269 = vxpose.xlu0.b32.cont [12/16] 0.0, 128
    %2270 = vxpose.xlu0.b32.cont [13/16] 0.0, 128
    %2271 = vxpose.xlu0.b32.cont [14/16] 0.0, 128
    %2272 = vxpose.xlu0.b32.cont [15/16] 0.0, 128
    %2273 = vxpose.xlu0.b32.end [16/16] 0.0, 128
    %v2274 = vpop.trf.xlu0
    %v2275 = vpop.trf.xlu0
    %v2276 = vpop.trf.xlu0
    %v2277 = vpop.trf.xlu0
    %v2278 = vpop.trf.xlu0
    %v2279 = vpop.trf.xlu0
    %v2280 = vpop.trf.xlu0
    %v2281 = vpop.trf.xlu0
    %v2282 = vpop.trf.xlu0
    %v2283 = vpop.trf.xlu0
    %v2284 = vpop.trf.xlu0
    %v2285 = vpop.trf.xlu0
    %v2286 = vpop.trf.xlu0
    %v2287 = vpop.trf.xlu0
    %v2288 = vpop.trf.xlu0
    %v2289 = vpop.trf.xlu0
    %v2291 = vsel %vm317, %v2274, 0
    %v2294 = vsel %vm317, %v2275, 0
    %2296 = vmatprep.subr.mxu0 0.0
    %2297 = vmatpush1.msra.mxu0 %v1910
    %2298 = vmatprep.subr.mxu0 0.0
    %2299 = vmatpush1.msra.mxu0 0.0
    %2300 = vmatprep.subr.mxu0 0.0
    %2301 = vmatpush1.msra.mxu0 0.0
    %2302 = vmatprep.subr.mxu0 0.0
    %2303 = vmatpush1.msra.mxu0 0.0
    %2304 = vmatprep.subr.mxu0 0.0
    %2305 = vmatpush1.msra.mxu0 0.0
    %2306 = vmatprep.subr.mxu0 0.0
    %2307 = vmatpush1.msra.mxu0 0.0
    %2308 = vmatprep.subr.mxu0 0.0
    %2309 = vmatpush1.msra.mxu0 0.0
    %2310 = vmatprep.subr.mxu0 0.0
    %2311 = vmatpush1.msra.mxu0 0.0
    %2312 = vmatprep.subr.mxu0 0.0
    %2313 = vmatpush1.msra.mxu0 0.0
    %2314 = vmatprep.subr.mxu0 0.0
    %2315 = vmatpush1.msra.mxu0 0.0
    %2316 = vmatprep.subr.mxu0 0.0
    %2317 = vmatpush1.msra.mxu0 0.0
    %2318 = vmatprep.subr.mxu0 0.0
    %2319 = vmatpush1.msra.mxu0 0.0
    %2320 = vmatprep.subr.mxu0 0.0
    %2321 = vmatpush1.msra.mxu0 0.0
    %2322 = vmatprep.subr.mxu0 0.0
    %2323 = vmatpush1.msra.mxu0 0.0
    %2324 = vmatprep.subr.mxu0 0.0
    %2325 = vmatpush1.msra.mxu0 0.0
    %2326 = vmatprep.subr.mxu0 0.0
    %2327 = vmatpush1.msra.mxu0 0.0
    %2328 = vmatprep.subr.mxu0 0.0
    %2329 = vmatpush1.msra.mxu0 0.0
    %2330 = vmatprep.subr.mxu0 0.0
    %2331 = vmatpush1.msra.mxu0 0.0
    %2332 = vmatprep.subr.mxu0 0.0
    %2333 = vmatpush1.msra.mxu0 0.0
    %2334 = vmatprep.subr.mxu0 0.0
    %2335 = vmatpush1.msra.mxu0 0.0
    %2336 = vmatprep.subr.mxu0 0.0
    %2337 = vmatpush1.msra.mxu0 0.0
    %2338 = vmatprep.subr.mxu0 0.0
    %2339 = vmatpush1.msra.mxu0 0.0
    %2340 = vmatprep.subr.mxu0 0.0
    %2341 = vmatpush1.msra.mxu0 0.0
    %2342 = vmatprep.subr.mxu0 0.0
    %2343 = vmatpush1.msra.mxu0 0.0
    %2344 = vmatprep.subr.mxu0 0.0
    %2345 = vmatpush1.msra.mxu0 0.0
    %2346 = vmatprep.subr.mxu0 0.0
    %2347 = vmatpush1.msra.mxu0 0.0
    %2348 = vmatprep.subr.mxu0 0.0
    %2349 = vmatpush1.msra.mxu0 0.0
    %2350 = vmatprep.subr.mxu0 0.0
    %2351 = vmatpush1.msra.mxu0 0.0
    %2352 = vmatprep.subr.mxu0 0.0
    %2353 = vmatpush1.msra.mxu0 0.0
    %2354 = vmatprep.subr.mxu0 0.0
    %2355 = vmatpush1.msra.mxu0 0.0
    %2356 = vmatprep.subr.mxu0 0.0
    %2357 = vmatpush1.msra.mxu0 0.0
    %2358 = vmatprep.subr.mxu0 0.0
    %2359 = vmatpush1.msra.mxu0 0.0
    %2360 = vmatprep.mubr.f32.mxu0 0.0
    %2361 = vmatmul.mubr.f32.gmra.mrb[0].mxu0 %v2291
    %v2362 = vpop.f32.mrb[0].mxu0
    %v2363 = vadd.f32 0.0, %v2362
    %v2364 = vpop.f32.mrb[0].mxu0
    %2365 = vmatprep.mubr.f32.mxu0 0.0
    %2366 = vmatmul.mubr.f32.gmra.mrb[0].mxu0 %v2294
    %v2367 = vpop.f32.mrb[0].mxu0
    %v2368 = vadd.f32 0.0, %v2367
    %v2369 = vpop.f32.mrb[0].mxu0
    %2370 = vdwg.mxu0
    %v2371 = vmul.f32 %v2024, 0.35355338
    %v2372 = vmul.f32 %v2029, 0.35355338
    %v2373 = vmul.f32 %v2137, 0.35355338
    %v2374 = vmul.f32 %v2142, 0.35355338
    %v2375 = vmul.f32 %v2250, 0.35355338
    %v2376 = vmul.f32 %v2255, 0.35355338
    %v2377 = vmul.f32 %v2363, 0.35355338
    %v2378 = vmul.f32 %v2368, 0.35355338
    %v2379 = vadd.f32 %v2371, %v144
    %v2380 = vadd.f32 %v2372, %v145
    %v2381 = vadd.f32 %v2373, %v144
    %v2382 = vadd.f32 %v2374, %v145
    %v2383 = vadd.f32 %v2375, %v144
    %v2384 = vadd.f32 %v2376, %v145
    %v2385 = vadd.f32 %v2377, %v144
    %v2386 = vadd.f32 %v2378, %v145
    %v2387 = vsel %vm754, %v2379, -inf
    %2388 = vmax.xlane.f32.xlu0 %v2387
    %v2389 = vpop.xlane.xlu0 %2388
    %v2390 = vsel %vm754, %v2380, -inf
    %2391 = vmax.xlane.f32.xlu0 %v2390
    %v2392 = vpop.xlane.xlu0 %2391
    %v2393 = vsel %vm754, %v2381, -inf
    %2394 = vmax.xlane.f32.xlu0 %v2393
    %v2395 = vpop.xlane.xlu0 %2394
    %v2396 = vsel %vm754, %v2382, -inf
    %2397 = vmax.xlane.f32.xlu0 %v2396
    %v2398 = vpop.xlane.xlu0 %2397
    %v2399 = vsel %vm754, %v2383, -inf
    %2400 = vmax.xlane.f32.xlu0 %v2399
    %v2401 = vpop.xlane.xlu0 %2400
    %v2402 = vsel %vm754, %v2384, -inf
    %2403 = vmax.xlane.f32.xlu0 %v2402
    %v2404 = vpop.xlane.xlu0 %2403
    %v2405 = vsel %vm754, %v2385, -inf
    %2406 = vmax.xlane.f32.xlu0 %v2405
    %v2407 = vpop.xlane.xlu0 %2406
    %v2408 = vsel %vm754, %v2386, -inf
    %2409 = vmax.xlane.f32.xlu0 %v2408
    %v2410 = vpop.xlane.xlu0 %2409
    %v2411 = vsub.f32 %v2379, %v2389
    %v2412 = vsub.f32 %v2380, %v2392
    %v2413 = vsub.f32 %v2381, %v2395
    %v2414 = vsub.f32 %v2382, %v2398
    %v2415 = vsub.f32 %v2383, %v2401
    %v2416 = vsub.f32 %v2384, %v2404
    %v2417 = vsub.f32 %v2385, %v2407
    %v2418 = vsub.f32 %v2386, %v2410
    %v2419 = vmul.f32 %v2411, 1.442695
    %v2420 = vpow.pop %v2419
    %v2421 = vmul.f32 %v2412, 1.442695
    %v2422 = vpow.pop %v2421
    %v2423 = vmul.f32 %v2413, 1.442695
    %v2424 = vpow.pop %v2423
    %v2425 = vmul.f32 %v2414, 1.442695
    %v2426 = vpow.pop %v2425
    %v2427 = vmul.f32 %v2415, 1.442695
    %v2428 = vpow.pop %v2427
    %v2429 = vmul.f32 %v2416, 1.442695
    %v2430 = vpow.pop %v2429
    %v2431 = vmul.f32 %v2417, 1.442695
    %v2432 = vpow.pop %v2431
    %v2433 = vmul.f32 %v2418, 1.442695
    %v2434 = vpow.pop %v2433
    %v2435 = vsel %vm754, %v2420, 0.0
    %2436 = vadd.xlane.f32.xlu0 %v2435
    %v2437 = vpop.xlane.xlu0 %2436
    %v2438 = vsel %vm754, %v2422, 0.0
    %2439 = vadd.xlane.f32.xlu0 %v2438
    %v2440 = vpop.xlane.xlu0 %2439
    %v2441 = vsel %vm754, %v2424, 0.0
    %2442 = vadd.xlane.f32.xlu0 %v2441
    %v2443 = vpop.xlane.xlu0 %2442
    %v2444 = vsel %vm754, %v2426, 0.0
    %2445 = vadd.xlane.f32.xlu0 %v2444
    %v2446 = vpop.xlane.xlu0 %2445
    %v2447 = vsel %vm754, %v2428, 0.0
    %2448 = vadd.xlane.f32.xlu0 %v2447
    %v2449 = vpop.xlane.xlu0 %2448
    %v2450 = vsel %vm754, %v2430, 0.0
    %2451 = vadd.xlane.f32.xlu0 %v2450
    %v2452 = vpop.xlane.xlu0 %2451
    %v2453 = vsel %vm754, %v2432, 0.0
    %2454 = vadd.xlane.f32.xlu0 %v2453
    %v2455 = vpop.xlane.xlu0 %2454
    %v2456 = vsel %vm754, %v2434, 0.0
    %2457 = vadd.xlane.f32.xlu0 %v2456
    %v2458 = vpop.xlane.xlu0 %2457
    %v2459 = vrcp.pop %v2437
    %v2460 = vrcp.pop %v2440
    %v2461 = vrcp.pop %v2443
    %v2462 = vrcp.pop %v2446
    %v2463 = vrcp.pop %v2449
    %v2464 = vrcp.pop %v2452
    %v2465 = vrcp.pop %v2455
    %v2466 = vrcp.pop %v2458
    %v2467 = vmul.f32 %v2420, %v2459
    %v2468 = vmul.f32 %v2422, %v2460
    %v2469 = vmul.f32 %v2424, %v2461
    %v2470 = vmul.f32 %v2426, %v2462
    %v2471 = vmul.f32 %v2428, %v2463
    %v2472 = vmul.f32 %v2430, %v2464
    %v2473 = vmul.f32 %v2432, %v2465
    %v2474 = vmul.f32 %v2434, %v2466
    %v2476 = vsel %vm754, %v2467, 0
    %v2479 = vsel %vm754, %v2468, 0
    %v2482 = vsel %vm754, %v1911, 0
    %2484 = vmatprep.subr.mxu0 0.0
    %2485 = vmatpush1.xpose.msra.mxu0 %v2482
    %2486 = vmatprep.subr.mxu0 0.0
    %2487 = vmatpush1.xpose.msra.mxu0 0.0
    %2488 = vmatprep.subr.mxu0 0.0
    %2489 = vmatpush1.xpose.msra.mxu0 0.0
    %2490 = vmatprep.subr.mxu0 0.0
    %2491 = vmatpush1.xpose.msra.mxu0 0.0
    %2492 = vmatprep.subr.mxu0 0.0
    %2493 = vmatpush1.xpose.msra.mxu0 0.0
    %2494 = vmatprep.subr.mxu0 0.0
    %2495 = vmatpush1.xpose.msra.mxu0 0.0
    %2496 = vmatprep.subr.mxu0 0.0
    %2497 = vmatpush1.xpose.msra.mxu0 0.0
    %2498 = vmatprep.subr.mxu0 0.0
    %2499 = vmatpush1.xpose.msra.mxu0 0.0
    %2500 = vmatprep.subr.mxu0 0.0
    %2501 = vmatpush1.xpose.msra.mxu0 0.0
    %2502 = vmatprep.subr.mxu0 0.0
    %2503 = vmatpush1.xpose.msra.mxu0 0.0
    %2504 = vmatprep.subr.mxu0 0.0
    %2505 = vmatpush1.xpose.msra.mxu0 0.0
    %2506 = vmatprep.subr.mxu0 0.0
    %2507 = vmatpush1.xpose.msra.mxu0 0.0
    %2508 = vmatprep.subr.mxu0 0.0
    %2509 = vmatpush1.xpose.msra.mxu0 0.0
    %2510 = vmatprep.subr.mxu0 0.0
    %2511 = vmatpush1.xpose.msra.mxu0 0.0
    %2512 = vmatprep.subr.mxu0 0.0
    %2513 = vmatpush1.xpose.msra.mxu0 0.0
    %2514 = vmatprep.subr.mxu0 0.0
    %2515 = vmatpush1.xpose.msra.mxu0 0.0
    %2516 = vmatprep.subr.mxu0 0.0
    %2517 = vmatpush1.xpose.msra.mxu0 0.0
    %2518 = vmatprep.subr.mxu0 0.0
    %2519 = vmatpush1.xpose.msra.mxu0 0.0
    %2520 = vmatprep.subr.mxu0 0.0
    %2521 = vmatpush1.xpose.msra.mxu0 0.0
    %2522 = vmatprep.subr.mxu0 0.0
    %2523 = vmatpush1.xpose.msra.mxu0 0.0
    %2524 = vmatprep.subr.mxu0 0.0
    %2525 = vmatpush1.xpose.msra.mxu0 0.0
    %2526 = vmatprep.subr.mxu0 0.0
    %2527 = vmatpush1.xpose.msra.mxu0 0.0
    %2528 = vmatprep.subr.mxu0 0.0
    %2529 = vmatpush1.xpose.msra.mxu0 0.0
    %2530 = vmatprep.subr.mxu0 0.0
    %2531 = vmatpush1.xpose.msra.mxu0 0.0
    %2532 = vmatprep.subr.mxu0 0.0
    %2533 = vmatpush1.xpose.msra.mxu0 0.0
    %2534 = vmatprep.subr.mxu0 0.0
    %2535 = vmatpush1.xpose.msra.mxu0 0.0
    %2536 = vmatprep.subr.mxu0 0.0
    %2537 = vmatpush1.xpose.msra.mxu0 0.0
    %2538 = vmatprep.subr.mxu0 0.0
    %2539 = vmatpush1.xpose.msra.mxu0 0.0
    %2540 = vmatprep.subr.mxu0 0.0
    %2541 = vmatpush1.xpose.msra.mxu0 0.0
    %2542 = vmatprep.subr.mxu0 0.0
    %2543 = vmatpush1.xpose.msra.mxu0 0.0
    %2544 = vmatprep.subr.mxu0 0.0
    %2545 = vmatpush1.xpose.msra.mxu0 0.0
    %2546 = vmatprep.subr.mxu0 0.0
    %2547 = vmatpush1.xpose.msra.mxu0 0.0
    %2548 = vmatprep.mubr.f32.mxu0 0.0
    %2549 = vmatmul.mubr.f32.gmra.mrb[0].mxu0 %v2476
    %v2550 = vpop.f32.mrb[0].mxu0
    %v2551 = vadd.f32 0.0, %v2550
    %v2552 = vpop.f32.mrb[0].mxu0
    %2553 = vmatprep.mubr.f32.mxu0 0.0
    %2554 = vmatmul.mubr.f32.gmra.mrb[0].mxu0 %v2479
    %v2555 = vpop.f32.mrb[0].mxu0
    %v2556 = vadd.f32 0.0, %v2555
    %v2557 = vpop.f32.mrb[0].mxu0
    %2558 = vdwg.mxu0
    %v2560 = vsel %vm754, %v2469, 0
    %v2563 = vsel %vm754, %v2470, 0
    %v2566 = vsel %vm754, %v1912, 0
    %2568 = vmatprep.subr.mxu0 0.0
    %2569 = vmatpush1.xpose.msra.mxu0 %v2566
    %2570 = vmatprep.subr.mxu0 0.0
    %2571 = vmatpush1.xpose.msra.mxu0 0.0
    %2572 = vmatprep.subr.mxu0 0.0
    %2573 = vmatpush1.xpose.msra.mxu0 0.0
    %2574 = vmatprep.subr.mxu0 0.0
    %2575 = vmatpush1.xpose.msra.mxu0 0.0
    %2576 = vmatprep.subr.mxu0 0.0
    %2577 = vmatpush1.xpose.msra.mxu0 0.0
    %2578 = vmatprep.subr.mxu0 0.0
    %2579 = vmatpush1.xpose.msra.mxu0 0.0
    %2580 = vmatprep.subr.mxu0 0.0
    %2581 = vmatpush1.xpose.msra.mxu0 0.0
    %2582 = vmatprep.subr.mxu0 0.0
    %2583 = vmatpush1.xpose.msra.mxu0 0.0
    %2584 = vmatprep.subr.mxu0 0.0
    %2585 = vmatpush1.xpose.msra.mxu0 0.0
    %2586 = vmatprep.subr.mxu0 0.0
    %2587 = vmatpush1.xpose.msra.mxu0 0.0
    %2588 = vmatprep.subr.mxu0 0.0
    %2589 = vmatpush1.xpose.msra.mxu0 0.0
    %2590 = vmatprep.subr.mxu0 0.0
    %2591 = vmatpush1.xpose.msra.mxu0 0.0
    %2592 = vmatprep.subr.mxu0 0.0
    %2593 = vmatpush1.xpose.msra.mxu0 0.0
    %2594 = vmatprep.subr.mxu0 0.0
    %2595 = vmatpush1.xpose.msra.mxu0 0.0
    %2596 = vmatprep.subr.mxu0 0.0
    %2597 = vmatpush1.xpose.msra.mxu0 0.0
    %2598 = vmatprep.subr.mxu0 0.0
    %2599 = vmatpush1.xpose.msra.mxu0 0.0
    %2600 = vmatprep.subr.mxu0 0.0
    %2601 = vmatpush1.xpose.msra.mxu0 0.0
    %2602 = vmatprep.subr.mxu0 0.0
    %2603 = vmatpush1.xpose.msra.mxu0 0.0
    %2604 = vmatprep.subr.mxu0 0.0
    %2605 = vmatpush1.xpose.msra.mxu0 0.0
    %2606 = vmatprep.subr.mxu0 0.0
    %2607 = vmatpush1.xpose.msra.mxu0 0.0
    %2608 = vmatprep.subr.mxu0 0.0
    %2609 = vmatpush1.xpose.msra.mxu0 0.0
    %2610 = vmatprep.subr.mxu0 0.0
    %2611 = vmatpush1.xpose.msra.mxu0 0.0
    %2612 = vmatprep.subr.mxu0 0.0
    %2613 = vmatpush1.xpose.msra.mxu0 0.0
    %2614 = vmatprep.subr.mxu0 0.0
    %2615 = vmatpush1.xpose.msra.mxu0 0.0
    %2616 = vmatprep.subr.mxu0 0.0
    %2617 = vmatpush1.xpose.msra.mxu0 0.0
    %2618 = vmatprep.subr.mxu0 0.0
    %2619 = vmatpush1.xpose.msra.mxu0 0.0
    %2620 = vmatprep.subr.mxu0 0.0
    %2621 = vmatpush1.xpose.msra.mxu0 0.0
    %2622 = vmatprep.subr.mxu0 0.0
    %2623 = vmatpush1.xpose.msra.mxu0 0.0
    %2624 = vmatprep.subr.mxu0 0.0
    %2625 = vmatpush1.xpose.msra.mxu0 0.0
    %2626 = vmatprep.subr.mxu0 0.0
    %2627 = vmatpush1.xpose.msra.mxu0 0.0
    %2628 = vmatprep.subr.mxu0 0.0
    %2629 = vmatpush1.xpose.msra.mxu0 0.0
    %2630 = vmatprep.subr.mxu0 0.0
    %2631 = vmatpush1.xpose.msra.mxu0 0.0
    %2632 = vmatprep.mubr.f32.mxu0 0.0
    %2633 = vmatmul.mubr.f32.gmra.mrb[0].mxu0 %v2560
    %v2634 = vpop.f32.mrb[0].mxu0
    %v2635 = vadd.f32 0.0, %v2634
    %v2636 = vpop.f32.mrb[0].mxu0
    %2637 = vmatprep.mubr.f32.mxu0 0.0
    %2638 = vmatmul.mubr.f32.gmra.mrb[0].mxu0 %v2563
    %v2639 = vpop.f32.mrb[0].mxu0
    %v2640 = vadd.f32 0.0, %v2639
    %v2641 = vpop.f32.mrb[0].mxu0
    %2642 = vdwg.mxu0
    %v2644 = vsel %vm754, %v2471, 0
    %v2647 = vsel %vm754, %v2472, 0
    %v2650 = vsel %vm754, %v1913, 0
    %2652 = vmatprep.subr.mxu0 0.0
    %2653 = vmatpush1.xpose.msra.mxu0 %v2650
    %2654 = vmatprep.subr.mxu0 0.0
    %2655 = vmatpush1.xpose.msra.mxu0 0.0
    %2656 = vmatprep.subr.mxu0 0.0
    %2657 = vmatpush1.xpose.msra.mxu0 0.0
    %2658 = vmatprep.subr.mxu0 0.0
    %2659 = vmatpush1.xpose.msra.mxu0 0.0
    %2660 = vmatprep.subr.mxu0 0.0
    %2661 = vmatpush1.xpose.msra.mxu0 0.0
    %2662 = vmatprep.subr.mxu0 0.0
    %2663 = vmatpush1.xpose.msra.mxu0 0.0
    %2664 = vmatprep.subr.mxu0 0.0
    %2665 = vmatpush1.xpose.msra.mxu0 0.0
    %2666 = vmatprep.subr.mxu0 0.0
    %2667 = vmatpush1.xpose.msra.mxu0 0.0
    %2668 = vmatprep.subr.mxu0 0.0
    %2669 = vmatpush1.xpose.msra.mxu0 0.0
    %2670 = vmatprep.subr.mxu0 0.0
    %2671 = vmatpush1.xpose.msra.mxu0 0.0
    %2672 = vmatprep.subr.mxu0 0.0
    %2673 = vmatpush1.xpose.msra.mxu0 0.0
    %2674 = vmatprep.subr.mxu0 0.0
    %2675 = vmatpush1.xpose.msra.mxu0 0.0
    %2676 = vmatprep.subr.mxu0 0.0
    %2677 = vmatpush1.xpose.msra.mxu0 0.0
    %2678 = vmatprep.subr.mxu0 0.0
    %2679 = vmatpush1.xpose.msra.mxu0 0.0
    %2680 = vmatprep.subr.mxu0 0.0
    %2681 = vmatpush1.xpose.msra.mxu0 0.0
    %2682 = vmatprep.subr.mxu0 0.0
    %2683 = vmatpush1.xpose.msra.mxu0 0.0
    %2684 = vmatprep.subr.mxu0 0.0
    %2685 = vmatpush1.xpose.msra.mxu0 0.0
    %2686 = vmatprep.subr.mxu0 0.0
    %2687 = vmatpush1.xpose.msra.mxu0 0.0
    %2688 = vmatprep.subr.mxu0 0.0
    %2689 = vmatpush1.xpose.msra.mxu0 0.0
    %2690 = vmatprep.subr.mxu0 0.0
    %2691 = vmatpush1.xpose.msra.mxu0 0.0
    %2692 = vmatprep.subr.mxu0 0.0
    %2693 = vmatpush1.xpose.msra.mxu0 0.0
    %2694 = vmatprep.subr.mxu0 0.0
    %2695 = vmatpush1.xpose.msra.mxu0 0.0
    %2696 = vmatprep.subr.mxu0 0.0
    %2697 = vmatpush1.xpose.msra.mxu0 0.0
    %2698 = vmatprep.subr.mxu0 0.0
    %2699 = vmatpush1.xpose.msra.mxu0 0.0
    %2700 = vmatprep.subr.mxu0 0.0
    %2701 = vmatpush1.xpose.msra.mxu0 0.0
    %2702 = vmatprep.subr.mxu0 0.0
    %2703 = vmatpush1.xpose.msra.mxu0 0.0
    %2704 = vmatprep.subr.mxu0 0.0
    %2705 = vmatpush1.xpose.msra.mxu0 0.0
    %2706 = vmatprep.subr.mxu0 0.0
    %2707 = vmatpush1.xpose.msra.mxu0 0.0
    %2708 = vmatprep.subr.mxu0 0.0
    %2709 = vmatpush1.xpose.msra.mxu0 0.0
    %2710 = vmatprep.subr.mxu0 0.0
    %2711 = vmatpush1.xpose.msra.mxu0 0.0
    %2712 = vmatprep.subr.mxu0 0.0
    %2713 = vmatpush1.xpose.msra.mxu0 0.0
    %2714 = vmatprep.subr.mxu0 0.0
    %2715 = vmatpush1.xpose.msra.mxu0 0.0
    %2716 = vmatprep.mubr.f32.mxu0 0.0
    %2717 = vmatmul.mubr.f32.gmra.mrb[0].mxu0 %v2644
    %v2718 = vpop.f32.mrb[0].mxu0
    %v2719 = vadd.f32 0.0, %v2718
    %v2720 = vpop.f32.mrb[0].mxu0
    %2721 = vmatprep.mubr.f32.mxu0 0.0
    %2722 = vmatmul.mubr.f32.gmra.mrb[0].mxu0 %v2647
    %v2723 = vpop.f32.mrb[0].mxu0
    %v2724 = vadd.f32 0.0, %v2723
    %v2725 = vpop.f32.mrb[0].mxu0
    %2726 = vdwg.mxu0
    %v2728 = vsel %vm754, %v2473, 0
    %v2731 = vsel %vm754, %v2474, 0
    %v2734 = vsel %vm754, %v1914, 0
    %2736 = vmatprep.subr.mxu0 0.0
    %2737 = vmatpush1.xpose.msra.mxu0 %v2734
    %2738 = vmatprep.subr.mxu0 0.0
    %2739 = vmatpush1.xpose.msra.mxu0 0.0
    %2740 = vmatprep.subr.mxu0 0.0
    %2741 = vmatpush1.xpose.msra.mxu0 0.0
    %2742 = vmatprep.subr.mxu0 0.0
    %2743 = vmatpush1.xpose.msra.mxu0 0.0
    %2744 = vmatprep.subr.mxu0 0.0
    %2745 = vmatpush1.xpose.msra.mxu0 0.0
    %2746 = vmatprep.subr.mxu0 0.0
    %2747 = vmatpush1.xpose.msra.mxu0 0.0
    %2748 = vmatprep.subr.mxu0 0.0
    %2749 = vmatpush1.xpose.msra.mxu0 0.0
    %2750 = vmatprep.subr.mxu0 0.0
    %2751 = vmatpush1.xpose.msra.mxu0 0.0
    %2752 = vmatprep.subr.mxu0 0.0
    %2753 = vmatpush1.xpose.msra.mxu0 0.0
    %2754 = vmatprep.subr.mxu0 0.0
    %2755 = vmatpush1.xpose.msra.mxu0 0.0
    %2756 = vmatprep.subr.mxu0 0.0
    %2757 = vmatpush1.xpose.msra.mxu0 0.0
    %2758 = vmatprep.subr.mxu0 0.0
    %2759 = vmatpush1.xpose.msra.mxu0 0.0
    %2760 = vmatprep.subr.mxu0 0.0
    %2761 = vmatpush1.xpose.msra.mxu0 0.0
    %2762 = vmatprep.subr.mxu0 0.0
    %2763 = vmatpush1.xpose.msra.mxu0 0.0
    %2764 = vmatprep.subr.mxu0 0.0
    %2765 = vmatpush1.xpose.msra.mxu0 0.0
    %2766 = vmatprep.subr.mxu0 0.0
    %2767 = vmatpush1.xpose.msra.mxu0 0.0
    %2768 = vmatprep.subr.mxu0 0.0
    %2769 = vmatpush1.xpose.msra.mxu0 0.0
    %2770 = vmatprep.subr.mxu0 0.0
    %2771 = vmatpush1.xpose.msra.mxu0 0.0
    %2772 = vmatprep.subr.mxu0 0.0
    %2773 = vmatpush1.xpose.msra.mxu0 0.0
    %2774 = vmatprep.subr.mxu0 0.0
    %2775 = vmatpush1.xpose.msra.mxu0 0.0
    %2776 = vmatprep.subr.mxu0 0.0
    %2777 = vmatpush1.xpose.msra.mxu0 0.0
    %2778 = vmatprep.subr.mxu0 0.0
    %2779 = vmatpush1.xpose.msra.mxu0 0.0
    %2780 = vmatprep.subr.mxu0 0.0
    %2781 = vmatpush1.xpose.msra.mxu0 0.0
    %2782 = vmatprep.subr.mxu0 0.0
    %2783 = vmatpush1.xpose.msra.mxu0 0.0
    %2784 = vmatprep.subr.mxu0 0.0
    %2785 = vmatpush1.xpose.msra.mxu0 0.0
    %2786 = vmatprep.subr.mxu0 0.0
    %2787 = vmatpush1.xpose.msra.mxu0 0.0
    %2788 = vmatprep.subr.mxu0 0.0
    %2789 = vmatpush1.xpose.msra.mxu0 0.0
    %2790 = vmatprep.subr.mxu0 0.0
    %2791 = vmatpush1.xpose.msra.mxu0 0.0
    %2792 = vmatprep.subr.mxu0 0.0
    %2793 = vmatpush1.xpose.msra.mxu0 0.0
    %2794 = vmatprep.subr.mxu0 0.0
    %2795 = vmatpush1.xpose.msra.mxu0 0.0
    %2796 = vmatprep.subr.mxu0 0.0
    %2797 = vmatpush1.xpose.msra.mxu0 0.0
    %2798 = vmatprep.subr.mxu0 0.0
    %2799 = vmatpush1.xpose.msra.mxu0 0.0
    %2800 = vmatprep.mubr.f32.mxu0 0.0
    %2801 = vmatmul.mubr.f32.gmra.mrb[0].mxu0 %v2728
    %v2802 = vpop.f32.mrb[0].mxu0
    %v2803 = vadd.f32 0.0, %v2802
    %v2804 = vpop.f32.mrb[0].mxu0
    %2805 = vmatprep.mubr.f32.mxu0 0.0
    %2806 = vmatmul.mubr.f32.gmra.mrb[0].mxu0 %v2731
    %v2807 = vpop.f32.mrb[0].mxu0
    %v2808 = vadd.f32 0.0, %v2807
    %v2809 = vpop.f32.mrb[0].mxu0
    %2810 = vdwg.mxu0
    %v2812 = vsel %vm317, %v2551, 0
    %v2815 = vsel %vm317, %v2556, 0
    %2817 = vmatprep.subr.mxu0 0.0
    %2818 = vmatpush1.msra.mxu0 %v1782
    %2819 = vmatprep.subr.mxu0 0.0
    %2820 = vmatpush1.msra.mxu0 0.0
    %2821 = vmatprep.subr.mxu0 0.0
    %2822 = vmatpush1.msra.mxu0 0.0
    %2823 = vmatprep.subr.mxu0 0.0
    %2824 = vmatpush1.msra.mxu0 0.0
    %2825 = vmatprep.subr.mxu0 0.0
    %2826 = vmatpush1.msra.mxu0 0.0
    %2827 = vmatprep.subr.mxu0 0.0
    %2828 = vmatpush1.msra.mxu0 0.0
    %2829 = vmatprep.subr.mxu0 0.0
    %2830 = vmatpush1.msra.mxu0 0.0
    %2831 = vmatprep.subr.mxu0 0.0
    %2832 = vmatpush1.msra.mxu0 0.0
    %2833 = vmatprep.subr.mxu0 0.0
    %2834 = vmatpush1.msra.mxu0 0.0
    %2835 = vmatprep.subr.mxu0 0.0
    %2836 = vmatpush1.msra.mxu0 0.0
    %2837 = vmatprep.subr.mxu0 0.0
    %2838 = vmatpush1.msra.mxu0 0.0
    %2839 = vmatprep.subr.mxu0 0.0
    %2840 = vmatpush1.msra.mxu0 0.0
    %2841 = vmatprep.subr.mxu0 0.0
    %2842 = vmatpush1.msra.mxu0 0.0
    %2843 = vmatprep.subr.mxu0 0.0
    %2844 = vmatpush1.msra.mxu0 0.0
    %2845 = vmatprep.subr.mxu0 0.0
    %2846 = vmatpush1.msra.mxu0 0.0
    %2847 = vmatprep.subr.mxu0 0.0
    %2848 = vmatpush1.msra.mxu0 0.0
    %2849 = vmatprep.subr.mxu0 0.0
    %2850 = vmatpush1.msra.mxu0 0.0
    %2851 = vmatprep.subr.mxu0 0.0
    %2852 = vmatpush1.msra.mxu0 0.0
    %2853 = vmatprep.subr.mxu0 0.0
    %2854 = vmatpush1.msra.mxu0 0.0
    %2855 = vmatprep.subr.mxu0 0.0
    %2856 = vmatpush1.msra.mxu0 0.0
    %2857 = vmatprep.subr.mxu0 0.0
    %2858 = vmatpush1.msra.mxu0 0.0
    %2859 = vmatprep.subr.mxu0 0.0
    %2860 = vmatpush1.msra.mxu0 0.0
    %2861 = vmatprep.subr.mxu0 0.0
    %2862 = vmatpush1.msra.mxu0 0.0
    %2863 = vmatprep.subr.mxu0 0.0
    %2864 = vmatpush1.msra.mxu0 0.0
    %2865 = vmatprep.subr.mxu0 0.0
    %2866 = vmatpush1.msra.mxu0 0.0
    %2867 = vmatprep.subr.mxu0 0.0
    %2868 = vmatpush1.msra.mxu0 0.0
    %2869 = vmatprep.subr.mxu0 0.0
    %2870 = vmatpush1.msra.mxu0 0.0
    %2871 = vmatprep.subr.mxu0 0.0
    %2872 = vmatpush1.msra.mxu0 0.0
    %2873 = vmatprep.subr.mxu0 0.0
    %2874 = vmatpush1.msra.mxu0 0.0
    %2875 = vmatprep.subr.mxu0 0.0
    %2876 = vmatpush1.msra.mxu0 0.0
    %2877 = vmatprep.subr.mxu0 0.0
    %2878 = vmatpush1.msra.mxu0 0.0
    %2879 = vmatprep.subr.mxu0 0.0
    %2880 = vmatpush1.msra.mxu0 0.0
    %2881 = vmatprep.mubr.f32.mxu0 0.0
    %2882 = vmatmul.mubr.f32.gmra.mrb[0].mxu0 %v2812
    %v2883 = vpop.f32.mrb[0].mxu0
    %v2884 = vadd.f32 0.0, %v2883
    %v2885 = vpop.f32.mrb[0].mxu0
    %2886 = vmatprep.mubr.f32.mxu0 0.0
    %2887 = vmatmul.mubr.f32.gmra.mrb[0].mxu0 %v2815
    %v2888 = vpop.f32.mrb[0].mxu0
    %v2889 = vadd.f32 0.0, %v2888
    %v2890 = vpop.f32.mrb[0].mxu0
    %2891 = vdwg.mxu0
    %v2893 = vsel %vm317, %v2635, 0
    %v2896 = vsel %vm317, %v2640, 0
    %2898 = vmatprep.subr.mxu0 0.0
    %2899 = vmatpush1.msra.mxu0 %v1783
    %2900 = vmatprep.subr.mxu0 0.0
    %2901 = vmatpush1.msra.mxu0 0.0
    %2902 = vmatprep.subr.mxu0 0.0
    %2903 = vmatpush1.msra.mxu0 0.0
    %2904 = vmatprep.subr.mxu0 0.0
    %2905 = vmatpush1.msra.mxu0 0.0
    %2906 = vmatprep.subr.mxu0 0.0
    %2907 = vmatpush1.msra.mxu0 0.0
    %2908 = vmatprep.subr.mxu0 0.0
    %2909 = vmatpush1.msra.mxu0 0.0
    %2910 = vmatprep.subr.mxu0 0.0
    %2911 = vmatpush1.msra.mxu0 0.0
    %2912 = vmatprep.subr.mxu0 0.0
    %2913 = vmatpush1.msra.mxu0 0.0
    %2914 = vmatprep.subr.mxu0 0.0
    %2915 = vmatpush1.msra.mxu0 0.0
    %2916 = vmatprep.subr.mxu0 0.0
    %2917 = vmatpush1.msra.mxu0 0.0
    %2918 = vmatprep.subr.mxu0 0.0
    %2919 = vmatpush1.msra.mxu0 0.0
    %2920 = vmatprep.subr.mxu0 0.0
    %2921 = vmatpush1.msra.mxu0 0.0
    %2922 = vmatprep.subr.mxu0 0.0
    %2923 = vmatpush1.msra.mxu0 0.0
    %2924 = vmatprep.subr.mxu0 0.0
    %2925 = vmatpush1.msra.mxu0 0.0
    %2926 = vmatprep.subr.mxu0 0.0
    %2927 = vmatpush1.msra.mxu0 0.0
    %2928 = vmatprep.subr.mxu0 0.0
    %2929 = vmatpush1.msra.mxu0 0.0
    %2930 = vmatprep.subr.mxu0 0.0
    %2931 = vmatpush1.msra.mxu0 0.0
    %2932 = vmatprep.subr.mxu0 0.0
    %2933 = vmatpush1.msra.mxu0 0.0
    %2934 = vmatprep.subr.mxu0 0.0
    %2935 = vmatpush1.msra.mxu0 0.0
    %2936 = vmatprep.subr.mxu0 0.0
    %2937 = vmatpush1.msra.mxu0 0.0
    %2938 = vmatprep.subr.mxu0 0.0
    %2939 = vmatpush1.msra.mxu0 0.0
    %2940 = vmatprep.subr.mxu0 0.0
    %2941 = vmatpush1.msra.mxu0 0.0
    %2942 = vmatprep.subr.mxu0 0.0
    %2943 = vmatpush1.msra.mxu0 0.0
    %2944 = vmatprep.subr.mxu0 0.0
    %2945 = vmatpush1.msra.mxu0 0.0
    %2946 = vmatprep.subr.mxu0 0.0
    %2947 = vmatpush1.msra.mxu0 0.0
    %2948 = vmatprep.subr.mxu0 0.0
    %2949 = vmatpush1.msra.mxu0 0.0
    %2950 = vmatprep.subr.mxu0 0.0
    %2951 = vmatpush1.msra.mxu0 0.0
    %2952 = vmatprep.subr.mxu0 0.0
    %2953 = vmatpush1.msra.mxu0 0.0
    %2954 = vmatprep.subr.mxu0 0.0
    %2955 = vmatpush1.msra.mxu0 0.0
    %2956 = vmatprep.subr.mxu0 0.0
    %2957 = vmatpush1.msra.mxu0 0.0
    %2958 = vmatprep.subr.mxu0 0.0
    %2959 = vmatpush1.msra.mxu0 0.0
    %2960 = vmatprep.subr.mxu0 0.0
    %2961 = vmatpush1.msra.mxu0 0.0
    %2962 = vmatprep.mubr.f32.mxu0 0.0
    %2963 = vmatmul.mubr.f32.gmra.mrb[0].mxu0 %v2893
    %v2964 = vpop.f32.mrb[0].mxu0
    %v2965 = vadd.f32 0.0, %v2964
    %v2966 = vpop.f32.mrb[0].mxu0
    %2967 = vmatprep.mubr.f32.mxu0 0.0
    %2968 = vmatmul.mubr.f32.gmra.mrb[0].mxu0 %v2896
    %v2969 = vpop.f32.mrb[0].mxu0
    %v2970 = vadd.f32 0.0, %v2969
    %v2971 = vpop.f32.mrb[0].mxu0
    %2972 = vdwg.mxu0
    %v2974 = vsel %vm317, %v2719, 0
    %v2977 = vsel %vm317, %v2724, 0
    %2979 = vmatprep.subr.mxu0 0.0
    %2980 = vmatpush1.msra.mxu0 %v1784
    %2981 = vmatprep.subr.mxu0 0.0
    %2982 = vmatpush1.msra.mxu0 0.0
    %2983 = vmatprep.subr.mxu0 0.0
    %2984 = vmatpush1.msra.mxu0 0.0
    %2985 = vmatprep.subr.mxu0 0.0
    %2986 = vmatpush1.msra.mxu0 0.0
    %2987 = vmatprep.subr.mxu0 0.0
    %2988 = vmatpush1.msra.mxu0 0.0
    %2989 = vmatprep.subr.mxu0 0.0
    %2990 = vmatpush1.msra.mxu0 0.0
    %2991 = vmatprep.subr.mxu0 0.0
    %2992 = vmatpush1.msra.mxu0 0.0
    %2993 = vmatprep.subr.mxu0 0.0
    %2994 = vmatpush1.msra.mxu0 0.0
    %2995 = vmatprep.subr.mxu0 0.0
    %2996 = vmatpush1.msra.mxu0 0.0
    %2997 = vmatprep.subr.mxu0 0.0
    %2998 = vmatpush1.msra.mxu0 0.0
    %2999 = vmatprep.subr.mxu0 0.0
    %3000 = vmatpush1.msra.mxu0 0.0
    %3001 = vmatprep.subr.mxu0 0.0
    %3002 = vmatpush1.msra.mxu0 0.0
    %3003 = vmatprep.subr.mxu0 0.0
    %3004 = vmatpush1.msra.mxu0 0.0
    %3005 = vmatprep.subr.mxu0 0.0
    %3006 = vmatpush1.msra.mxu0 0.0
    %3007 = vmatprep.subr.mxu0 0.0
    %3008 = vmatpush1.msra.mxu0 0.0
    %3009 = vmatprep.subr.mxu0 0.0
    %3010 = vmatpush1.msra.mxu0 0.0
    %3011 = vmatprep.subr.mxu0 0.0
    %3012 = vmatpush1.msra.mxu0 0.0
    %3013 = vmatprep.subr.mxu0 0.0
    %3014 = vmatpush1.msra.mxu0 0.0
    %3015 = vmatprep.subr.mxu0 0.0
    %3016 = vmatpush1.msra.mxu0 0.0
    %3017 = vmatprep.subr.mxu0 0.0
    %3018 = vmatpush1.msra.mxu0 0.0
    %3019 = vmatprep.subr.mxu0 0.0
    %3020 = vmatpush1.msra.mxu0 0.0
    %3021 = vmatprep.subr.mxu0 0.0
    %3022 = vmatpush1.msra.mxu0 0.0
    %3023 = vmatprep.subr.mxu0 0.0
    %3024 = vmatpush1.msra.mxu0 0.0
    %3025 = vmatprep.subr.mxu0 0.0
    %3026 = vmatpush1.msra.mxu0 0.0
    %3027 = vmatprep.subr.mxu0 0.0
    %3028 = vmatpush1.msra.mxu0 0.0
    %3029 = vmatprep.subr.mxu0 0.0
    %3030 = vmatpush1.msra.mxu0 0.0
    %3031 = vmatprep.subr.mxu0 0.0
    %3032 = vmatpush1.msra.mxu0 0.0
    %3033 = vmatprep.subr.mxu0 0.0
    %3034 = vmatpush1.msra.mxu0 0.0
    %3035 = vmatprep.subr.mxu0 0.0
    %3036 = vmatpush1.msra.mxu0 0.0
    %3037 = vmatprep.subr.mxu0 0.0
    %3038 = vmatpush1.msra.mxu0 0.0
    %3039 = vmatprep.subr.mxu0 0.0
    %3040 = vmatpush1.msra.mxu0 0.0
    %3041 = vmatprep.subr.mxu0 0.0
    %3042 = vmatpush1.msra.mxu0 0.0
    %3043 = vmatprep.mubr.f32.mxu0 0.0
    %3044 = vmatmul.mubr.f32.gmra.mrb[0].mxu0 %v2974
    %v3045 = vpop.f32.mrb[0].mxu0
    %v3046 = vadd.f32 0.0, %v3045
    %v3047 = vpop.f32.mrb[0].mxu0
    %3048 = vmatprep.mubr.f32.mxu0 0.0
    %3049 = vmatmul.mubr.f32.gmra.mrb[0].mxu0 %v2977
    %v3050 = vpop.f32.mrb[0].mxu0
    %v3051 = vadd.f32 0.0, %v3050
    %v3052 = vpop.f32.mrb[0].mxu0
    %3053 = vdwg.mxu0
    %v3055 = vsel %vm317, %v2803, 0
    %v3058 = vsel %vm317, %v2808, 0
    %3060 = vmatprep.subr.mxu0 0.0
    %3061 = vmatpush1.msra.mxu0 %v1785
    %3062 = vmatprep.subr.mxu0 0.0
    %3063 = vmatpush1.msra.mxu0 0.0
    %3064 = vmatprep.subr.mxu0 0.0
    %3065 = vmatpush1.msra.mxu0 0.0
    %3066 = vmatprep.subr.mxu0 0.0
    %3067 = vmatpush1.msra.mxu0 0.0
    %3068 = vmatprep.subr.mxu0 0.0
    %3069 = vmatpush1.msra.mxu0 0.0
    %3070 = vmatprep.subr.mxu0 0.0
    %3071 = vmatpush1.msra.mxu0 0.0
    %3072 = vmatprep.subr.mxu0 0.0
    %3073 = vmatpush1.msra.mxu0 0.0
    %3074 = vmatprep.subr.mxu0 0.0
    %3075 = vmatpush1.msra.mxu0 0.0
    %3076 = vmatprep.subr.mxu0 0.0
    %3077 = vmatpush1.msra.mxu0 0.0
    %3078 = vmatprep.subr.mxu0 0.0
    %3079 = vmatpush1.msra.mxu0 0.0
    %3080 = vmatprep.subr.mxu0 0.0
    %3081 = vmatpush1.msra.mxu0 0.0
    %3082 = vmatprep.subr.mxu0 0.0
    %3083 = vmatpush1.msra.mxu0 0.0
    %3084 = vmatprep.subr.mxu0 0.0
    %3085 = vmatpush1.msra.mxu0 0.0
    %3086 = vmatprep.subr.mxu0 0.0
    %3087 = vmatpush1.msra.mxu0 0.0
    %3088 = vmatprep.subr.mxu0 0.0
    %3089 = vmatpush1.msra.mxu0 0.0
    %3090 = vmatprep.subr.mxu0 0.0
    %3091 = vmatpush1.msra.mxu0 0.0
    %3092 = vmatprep.subr.mxu0 0.0
    %3093 = vmatpush1.msra.mxu0 0.0
    %3094 = vmatprep.subr.mxu0 0.0
    %3095 = vmatpush1.msra.mxu0 0.0
    %3096 = vmatprep.subr.mxu0 0.0
    %3097 = vmatpush1.msra.mxu0 0.0
    %3098 = vmatprep.subr.mxu0 0.0
    %3099 = vmatpush1.msra.mxu0 0.0
    %3100 = vmatprep.subr.mxu0 0.0
    %3101 = vmatpush1.msra.mxu0 0.0
    %3102 = vmatprep.subr.mxu0 0.0
    %3103 = vmatpush1.msra.mxu0 0.0
    %3104 = vmatprep.subr.mxu0 0.0
    %3105 = vmatpush1.msra.mxu0 0.0
    %3106 = vmatprep.subr.mxu0 0.0
    %3107 = vmatpush1.msra.mxu0 0.0
    %3108 = vmatprep.subr.mxu0 0.0
    %3109 = vmatpush1.msra.mxu0 0.0
    %3110 = vmatprep.subr.mxu0 0.0
    %3111 = vmatpush1.msra.mxu0 0.0
    %3112 = vmatprep.subr.mxu0 0.0
    %3113 = vmatpush1.msra.mxu0 0.0
    %3114 = vmatprep.subr.mxu0 0.0
    %3115 = vmatpush1.msra.mxu0 0.0
    %3116 = vmatprep.subr.mxu0 0.0
    %3117 = vmatpush1.msra.mxu0 0.0
    %3118 = vmatprep.subr.mxu0 0.0
    %3119 = vmatpush1.msra.mxu0 0.0
    %3120 = vmatprep.subr.mxu0 0.0
    %3121 = vmatpush1.msra.mxu0 0.0
    %3122 = vmatprep.subr.mxu0 0.0
    %3123 = vmatpush1.msra.mxu0 0.0
    %3124 = vmatprep.mubr.f32.mxu0 0.0
    %3125 = vmatmul.mubr.f32.gmra.mrb[0].mxu0 %v3055
    %v3126 = vpop.f32.mrb[0].mxu0
    %v3127 = vadd.f32 0.0, %v3126
    %v3128 = vpop.f32.mrb[0].mxu0
    %3129 = vmatprep.mubr.f32.mxu0 0.0
    %3130 = vmatmul.mubr.f32.gmra.mrb[0].mxu0 %v3058
    %v3131 = vpop.f32.mrb[0].mxu0
    %v3132 = vadd.f32 0.0, %v3131
    %v3133 = vpop.f32.mrb[0].mxu0
    %3134 = vdwg.mxu0
    %v3135 = vsel %vm171, %v2884, 0.0
    %v3136 = vsel %vm171, %v2965, 0.0
    %v3137 = vadd.f32 %v3135, %v3136
    %v3138 = vsel %vm171, %v3046, 0.0
    %v3139 = vadd.f32 %v3137, %v3138
    %v3140 = vsel %vm171, %v3127, 0.0
    %v3141 = vadd.f32 %v3139, %v3140
    %v3142 = vsel %vm171, %v2889, 0.0
    %v3143 = vsel %vm171, %v2970, 0.0
    %v3144 = vadd.f32 %v3142, %v3143
    %v3145 = vsel %vm171, %v3051, 0.0
    %v3146 = vadd.f32 %v3144, %v3145
    %v3147 = vsel %vm171, %v3132, 0.0
    %v3148 = vadd.f32 %v3146, %v3147
    %v3149 = vlaneseq
    %v3150 = vshrl.u32 %v3149, 7
    %v3151 = vsub.s32 1, %v3150
    %v3152 = vrot.slane %v1801, %v3151
    %v3153 = vadd.f32 %v3141, %v3152
    %v3154 = vadd.f32 %v3148, %v3152
    %v3155 = vadd.f32 %v1774, %v3153
    %v3156 = vadd.f32 %v1775, %v3154
    %v3157 = vsel %vm171, %v3155, 0.0
    %3158 = vadd.xlane.f32.xlu0 %v3157
    %v3159 = vpop.xlane.xlu0 %3158
    %v3160 = vsel %vm171, %v3156, 0.0
    %3161 = vadd.xlane.f32.xlu0 %v3160
    %v3162 = vpop.xlane.xlu0 %3161
    %v3163 = vmul.f32 %v3159, %v1531
    %v3164 = vmul.f32 %v3162, %v1531
    %v3165 = vsub.f32 %v3155, %v3163
    %v3166 = vsub.f32 %v3156, %v3164
    %v3167 = vmul.f32 %v3165, %v3165
    %v3168 = vmul.f32 %v3166, %v3166
    %v3169 = vsel %vm171, %v3167, 0.0
    %3170 = vadd.xlane.f32.xlu0 %v3169
    %v3171 = vpop.xlane.xlu0 %3170
    %v3172 = vsel %vm171, %v3168, 0.0
    %3173 = vadd.xlane.f32.xlu0 %v3172
    %v3174 = vpop.xlane.xlu0 %3173
    %v3175 = vmul.f32 %v3171, %v1531
    %v3176 = vmul.f32 %v3174, %v1531
    %v3177 = vadd.f32 %v3175, 1e-06
    %v3178 = vadd.f32 %v3176, 1e-06
    %v3179 = vrsqrt.pop %v3177
    %v3180 = vrsqrt.pop %v3178
    %v3181 = vmul.f32 %v3165, %v3179
    %v3182 = vmul.f32 %v3166, %v3180
    %v3183 = vlaneseq
    %v3184 = vshrl.u32 %v3183, 7
    %v3185 = vsub.s32 4, %v3184
    %v3186 = vrot.slane %v1801, %v3185
    %v3187 = vmul.f32 %v3181, %v3186
    %v3188 = vmul.f32 %v3182, %v3186
    %v3189 = vlaneseq
    %v3190 = vshrl.u32 %v3189, 7
    %v3191 = vsub.s32 5, %v3190
    %v3192 = vrot.slane %v1801, %v3191
    %v3193 = vadd.f32 %v3187, %v3192
    %v3194 = vadd.f32 %v3188, %v3192
    %v3195 = vlaneseq
    %v3196 = vshrl.u32 %v3195, 7
    %v3197 = vsub.s32 2, %v3196
    %v3198 = vrot.slane %v1801, %v3197
    %v3200 = vsel %vm171, %v3193, 0
    %v3203 = vsel %vm171, %v3194, 0
    %3205 = vmatprep.subr.mxu0 0.0
    %3206 = vmatpush1.msra.mxu0 %v1787
    %3207 = vmatprep.subr.mxu0 0.0
    %3208 = vmatpush1.msra.mxu0 %v1788
    %3209 = vmatprep.subr.mxu0 0.0
    %3210 = vmatpush1.msra.mxu0 %v1789
    %3211 = vmatprep.subr.mxu0 0.0
    %3212 = vmatpush1.msra.mxu0 %v1790
    %3213 = vmatprep.subr.mxu0 0.0
    %3214 = vmatpush1.msra.mxu0 0.0
    %3215 = vmatprep.subr.mxu0 0.0
    %3216 = vmatpush1.msra.mxu0 0.0
    %3217 = vmatprep.subr.mxu0 0.0
    %3218 = vmatpush1.msra.mxu0 0.0
    %3219 = vmatprep.subr.mxu0 0.0
    %3220 = vmatpush1.msra.mxu0 0.0
    %3221 = vmatprep.subr.mxu0 0.0
    %3222 = vmatpush1.msra.mxu0 0.0
    %3223 = vmatprep.subr.mxu0 0.0
    %3224 = vmatpush1.msra.mxu0 0.0
    %3225 = vmatprep.subr.mxu0 0.0
    %3226 = vmatpush1.msra.mxu0 0.0
    %3227 = vmatprep.subr.mxu0 0.0
    %3228 = vmatpush1.msra.mxu0 0.0
    %3229 = vmatprep.subr.mxu0 0.0
    %3230 = vmatpush1.msra.mxu0 0.0
    %3231 = vmatprep.subr.mxu0 0.0
    %3232 = vmatpush1.msra.mxu0 0.0
    %3233 = vmatprep.subr.mxu0 0.0
    %3234 = vmatpush1.msra.mxu0 0.0
    %3235 = vmatprep.subr.mxu0 0.0
    %3236 = vmatpush1.msra.mxu0 0.0
    %3237 = vmatprep.subr.mxu0 0.0
    %3238 = vmatpush1.msra.mxu0 0.0
    %3239 = vmatprep.subr.mxu0 0.0
    %3240 = vmatpush1.msra.mxu0 0.0
    %3241 = vmatprep.subr.mxu0 0.0
    %3242 = vmatpush1.msra.mxu0 0.0
    %3243 = vmatprep.subr.mxu0 0.0
    %3244 = vmatpush1.msra.mxu0 0.0
    %3245 = vmatprep.subr.mxu0 0.0
    %3246 = vmatpush1.msra.mxu0 0.0
    %3247 = vmatprep.subr.mxu0 0.0
    %3248 = vmatpush1.msra.mxu0 0.0
    %3249 = vmatprep.subr.mxu0 0.0
    %3250 = vmatpush1.msra.mxu0 0.0
    %3251 = vmatprep.subr.mxu0 0.0
    %3252 = vmatpush1.msra.mxu0 0.0
    %3253 = vmatprep.subr.mxu0 0.0
    %3254 = vmatpush1.msra.mxu0 0.0
    %3255 = vmatprep.subr.mxu0 0.0
    %3256 = vmatpush1.msra.mxu0 0.0
    %3257 = vmatprep.subr.mxu0 0.0
    %3258 = vmatpush1.msra.mxu0 0.0
    %3259 = vmatprep.subr.mxu0 0.0
    %3260 = vmatpush1.msra.mxu0 0.0
    %3261 = vmatprep.subr.mxu0 0.0
    %3262 = vmatpush1.msra.mxu0 0.0
    %3263 = vmatprep.subr.mxu0 0.0
    %3264 = vmatpush1.msra.mxu0 0.0
    %3265 = vmatprep.subr.mxu0 0.0
    %3266 = vmatpush1.msra.mxu0 0.0
    %3267 = vmatprep.subr.mxu0 0.0
    %3268 = vmatpush1.msra.mxu0 0.0
    %3269 = vmatprep.mubr.f32.mxu0 0.0
    %3270 = vmatmul.mubr.f32.gmra.mrb[0].mxu0 %v3200
    %v3271 = vpop.f32.mrb[0].mxu0
    %v3272 = vadd.f32 %v3198, %v3271
    %v3273 = vpop.f32.mrb[0].mxu0
    %3274 = vmatprep.mubr.f32.mxu0 0.0
    %3275 = vmatmul.mubr.f32.gmra.mrb[0].mxu0 %v3203
    %v3276 = vpop.f32.mrb[0].mxu0
    %v3277 = vadd.f32 %v3198, %v3276
    %v3278 = vpop.f32.mrb[0].mxu0
    %3279 = vdwg.mxu0
    %v3280 = vmax.f32 %v3272, 0.0
    %v3281 = vmax.f32 %v3277, 0.0
    %v3282 = vlaneseq
    %v3283 = vshrl.u32 %v3282, 7
    %v3284 = vsub.s32 3, %v3283
    %v3285 = vrot.slane %v1801, %v3284
    %v3287 = vsel %vm57, %v3280, 0
    %v3290 = vsel %vm57, %v3281, 0
    %3292 = vmatprep.subr.mxu0 0.0
    %3293 = vmatpush1.msra.mxu0 %v1792
    %3294 = vmatprep.subr.mxu0 0.0
    %3295 = vmatpush1.msra.mxu0 %v1793
    %3296 = vmatprep.subr.mxu0 0.0
    %3297 = vmatpush1.msra.mxu0 %v1794
    %3298 = vmatprep.subr.mxu0 0.0
    %3299 = vmatpush1.msra.mxu0 %v1795
    %3300 = vmatprep.subr.mxu0 0.0
    %3301 = vmatpush1.msra.mxu0 %v1796
    %3302 = vmatprep.subr.mxu0 0.0
    %3303 = vmatpush1.msra.mxu0 %v1797
    %3304 = vmatprep.subr.mxu0 0.0
    %3305 = vmatpush1.msra.mxu0 %v1798
    %3306 = vmatprep.subr.mxu0 0.0
    %3307 = vmatpush1.msra.mxu0 %v1799
    %3308 = vmatprep.subr.mxu0 0.0
    %3309 = vmatpush1.msra.mxu0 0.0
    %3310 = vmatprep.subr.mxu0 0.0
    %3311 = vmatpush1.msra.mxu0 0.0
    %3312 = vmatprep.subr.mxu0 0.0
    %3313 = vmatpush1.msra.mxu0 0.0
    %3314 = vmatprep.subr.mxu0 0.0
    %3315 = vmatpush1.msra.mxu0 0.0
    %3316 = vmatprep.subr.mxu0 0.0
    %3317 = vmatpush1.msra.mxu0 0.0
    %3318 = vmatprep.subr.mxu0 0.0
    %3319 = vmatpush1.msra.mxu0 0.0
    %3320 = vmatprep.subr.mxu0 0.0
    %3321 = vmatpush1.msra.mxu0 0.0
    %3322 = vmatprep.subr.mxu0 0.0
    %3323 = vmatpush1.msra.mxu0 0.0
    %3324 = vmatprep.subr.mxu0 0.0
    %3325 = vmatpush1.msra.mxu0 0.0
    %3326 = vmatprep.subr.mxu0 0.0
    %3327 = vmatpush1.msra.mxu0 0.0
    %3328 = vmatprep.subr.mxu0 0.0
    %3329 = vmatpush1.msra.mxu0 0.0
    %3330 = vmatprep.subr.mxu0 0.0
    %3331 = vmatpush1.msra.mxu0 0.0
    %3332 = vmatprep.subr.mxu0 0.0
    %3333 = vmatpush1.msra.mxu0 0.0
    %3334 = vmatprep.subr.mxu0 0.0
    %3335 = vmatpush1.msra.mxu0 0.0
    %3336 = vmatprep.subr.mxu0 0.0
    %3337 = vmatpush1.msra.mxu0 0.0
    %3338 = vmatprep.subr.mxu0 0.0
    %3339 = vmatpush1.msra.mxu0 0.0
    %3340 = vmatprep.subr.mxu0 0.0
    %3341 = vmatpush1.msra.mxu0 0.0
    %3342 = vmatprep.subr.mxu0 0.0
    %3343 = vmatpush1.msra.mxu0 0.0
    %3344 = vmatprep.subr.mxu0 0.0
    %3345 = vmatpush1.msra.mxu0 0.0
    %3346 = vmatprep.subr.mxu0 0.0
    %3347 = vmatpush1.msra.mxu0 0.0
    %3348 = vmatprep.subr.mxu0 0.0
    %3349 = vmatpush1.msra.mxu0 0.0
    %3350 = vmatprep.subr.mxu0 0.0
    %3351 = vmatpush1.msra.mxu0 0.0
    %3352 = vmatprep.subr.mxu0 0.0
    %3353 = vmatpush1.msra.mxu0 0.0
    %3354 = vmatprep.subr.mxu0 0.0
    %3355 = vmatpush1.msra.mxu0 0.0
    %3356 = vmatprep.mubr.f32.mxu0 0.0
    %3357 = vmatmul.mubr.f32.gmra.mrb[0].mxu0 %v3287
    %v3358 = vpop.f32.mrb[0].mxu0
    %v3359 = vadd.f32 %v3285, %v3358
    %v3360 = vpop.f32.mrb[0].mxu0
    %3361 = vmatprep.mubr.f32.mxu0 0.0
    %3362 = vmatmul.mubr.f32.gmra.mrb[0].mxu0 %v3290
    %v3363 = vpop.f32.mrb[0].mxu0
    %v3364 = vadd.f32 %v3285, %v3363
    %v3365 = vpop.f32.mrb[0].mxu0
    %3366 = vdwg.mxu0
    %v3367 = vadd.f32 %v3193, %v3359
    %v3368 = vadd.f32 %v3194, %v3364
    %v3369 = vsel %vm171, %v3367, 0.0
    %3370 = vadd.xlane.f32.xlu0 %v3369
    %v3371 = vpop.xlane.xlu0 %3370
    %v3372 = vsel %vm171, %v3368, 0.0
    %3373 = vadd.xlane.f32.xlu0 %v3372
    %v3374 = vpop.xlane.xlu0 %3373
    %v3375 = vmul.f32 %v3371, %v1531
    %v3376 = vmul.f32 %v3374, %v1531
    %v3377 = vsub.f32 %v3367, %v3375
    %v3378 = vsub.f32 %v3368, %v3376
    %v3379 = vmul.f32 %v3377, %v3377
    %v3380 = vmul.f32 %v3378, %v3378
    %v3381 = vsel %vm171, %v3379, 0.0
    %3382 = vadd.xlane.f32.xlu0 %v3381
    %v3383 = vpop.xlane.xlu0 %3382
    %v3384 = vsel %vm171, %v3380, 0.0
    %3385 = vadd.xlane.f32.xlu0 %v3384
    %v3386 = vpop.xlane.xlu0 %3385
    %v3387 = vmul.f32 %v3383, %v1531
    %v3388 = vmul.f32 %v3386, %v1531
    %v3389 = vadd.f32 %v3387, 1e-06
    %v3390 = vadd.f32 %v3388, 1e-06
    %v3391 = vrsqrt.pop %v3389
    %v3392 = vrsqrt.pop %v3390
    %v3393 = vmul.f32 %v3377, %v3391
    %v3394 = vmul.f32 %v3378, %v3392
    %v3395 = vlaneseq
    %v3396 = vshrl.u32 %v3395, 7
    %v3397 = vsub.s32 6, %v3396
    %v3398 = vrot.slane %v1801, %v3397
    %v3399 = vmul.f32 %v3393, %v3398
    %v3400 = vmul.f32 %v3394, %v3398
    %v3401 = vlaneseq
    %v3402 = vshrl.u32 %v3401, 7
    %v3403 = vsub.s32 7, %v3402
    %v3404 = vrot.slane %v1801, %v3403
    %v3405 = vadd.f32 %v3399, %v3404
    %v3406 = vadd.f32 %v3400, %v3404
    %3407 = vst.msk [vmem:[#allocation2] sm:$0xff] %vm171, %v3405
    %3408 = vst.msk [vmem:[#allocation2 + $0x8] sm:$0xff] %vm171, %v3406
    // Predicated region
    $region38: #{encoder_forward.1} parent=1 // pred_check
      _
    $region39: #{encoder_forward.1} parent=1 // pred_check_branch
      %3410 = sbr.rel (0) target = $region41
    $region40: #{encoder_forward.1} parent=1 // pred_region
      %s3412 = ssub.s32 256, 256
      %3413 = vsyncadd [#allocation3], %s3412
      %s3414 = sshll.u32 [#allocation2], 4
      %s3415 = int_to_ptr.vmem [resolvable:$true] %s3414
      %3420 = dma.vmem_to_hbm [thread:$0]  %s3415, 256, %s9, [#allocation3], 128, 128, 8
    $region41: #{encoder_forward.1} parent=1 // pred_fallthru
      _
    // Predicated region
    $region42: #{encoder_forward.1} parent=1 // pred_check
      _
    $region43: #{encoder_forward.1} parent=1 // pred_check_branch
      %3422 = sbr.rel (0) target = $region45
    $region44: #{encoder_forward.1} parent=1 // pred_region
      %3423 = dma.done [#allocation3], 256
    $region45: #{encoder_forward.1} parent=1 // pred_fallthru
      _
    %3424 = vsyncpa [#allocation3], 1

</llo_original>
